<compile_context>
chip_gen: v6e
topology: v6e:2x2x1
jax: 0.10.0
libtpu: 0.0.40
codegen_flags: <defaults>
</compile_context>

<pallas_src>
import jax
import jax.numpy as jnp
from jax import lax
from jax.experimental import pallas as pl
from jax.experimental.pallas import tpu as pltpu


def _nnconv_kernel(src_ref, dst_ref, h_ref, e_ref, init_ref, w2_ref, out_ref):
    t = pl.program_id(0)
    te, de = e_ref.shape
    n_pad, cin = h_ref.shape

    # ---- step 0: initialise the resident accumulator with h@root+bias
    #      (computed in the XLA wrapper and passed in).
    @pl.when(t == 0)
    def _():
        out_ref[...] = init_ref[...]

    # ---- gather h[src] for this edge tile: one one-hot MXU matmul.
    src_col = src_ref[...]                                           # (TE, 1) int32
    onehot_src = (src_col == lax.broadcasted_iota(jnp.int32, (te, n_pad), 1)
                  ).astype(jnp.float32)                              # (TE, N_pad)
    hs = jnp.dot(onehot_src, h_ref[...],
                 preferred_element_type=jnp.float32)                 # (TE, Cin)

    # ---- per-edge messages: single fused matmul with K = Cin*De + Cin.
    #   m[e,o] = sum_{i,d} hs[e,i] ef[e,d] W2'[i*De+d, o]
    #          + sum_i     hs[e,i]         W2'[Cin*De+i, o]
    ef = e_ref[...]                                                  # (TE, De)
    parts = [hs[:, i:i + 1] * ef for i in range(cin)]                # outer product
    parts.append(hs)                                                 # folded edge_net bias
    z = jnp.concatenate(parts, axis=1)                               # (TE, Cin*De+Cin)
    m = jnp.dot(z, w2_ref[...],
                preferred_element_type=jnp.float32)                  # (TE, Cout_p)

    # ---- scatter-add into destination rows: one one-hot^T MXU matmul.
    #      (padded edges carry dst = dummy row >= n_nodes, sliced off later)
    dst_row = dst_ref[...]                                           # (1, TE) int32
    onehot_dst = (dst_row == lax.broadcasted_iota(jnp.int32, (n_pad, te), 0)
                  ).astype(jnp.float32)                              # (N_pad, TE)
    out_ref[...] = out_ref[...] + jnp.dot(
        onehot_dst, m, preferred_element_type=jnp.float32)


def nnconv_forward(h, e, src, dst, w_edge, b_edge, root, bias, *, edge_tile=512):
    """Pallas NNConv forward.  h:[N,Cin] e:[E,De] src/dst:[E] int32."""
    n_nodes, cin = h.shape
    n_edges, de = e.shape
    cout = root.shape[1]

    cout_p = 128 * pl.cdiv(cout, 128)                # lane-dense output channels

    # ---- root/self term, computed once in XLA (also the accumulator init).
    init_true = h.astype(jnp.float32) @ root + bias.reshape(1, cout)   # (N, Cout)

    if n_edges == 0:                                  # empty graph: no kernel needed
        return init_true

    n_p = 8 * pl.cdiv(n_nodes + 1, 8)                # +1 spare dummy scatter row
    e_p = edge_tile * pl.cdiv(n_edges, edge_tile)

    # ---- host-side glue: padding + edge_net weight re-layout (done once).
    h_pad = jnp.zeros((n_p, cin), jnp.float32).at[:n_nodes].set(h)
    e_pad = jnp.zeros((e_p, de), jnp.float32).at[:n_edges].set(e)
    src_pad = jnp.zeros((e_p, 1), jnp.int32).at[:n_edges, 0].set(src.astype(jnp.int32))
    # padded (fake) edges scatter into dummy row n_nodes (< n_p), sliced off below
    dst_pad = jnp.full((1, e_p), n_nodes, jnp.int32).at[0, :n_edges].set(
        dst.astype(jnp.int32))

    # W2'[i*De+d, o] = w_edge[d, i*Cout+o] ;  W2'[Cin*De+i, o] = b_edge[i*Cout+o]
    w2 = jnp.transpose(w_edge.reshape(de, cin, cout), (1, 0, 2)).reshape(cin * de, cout)
    b2 = b_edge.reshape(cin, cout)
    w_full = jnp.concatenate([w2, b2], axis=0)                       # (Cin*De+Cin, Cout)
    w_full = jnp.zeros((cin * de + cin, cout_p), jnp.float32).at[:, :cout].set(w_full)

    init_pad = jnp.zeros((n_p, cout_p), jnp.float32).at[:n_nodes, :cout].set(init_true)

    grid = (e_p // edge_tile,)

    flops = int(grid[0] * (2 * edge_tile * n_p * cin                 # one-hot gather matmul
                           + 2 * edge_tile * (cin * de + cin) * cout_p  # fused message matmul
                           + 2 * n_p * edge_tile * cout_p            # one-hot scatter matmul
                           + edge_tile * cin * de))                  # outer product (VPU)
    bytes_accessed = int(4 * (h_pad.size + e_pad.size + w_full.size + init_pad.size
                              + n_p * cout_p + src_pad.size + dst_pad.size))

    # TODO(synk): pipeline_mode=pl.Buffered(1) on the constant-index-map blocks
    #             (h, init, W2', out) would reclaim the double-buffer VMEM on v7x.
    out_pad = pl.pallas_call(
        _nnconv_kernel,
        out_shape=jax.ShapeDtypeStruct((n_p, cout_p), jnp.float32),
        grid_spec=pltpu.PrefetchScalarGridSpec(
            num_scalar_prefetch=0,
            grid=grid,
            in_specs=[
                pl.BlockSpec((edge_tile, 1), lambda t: (t, 0)),           # src (streamed)
                pl.BlockSpec((1, edge_tile), lambda t: (0, t)),           # dst (streamed)
                pl.BlockSpec((n_p, cin), lambda t: (0, 0)),               # h (resident)
                pl.BlockSpec((edge_tile, de), lambda t: (t, 0)),          # e (streamed)
                pl.BlockSpec((n_p, cout_p), lambda t: (0, 0)),            # init (resident)
                pl.BlockSpec((cin * de + cin, cout_p), lambda t: (0, 0)), # W2' (resident)
            ],
            out_specs=pl.BlockSpec((n_p, cout_p), lambda t: (0, 0)),      # resident accum
        ),
        compiler_params=pltpu.CompilerParams(
            dimension_semantics=("arbitrary",),
            vmem_limit_bytes=48 * 1024 * 1024,
        ),
        cost_estimate=pl.CostEstimate(flops=flops, transcendentals=0,
                                      bytes_accessed=bytes_accessed),
    )(src_pad, dst_pad, h_pad, e_pad, init_pad, w_full)

    return out_pad[:n_nodes, :cout]


def nnconv_reference(h, e, src, dst, w_edge, b_edge, root, bias):
    """Pure-JAX reference of the PyTorch forward."""
    n_nodes, cin = h.shape
    cout = root.shape[1]
    w = (e @ w_edge + b_edge).reshape(-1, cin, cout)            # [E, Cin, Cout]
    m = jnp.einsum('ei,eio->eo', h[src], w)                     # [E, Cout]
    aggr = jax.ops.segment_sum(m, dst, num_segments=n_nodes)    # [N, Cout]
    return h @ root + aggr + bias


if __name__ == "__main__":
    key = jax.random.PRNGKey(0)

    # small shapes consistent with the module
    N, E = 16, 48          # nodes, edges
    Cin, Cout, De = 8, 16, 8

    ks = jax.random.split(key, 6)
    h = jax.random.normal(ks[0], (N, Cin), dtype=jnp.float32)
    e = jax.random.normal(ks[1], (E, De), dtype=jnp.float32)
    src = jax.random.randint(ks[2], (E,), 0, N, dtype=jnp.int32)
    dst = jax.random.randint(ks[3], (E,), 0, N, dtype=jnp.int32)

    # deterministic parameter init (xavier_normal with gain=1.414, zero biases)
    gain = 1.414
    std_edge = gain * (2.0 / (De + Cin * Cout)) ** 0.5
    std_root = gain * (2.0 / (Cin + Cout)) ** 0.5
    w_edge = std_edge * jax.random.normal(ks[4], (De, Cin * Cout), dtype=jnp.float32)
    b_edge = jnp.zeros((1, Cin * Cout), dtype=jnp.float32)
    root   = std_root * jax.random.normal(ks[5], (Cin, Cout), dtype=jnp.float32)
    bias   = jnp.zeros((1, Cout), dtype=jnp.float32)

    out = nnconv_forward(h, e, src, dst, w_edge, b_edge, root, bias)
    out = jax.block_until_ready(out)

    ref = nnconv_reference(h, e, src, dst, w_edge, b_edge, root, bias)
    assert out.shape == (N, Cout)
    assert jnp.allclose(out, ref, atol=1e-4, rtol=1e-4), "mismatch vs reference"

    print("KERNEL_OK")
</pallas_src>

<mosaic_0001>
module attributes {stable_mosaic.version = 11 : i64} {
  func.func @_nnconv_kernel(%arg0: i32, %arg1: memref<512x1xi32, #tpu.memory_space<vmem>>, %arg2: memref<1x512xi32, #tpu.memory_space<vmem>>, %arg3: memref<24x8xf32, #tpu.memory_space<vmem>>, %arg4: memref<512x8xf32, #tpu.memory_space<vmem>>, %arg5: memref<24x128xf32, #tpu.memory_space<vmem>>, %arg6: memref<72x128xf32, #tpu.memory_space<vmem>>, %arg7: memref<24x128xf32, #tpu.memory_space<vmem>>) attributes {dimension_semantics = [#tpu.dimension_semantics<arbitrary>], iteration_bounds = array<i64: 1>, scalar_prefetch = 0 : i64, scratch_operands = 0 : i64, tpu.core_type = #tpu.core_type<tc>, window_params = [{transform_indices = @transform_0, window_bounds = array<i64: 512, 1>}, {transform_indices = @transform_1, window_bounds = array<i64: 1, 512>}, {pipeline_mode = #tpu.pipeline_mode<synchronous>, transform_indices = @transform_2, window_bounds = array<i64: 24, 8>}, {transform_indices = @transform_3, window_bounds = array<i64: 512, 8>}, {pipeline_mode = #tpu.pipeline_mode<synchronous>, transform_indices = @transform_4, window_bounds = array<i64: 24, 128>}, {pipeline_mode = #tpu.pipeline_mode<synchronous>, transform_indices = @transform_5, window_bounds = array<i64: 72, 128>}, {pipeline_mode = #tpu.pipeline_mode<synchronous>, transform_indices = @transform_6, window_bounds = array<i64: 24, 128>}]} {
    %c0_i32 = arith.constant 0 : i32
    %0 = arith.cmpi eq, %arg0, %c0_i32 : i32
    %1 = arith.extui %0 : i1 to i32
    %c0_i32_0 = arith.constant 0 : i32
    %2 = arith.cmpi ne, %1, %c0_i32_0 : i32
    scf.if %2 {
      %c0_16 = arith.constant 0 : index
      %c0_17 = arith.constant 0 : index
      %49 = vector.load %arg5[%c0_16, %c0_17] : memref<24x128xf32, #tpu.memory_space<vmem>>, vector<24x128xf32>
      %c0_18 = arith.constant 0 : index
      %c0_19 = arith.constant 0 : index
      %50 = vector.load %arg7[%c0_18, %c0_19] : memref<24x128xf32, #tpu.memory_space<vmem>>, vector<24x128xf32>
      tpu.vector_store %arg7[%c0_18, %c0_19], %49 {strides = array<i32>} : memref<24x128xf32, #tpu.memory_space<vmem>>, vector<24x128xf32>,
    } else {
    }
    %c0 = arith.constant 0 : index
    %c0_1 = arith.constant 0 : index
    %3 = vector.load %arg1[%c0, %c0_1] : memref<512x1xi32, #tpu.memory_space<vmem>>, vector<512x1xi32>
    %4 = tpu.iota {dimensions = array<i32: 1>} : vector<512x24xi32>
    %5 = vector.broadcast %3 : vector<512x1xi32> to vector<512x24xi32>
    %6 = arith.cmpi eq, %5, %4 : vector<512x24xi32>
    %7 = arith.extui %6 : vector<512x24xi1> to vector<512x24xi32>
    %8 = arith.sitofp %7 : vector<512x24xi32> to vector<512x24xf32>
    %c0_2 = arith.constant 0 : index
    %c0_3 = arith.constant 0 : index
    %9 = vector.load %arg3[%c0_2, %c0_3] : memref<24x8xf32, #tpu.memory_space<vmem>>, vector<24x8xf32>
    %cst = arith.constant dense<0.000000e+00> : vector<512x8xf32>
    %10 = tpu.matmul %8, %9, %cst {dimension_numbers = #tpu.dot_dimension_numbers<[1], [0], [0], [1], [0, 0, 1, 1], [], []>} : vector<512x24xf32>, vector<24x8xf32>, vector<512x8xf32> -> vector<512x8xf32>
    %c0_4 = arith.constant 0 : index
    %c0_5 = arith.constant 0 : index
    %11 = vector.load %arg4[%c0_4, %c0_5] : memref<512x8xf32, #tpu.memory_space<vmem>>, vector<512x8xf32>
    %12 = vector.extract_strided_slice %10 {offsets = [0, 0], sizes = [512, 1], strides = [1, 1]} : vector<512x8xf32> to vector<512x1xf32>
    %13 = vector.broadcast %12 : vector<512x1xf32> to vector<512x8xf32>
    %14 = arith.mulf %13, %11 : vector<512x8xf32>
    %15 = vector.extract_strided_slice %10 {offsets = [0, 1], sizes = [512, 1], strides = [1, 1]} : vector<512x8xf32> to vector<512x1xf32>
    %16 = vector.broadcast %15 : vector<512x1xf32> to vector<512x8xf32>
    %17 = arith.mulf %16, %11 : vector<512x8xf32>
    %18 = vector.extract_strided_slice %10 {offsets = [0, 2], sizes = [512, 1], strides = [1, 1]} : vector<512x8xf32> to vector<512x1xf32>
    %19 = vector.broadcast %18 : vector<512x1xf32> to vector<512x8xf32>
    %20 = arith.mulf %19, %11 : vector<512x8xf32>
    %21 = vector.extract_strided_slice %10 {offsets = [0, 3], sizes = [512, 1], strides = [1, 1]} : vector<512x8xf32> to vector<512x1xf32>
    %22 = vector.broadcast %21 : vector<512x1xf32> to vector<512x8xf32>
    %23 = arith.mulf %22, %11 : vector<512x8xf32>
    %24 = vector.extract_strided_slice %10 {offsets = [0, 4], sizes = [512, 1], strides = [1, 1]} : vector<512x8xf32> to vector<512x1xf32>
    %25 = vector.broadcast %24 : vector<512x1xf32> to vector<512x8xf32>
    %26 = arith.mulf %25, %11 : vector<512x8xf32>
    %27 = vector.extract_strided_slice %10 {offsets = [0, 5], sizes = [512, 1], strides = [1, 1]} : vector<512x8xf32> to vector<512x1xf32>
    %28 = vector.broadcast %27 : vector<512x1xf32> to vector<512x8xf32>
    %29 = arith.mulf %28, %11 : vector<512x8xf32>
    %30 = vector.extract_strided_slice %10 {offsets = [0, 6], sizes = [512, 1], strides = [1, 1]} : vector<512x8xf32> to vector<512x1xf32>
    %31 = vector.broadcast %30 : vector<512x1xf32> to vector<512x8xf32>
    %32 = arith.mulf %31, %11 : vector<512x8xf32>
    %33 = vector.extract_strided_slice %10 {offsets = [0, 7], sizes = [512, 1], strides = [1, 1]} : vector<512x8xf32> to vector<512x1xf32>
    %34 = vector.broadcast %33 : vector<512x1xf32> to vector<512x8xf32>
    %35 = arith.mulf %34, %11 : vector<512x8xf32>
    %36 = tpu.concatenate %14, %17, %20, %23, %26, %29, %32, %35, %10 in 1 : vector<512x8xf32>, vector<512x8xf32>, vector<512x8xf32>, vector<512x8xf32>, vector<512x8xf32>, vector<512x8xf32>, vector<512x8xf32>, vector<512x8xf32>, vector<512x8xf32> -> vector<512x72xf32>
    %c0_6 = arith.constant 0 : index
    %c0_7 = arith.constant 0 : index
    %37 = vector.load %arg6[%c0_6, %c0_7] : memref<72x128xf32, #tpu.memory_space<vmem>>, vector<72x128xf32>
    %cst_8 = arith.constant dense<0.000000e+00> : vector<512x128xf32>
    %38 = tpu.matmul %36, %37, %cst_8 {dimension_numbers = #tpu.dot_dimension_numbers<[1], [0], [0], [1], [0, 0, 1, 1], [], []>} : vector<512x72xf32>, vector<72x128xf32>, vector<512x128xf32> -> vector<512x128xf32>
    %c0_9 = arith.constant 0 : index
    %c0_10 = arith.constant 0 : index
    %39 = vector.load %arg2[%c0_9, %c0_10] : memref<1x512xi32, #tpu.memory_space<vmem>>, vector<1x512xi32>
    %40 = tpu.iota {dimensions = array<i32: 0>} : vector<24x512xi32>
    %41 = vector.broadcast %39 : vector<1x512xi32> to vector<24x512xi32>
    %42 = arith.cmpi eq, %41, %40 : vector<24x512xi32>
    %43 = arith.extui %42 : vector<24x512xi1> to vector<24x512xi32>
    %44 = arith.sitofp %43 : vector<24x512xi32> to vector<24x512xf32>
    %c0_11 = arith.constant 0 : index
    %c0_12 = arith.constant 0 : index
    %45 = vector.load %arg7[%c0_11, %c0_12] : memref<24x128xf32, #tpu.memory_space<vmem>>, vector<24x128xf32>
    %cst_13 = arith.constant dense<0.000000e+00> : vector<24x128xf32>
    %46 = tpu.matmul %44, %38, %cst_13 {dimension_numbers = #tpu.dot_dimension_numbers<[1], [0], [0], [1], [0, 0, 1, 1], [], []>} : vector<24x512xf32>, vector<512x128xf32>, vector<24x128xf32> -> vector<24x128xf32>
    %47 = arith.addf %45, %46 : vector<24x128xf32>
    %c0_14 = arith.constant 0 : index
    %c0_15 = arith.constant 0 : index
    %48 = vector.load %arg7[%c0_14, %c0_15] : memref<24x128xf32, #tpu.memory_space<vmem>>, vector<24x128xf32>
    tpu.vector_store %arg7[%c0_14, %c0_15], %47 {strides = array<i32>} : memref<24x128xf32, #tpu.memory_space<vmem>>, vector<24x128xf32>,
    return
  }
  func.func @transform_0(%arg0: i32) -> (i32, i32) {
    %c0_i32 = arith.constant 0 : i32
    %c0_i32_0 = arith.constant 0 : i32
    return %arg0, %c0_i32 : i32, i32
  }
  func.func @transform_1(%arg0: i32) -> (i32, i32) {
    %c0_i32 = arith.constant 0 : i32
    %c0_i32_0 = arith.constant 0 : i32
    return %c0_i32, %arg0 : i32, i32
  }
  func.func @transform_2(%arg0: i32) -> (i32, i32) {
    %c0_i32 = arith.constant 0 : i32
    %c0_i32_0 = arith.constant 0 : i32
    %c0_i32_1 = arith.constant 0 : i32
    return %c0_i32, %c0_i32_0 : i32, i32
  }
  func.func @transform_3(%arg0: i32) -> (i32, i32) {
    %c0_i32 = arith.constant 0 : i32
    %c0_i32_0 = arith.constant 0 : i32
    return %arg0, %c0_i32 : i32, i32
  }
  func.func @transform_4(%arg0: i32) -> (i32, i32) {
    %c0_i32 = arith.constant 0 : i32
    %c0_i32_0 = arith.constant 0 : i32
    %c0_i32_1 = arith.constant 0 : i32
    return %c0_i32, %c0_i32_0 : i32, i32
  }
  func.func @transform_5(%arg0: i32) -> (i32, i32) {
    %c0_i32 = arith.constant 0 : i32
    %c0_i32_0 = arith.constant 0 : i32
    %c0_i32_1 = arith.constant 0 : i32
    return %c0_i32, %c0_i32_0 : i32, i32
  }
  func.func @transform_6(%arg0: i32) -> (i32, i32) {
    %c0_i32 = arith.constant 0 : i32
    %c0_i32_0 = arith.constant 0 : i32
    %c0_i32_1 = arith.constant 0 : i32
    return %c0_i32, %c0_i32_0 : i32, i32
  }
}

</mosaic_0001>

<llo_original>
// kernel: tpu_custom_call.1
$region0: #{tpu_custom_call.1}
  #allocation0 [shape = 'u32[]', space=smem, size = 0x4, offset = 0x4, fixed_abs, tag = 'smem constant byte address 0x4 - core index']
  #allocation1 [shape = 'u32[144,128]{1,0:T(1,128)}', space=vmem, size = 0x12000, scoped, tag = 'internal scratch']
  %s0 = inlined_call_operand.vmem [shape: s32[512,1], index: 0, kind: input, shape index: {}]
  %s1 = inlined_call_operand.vmem [shape: s32[1,512], index: 1, kind: input, shape index: {}]
  %s2 = inlined_call_operand.vmem [shape: f32[24,8], index: 2, kind: input, shape index: {}]
  %s3 = inlined_call_operand.vmem [shape: f32[512,8], index: 3, kind: input, shape index: {}]
  %s4 = inlined_call_operand.vmem [shape: f32[24,128], index: 4, kind: input, shape index: {}]
  %s5 = inlined_call_operand.vmem [shape: f32[72,128], index: 5, kind: input, shape index: {}]
  %s6 = inlined_call_operand.hbm [shape: f32[24,128], index: 6, kind: output, shape index: {}]
  %s7 = sld [smem:[#allocation0]]
  $region38: #{tpu_custom_call.1} parent=0
    _
  %s9 = ssub.s32 1, %s7
  %s10 = scalar_select 0, %s9, %s7
  $region1: #{tpu_custom_call.1} parent=0
    #allocation2 [shape = 'u8[12288]{0}', space=vmem, size = 0x3000, scoped, tag = 'output window, operand 0, single buffered']
    #allocation3 [shape = 's32[1]{0}', space=sflag, size = 0x4, scoped, tag = 'scoped memory for tpu_custom_call.1']
    %11 = vsyncpa [#allocation3], 0
    // Predicated region
    $region2: #{tpu_custom_call.1} parent=1 // pred_check
      _
    $region3: #{tpu_custom_call.1} parent=1 // pred_check_branch
      %13 = sbr.rel (0) target = $region5
    $region4: #{tpu_custom_call.1} parent=1 // pred_region
      _
    $region5: #{tpu_custom_call.1} parent=1 // pred_fallthru
      _
    // Predicated region
    $region6: #{tpu_custom_call.1} parent=1 // pred_check
      _
    $region7: #{tpu_custom_call.1} parent=1 // pred_check_branch
      %15 = sbr.rel (0) target = $region9
    $region8: #{tpu_custom_call.1} parent=1 // pred_region
      _
    $region9: #{tpu_custom_call.1} parent=1 // pred_fallthru
      _
    // Predicated region
    $region10: #{tpu_custom_call.1} parent=1 // pred_check
      _
    $region11: #{tpu_custom_call.1} parent=1 // pred_check_branch
      %17 = sbr.rel (0) target = $region13
    $region12: #{tpu_custom_call.1} parent=1 // pred_region
      _
    $region13: #{tpu_custom_call.1} parent=1 // pred_fallthru
      _
    // Predicated region
    $region14: #{tpu_custom_call.1} parent=1 // pred_check
      _
    $region15: #{tpu_custom_call.1} parent=1 // pred_check_branch
      %19 = sbr.rel (0) target = $region17
    $region16: #{tpu_custom_call.1} parent=1 // pred_region
      _
    $region17: #{tpu_custom_call.1} parent=1 // pred_fallthru
      _
    // Predicated region
    $region18: #{tpu_custom_call.1} parent=1 // pred_check
      _
    $region19: #{tpu_custom_call.1} parent=1 // pred_check_branch
      %21 = sbr.rel (0) target = $region21
    $region20: #{tpu_custom_call.1} parent=1 // pred_region
      _
    $region21: #{tpu_custom_call.1} parent=1 // pred_fallthru
      _
    // Predicated region
    $region22: #{tpu_custom_call.1} parent=1 // pred_check
      _
    $region23: #{tpu_custom_call.1} parent=1 // pred_check_branch
      %23 = sbr.rel (0) target = $region25
    $region24: #{tpu_custom_call.1} parent=1 // pred_region
      _
    $region25: #{tpu_custom_call.1} parent=1 // pred_fallthru
      _
    %p24 = scmp.eq.s32.totalorder 0, 0
    // Predicated region
    $region26: #{tpu_custom_call.1} parent=1 // pred_check
      %p25 = pneg %p24
    $region27: #{tpu_custom_call.1} parent=1 // pred_check_branch
      %27 = sbr.rel (%p25) target = $region29
    $region28: #{tpu_custom_call.1} parent=1 // pred_region
      %v28 = vld [vmem:[%s4] sm:$0xff]
      %v29 = vld [vmem:[%s4 + $0x8] sm:$0xff]
      %v30 = vld [vmem:[%s4 + $0x10] sm:$0xff]
      %31 = vst [vmem:[#allocation2] sm:$0xff] %v28
      %32 = vst [vmem:[#allocation2 + $0x8] sm:$0xff] %v29
      %33 = vst [vmem:[#allocation2 + $0x10] sm:$0xff] %v30
    $region29: #{tpu_custom_call.1} parent=1 // pred_fallthru
      _
    %v34 = vld [vmem:[%s0] sm:$0xff]
    %v35 = vld [vmem:[%s0 + $0x8] sm:$0xff]
    %v36 = vld [vmem:[%s0 + $0x10] sm:$0xff]
    %v37 = vld [vmem:[%s0 + $0x18] sm:$0xff]
    %v38 = vld [vmem:[%s0 + $0x20] sm:$0xff]
    %v39 = vld [vmem:[%s0 + $0x28] sm:$0xff]
    %v40 = vld [vmem:[%s0 + $0x30] sm:$0xff]
    %v41 = vld [vmem:[%s0 + $0x38] sm:$0xff]
    %v42 = vld [vmem:[%s0 + $0x40] sm:$0xff]
    %v43 = vld [vmem:[%s0 + $0x48] sm:$0xff]
    %v44 = vld [vmem:[%s0 + $0x50] sm:$0xff]
    %v45 = vld [vmem:[%s0 + $0x58] sm:$0xff]
    %v46 = vld [vmem:[%s0 + $0x60] sm:$0xff]
    %v47 = vld [vmem:[%s0 + $0x68] sm:$0xff]
    %v48 = vld [vmem:[%s0 + $0x70] sm:$0xff]
    %v49 = vld [vmem:[%s0 + $0x78] sm:$0xff]
    %v50 = vld [vmem:[%s0 + $0x80] sm:$0xff]
    %v51 = vld [vmem:[%s0 + $0x88] sm:$0xff]
    %v52 = vld [vmem:[%s0 + $0x90] sm:$0xff]
    %v53 = vld [vmem:[%s0 + $0x98] sm:$0xff]
    %v54 = vld [vmem:[%s0 + $0xa0] sm:$0xff]
    %v55 = vld [vmem:[%s0 + $0xa8] sm:$0xff]
    %v56 = vld [vmem:[%s0 + $0xb0] sm:$0xff]
    %v57 = vld [vmem:[%s0 + $0xb8] sm:$0xff]
    %v58 = vld [vmem:[%s0 + $0xc0] sm:$0xff]
    %v59 = vld [vmem:[%s0 + $0xc8] sm:$0xff]
    %v60 = vld [vmem:[%s0 + $0xd0] sm:$0xff]
    %v61 = vld [vmem:[%s0 + $0xd8] sm:$0xff]
    %v62 = vld [vmem:[%s0 + $0xe0] sm:$0xff]
    %v63 = vld [vmem:[%s0 + $0xe8] sm:$0xff]
    %v64 = vld [vmem:[%s0 + $0xf0] sm:$0xff]
    %v65 = vld [vmem:[%s0 + $0xf8] sm:$0xff]
    %v66 = vld [vmem:[%s0 + $0x100] sm:$0xff]
    %v67 = vld [vmem:[%s0 + $0x108] sm:$0xff]
    %v68 = vld [vmem:[%s0 + $0x110] sm:$0xff]
    %v69 = vld [vmem:[%s0 + $0x118] sm:$0xff]
    %v70 = vld [vmem:[%s0 + $0x120] sm:$0xff]
    %v71 = vld [vmem:[%s0 + $0x128] sm:$0xff]
    %v72 = vld [vmem:[%s0 + $0x130] sm:$0xff]
    %v73 = vld [vmem:[%s0 + $0x138] sm:$0xff]
    %v74 = vld [vmem:[%s0 + $0x140] sm:$0xff]
    %v75 = vld [vmem:[%s0 + $0x148] sm:$0xff]
    %v76 = vld [vmem:[%s0 + $0x150] sm:$0xff]
    %v77 = vld [vmem:[%s0 + $0x158] sm:$0xff]
    %v78 = vld [vmem:[%s0 + $0x160] sm:$0xff]
    %v79 = vld [vmem:[%s0 + $0x168] sm:$0xff]
    %v80 = vld [vmem:[%s0 + $0x170] sm:$0xff]
    %v81 = vld [vmem:[%s0 + $0x178] sm:$0xff]
    %v82 = vld [vmem:[%s0 + $0x180] sm:$0xff]
    %v83 = vld [vmem:[%s0 + $0x188] sm:$0xff]
    %v84 = vld [vmem:[%s0 + $0x190] sm:$0xff]
    %v85 = vld [vmem:[%s0 + $0x198] sm:$0xff]
    %v86 = vld [vmem:[%s0 + $0x1a0] sm:$0xff]
    %v87 = vld [vmem:[%s0 + $0x1a8] sm:$0xff]
    %v88 = vld [vmem:[%s0 + $0x1b0] sm:$0xff]
    %v89 = vld [vmem:[%s0 + $0x1b8] sm:$0xff]
    %v90 = vld [vmem:[%s0 + $0x1c0] sm:$0xff]
    %v91 = vld [vmem:[%s0 + $0x1c8] sm:$0xff]
    %v92 = vld [vmem:[%s0 + $0x1d0] sm:$0xff]
    %v93 = vld [vmem:[%s0 + $0x1d8] sm:$0xff]
    %v94 = vld [vmem:[%s0 + $0x1e0] sm:$0xff]
    %v95 = vld [vmem:[%s0 + $0x1e8] sm:$0xff]
    %v96 = vld [vmem:[%s0 + $0x1f0] sm:$0xff]
    %v97 = vld [vmem:[%s0 + $0x1f8] sm:$0xff]
    %v98 = vlaneseq
    %v99 = vand.u32 %v98, 127
    %100 = vset.pattern.permute.xlu0 0
    %101 = vperm.xlu0 %100, %v34
    %v102 = vpop.permute.xlu0 %101
    %103 = vset.pattern.permute.xlu0 0
    %104 = vperm.xlu0 %103, %v35
    %v105 = vpop.permute.xlu0 %104
    %106 = vset.pattern.permute.xlu0 0
    %107 = vperm.xlu0 %106, %v36
    %v108 = vpop.permute.xlu0 %107
    %109 = vset.pattern.permute.xlu0 0
    %110 = vperm.xlu0 %109, %v37
    %v111 = vpop.permute.xlu0 %110
    %112 = vset.pattern.permute.xlu0 0
    %113 = vperm.xlu0 %112, %v38
    %v114 = vpop.permute.xlu0 %113
    %115 = vset.pattern.permute.xlu0 0
    %116 = vperm.xlu0 %115, %v39
    %v117 = vpop.permute.xlu0 %116
    %118 = vset.pattern.permute.xlu0 0
    %119 = vperm.xlu0 %118, %v40
    %v120 = vpop.permute.xlu0 %119
    %121 = vset.pattern.permute.xlu0 0
    %122 = vperm.xlu0 %121, %v41
    %v123 = vpop.permute.xlu0 %122
    %124 = vset.pattern.permute.xlu0 0
    %125 = vperm.xlu0 %124, %v42
    %v126 = vpop.permute.xlu0 %125
    %127 = vset.pattern.permute.xlu0 0
    %128 = vperm.xlu0 %127, %v43
    %v129 = vpop.permute.xlu0 %128
    %130 = vset.pattern.permute.xlu0 0
    %131 = vperm.xlu0 %130, %v44
    %v132 = vpop.permute.xlu0 %131
    %133 = vset.pattern.permute.xlu0 0
    %134 = vperm.xlu0 %133, %v45
    %v135 = vpop.permute.xlu0 %134
    %136 = vset.pattern.permute.xlu0 0
    %137 = vperm.xlu0 %136, %v46
    %v138 = vpop.permute.xlu0 %137
    %139 = vset.pattern.permute.xlu0 0
    %140 = vperm.xlu0 %139, %v47
    %v141 = vpop.permute.xlu0 %140
    %142 = vset.pattern.permute.xlu0 0
    %143 = vperm.xlu0 %142, %v48
    %v144 = vpop.permute.xlu0 %143
    %145 = vset.pattern.permute.xlu0 0
    %146 = vperm.xlu0 %145, %v49
    %v147 = vpop.permute.xlu0 %146
    %148 = vset.pattern.permute.xlu0 0
    %149 = vperm.xlu0 %148, %v50
    %v150 = vpop.permute.xlu0 %149
    %151 = vset.pattern.permute.xlu0 0
    %152 = vperm.xlu0 %151, %v51
    %v153 = vpop.permute.xlu0 %152
    %154 = vset.pattern.permute.xlu0 0
    %155 = vperm.xlu0 %154, %v52
    %v156 = vpop.permute.xlu0 %155
    %157 = vset.pattern.permute.xlu0 0
    %158 = vperm.xlu0 %157, %v53
    %v159 = vpop.permute.xlu0 %158
    %160 = vset.pattern.permute.xlu0 0
    %161 = vperm.xlu0 %160, %v54
    %v162 = vpop.permute.xlu0 %161
    %163 = vset.pattern.permute.xlu0 0
    %164 = vperm.xlu0 %163, %v55
    %v165 = vpop.permute.xlu0 %164
    %166 = vset.pattern.permute.xlu0 0
    %167 = vperm.xlu0 %166, %v56
    %v168 = vpop.permute.xlu0 %167
    %169 = vset.pattern.permute.xlu0 0
    %170 = vperm.xlu0 %169, %v57
    %v171 = vpop.permute.xlu0 %170
    %172 = vset.pattern.permute.xlu0 0
    %173 = vperm.xlu0 %172, %v58
    %v174 = vpop.permute.xlu0 %173
    %175 = vset.pattern.permute.xlu0 0
    %176 = vperm.xlu0 %175, %v59
    %v177 = vpop.permute.xlu0 %176
    %178 = vset.pattern.permute.xlu0 0
    %179 = vperm.xlu0 %178, %v60
    %v180 = vpop.permute.xlu0 %179
    %181 = vset.pattern.permute.xlu0 0
    %182 = vperm.xlu0 %181, %v61
    %v183 = vpop.permute.xlu0 %182
    %184 = vset.pattern.permute.xlu0 0
    %185 = vperm.xlu0 %184, %v62
    %v186 = vpop.permute.xlu0 %185
    %187 = vset.pattern.permute.xlu0 0
    %188 = vperm.xlu0 %187, %v63
    %v189 = vpop.permute.xlu0 %188
    %190 = vset.pattern.permute.xlu0 0
    %191 = vperm.xlu0 %190, %v64
    %v192 = vpop.permute.xlu0 %191
    %193 = vset.pattern.permute.xlu0 0
    %194 = vperm.xlu0 %193, %v65
    %v195 = vpop.permute.xlu0 %194
    %196 = vset.pattern.permute.xlu0 0
    %197 = vperm.xlu0 %196, %v66
    %v198 = vpop.permute.xlu0 %197
    %199 = vset.pattern.permute.xlu0 0
    %200 = vperm.xlu0 %199, %v67
    %v201 = vpop.permute.xlu0 %200
    %202 = vset.pattern.permute.xlu0 0
    %203 = vperm.xlu0 %202, %v68
    %v204 = vpop.permute.xlu0 %203
    %205 = vset.pattern.permute.xlu0 0
    %206 = vperm.xlu0 %205, %v69
    %v207 = vpop.permute.xlu0 %206
    %208 = vset.pattern.permute.xlu0 0
    %209 = vperm.xlu0 %208, %v70
    %v210 = vpop.permute.xlu0 %209
    %211 = vset.pattern.permute.xlu0 0
    %212 = vperm.xlu0 %211, %v71
    %v213 = vpop.permute.xlu0 %212
    %214 = vset.pattern.permute.xlu0 0
    %215 = vperm.xlu0 %214, %v72
    %v216 = vpop.permute.xlu0 %215
    %217 = vset.pattern.permute.xlu0 0
    %218 = vperm.xlu0 %217, %v73
    %v219 = vpop.permute.xlu0 %218
    %220 = vset.pattern.permute.xlu0 0
    %221 = vperm.xlu0 %220, %v74
    %v222 = vpop.permute.xlu0 %221
    %223 = vset.pattern.permute.xlu0 0
    %224 = vperm.xlu0 %223, %v75
    %v225 = vpop.permute.xlu0 %224
    %226 = vset.pattern.permute.xlu0 0
    %227 = vperm.xlu0 %226, %v76
    %v228 = vpop.permute.xlu0 %227
    %229 = vset.pattern.permute.xlu0 0
    %230 = vperm.xlu0 %229, %v77
    %v231 = vpop.permute.xlu0 %230
    %232 = vset.pattern.permute.xlu0 0
    %233 = vperm.xlu0 %232, %v78
    %v234 = vpop.permute.xlu0 %233
    %235 = vset.pattern.permute.xlu0 0
    %236 = vperm.xlu0 %235, %v79
    %v237 = vpop.permute.xlu0 %236
    %238 = vset.pattern.permute.xlu0 0
    %239 = vperm.xlu0 %238, %v80
    %v240 = vpop.permute.xlu0 %239
    %241 = vset.pattern.permute.xlu0 0
    %242 = vperm.xlu0 %241, %v81
    %v243 = vpop.permute.xlu0 %242
    %244 = vset.pattern.permute.xlu0 0
    %245 = vperm.xlu0 %244, %v82
    %v246 = vpop.permute.xlu0 %245
    %247 = vset.pattern.permute.xlu0 0
    %248 = vperm.xlu0 %247, %v83
    %v249 = vpop.permute.xlu0 %248
    %250 = vset.pattern.permute.xlu0 0
    %251 = vperm.xlu0 %250, %v84
    %v252 = vpop.permute.xlu0 %251
    %253 = vset.pattern.permute.xlu0 0
    %254 = vperm.xlu0 %253, %v85
    %v255 = vpop.permute.xlu0 %254
    %256 = vset.pattern.permute.xlu0 0
    %257 = vperm.xlu0 %256, %v86
    %v258 = vpop.permute.xlu0 %257
    %259 = vset.pattern.permute.xlu0 0
    %260 = vperm.xlu0 %259, %v87
    %v261 = vpop.permute.xlu0 %260
    %262 = vset.pattern.permute.xlu0 0
    %263 = vperm.xlu0 %262, %v88
    %v264 = vpop.permute.xlu0 %263
    %265 = vset.pattern.permute.xlu0 0
    %266 = vperm.xlu0 %265, %v89
    %v267 = vpop.permute.xlu0 %266
    %268 = vset.pattern.permute.xlu0 0
    %269 = vperm.xlu0 %268, %v90
    %v270 = vpop.permute.xlu0 %269
    %271 = vset.pattern.permute.xlu0 0
    %272 = vperm.xlu0 %271, %v91
    %v273 = vpop.permute.xlu0 %272
    %274 = vset.pattern.permute.xlu0 0
    %275 = vperm.xlu0 %274, %v92
    %v276 = vpop.permute.xlu0 %275
    %277 = vset.pattern.permute.xlu0 0
    %278 = vperm.xlu0 %277, %v93
    %v279 = vpop.permute.xlu0 %278
    %280 = vset.pattern.permute.xlu0 0
    %281 = vperm.xlu0 %280, %v94
    %v282 = vpop.permute.xlu0 %281
    %283 = vset.pattern.permute.xlu0 0
    %284 = vperm.xlu0 %283, %v95
    %v285 = vpop.permute.xlu0 %284
    %286 = vset.pattern.permute.xlu0 0
    %287 = vperm.xlu0 %286, %v96
    %v288 = vpop.permute.xlu0 %287
    %289 = vset.pattern.permute.xlu0 0
    %290 = vperm.xlu0 %289, %v97
    %v291 = vpop.permute.xlu0 %290
    %vm292 = vcmp.eq.s32.totalorder %v102, %v99
    %vm293 = vcmp.eq.s32.totalorder %v105, %v99
    %vm294 = vcmp.eq.s32.totalorder %v108, %v99
    %vm295 = vcmp.eq.s32.totalorder %v111, %v99
    %vm296 = vcmp.eq.s32.totalorder %v114, %v99
    %vm297 = vcmp.eq.s32.totalorder %v117, %v99
    %vm298 = vcmp.eq.s32.totalorder %v120, %v99
    %vm299 = vcmp.eq.s32.totalorder %v123, %v99
    %vm300 = vcmp.eq.s32.totalorder %v126, %v99
    %vm301 = vcmp.eq.s32.totalorder %v129, %v99
    %vm302 = vcmp.eq.s32.totalorder %v132, %v99
    %vm303 = vcmp.eq.s32.totalorder %v135, %v99
    %vm304 = vcmp.eq.s32.totalorder %v138, %v99
    %vm305 = vcmp.eq.s32.totalorder %v141, %v99
    %vm306 = vcmp.eq.s32.totalorder %v144, %v99
    %vm307 = vcmp.eq.s32.totalorder %v147, %v99
    %vm308 = vcmp.eq.s32.totalorder %v150, %v99
    %vm309 = vcmp.eq.s32.totalorder %v153, %v99
    %vm310 = vcmp.eq.s32.totalorder %v156, %v99
    %vm311 = vcmp.eq.s32.totalorder %v159, %v99
    %vm312 = vcmp.eq.s32.totalorder %v162, %v99
    %vm313 = vcmp.eq.s32.totalorder %v165, %v99
    %vm314 = vcmp.eq.s32.totalorder %v168, %v99
    %vm315 = vcmp.eq.s32.totalorder %v171, %v99
    %vm316 = vcmp.eq.s32.totalorder %v174, %v99
    %vm317 = vcmp.eq.s32.totalorder %v177, %v99
    %vm318 = vcmp.eq.s32.totalorder %v180, %v99
    %vm319 = vcmp.eq.s32.totalorder %v183, %v99
    %vm320 = vcmp.eq.s32.totalorder %v186, %v99
    %vm321 = vcmp.eq.s32.totalorder %v189, %v99
    %vm322 = vcmp.eq.s32.totalorder %v192, %v99
    %vm323 = vcmp.eq.s32.totalorder %v195, %v99
    %vm324 = vcmp.eq.s32.totalorder %v198, %v99
    %vm325 = vcmp.eq.s32.totalorder %v201, %v99
    %vm326 = vcmp.eq.s32.totalorder %v204, %v99
    %vm327 = vcmp.eq.s32.totalorder %v207, %v99
    %vm328 = vcmp.eq.s32.totalorder %v210, %v99
    %vm329 = vcmp.eq.s32.totalorder %v213, %v99
    %vm330 = vcmp.eq.s32.totalorder %v216, %v99
    %vm331 = vcmp.eq.s32.totalorder %v219, %v99
    %vm332 = vcmp.eq.s32.totalorder %v222, %v99
    %vm333 = vcmp.eq.s32.totalorder %v225, %v99
    %vm334 = vcmp.eq.s32.totalorder %v228, %v99
    %vm335 = vcmp.eq.s32.totalorder %v231, %v99
    %vm336 = vcmp.eq.s32.totalorder %v234, %v99
    %vm337 = vcmp.eq.s32.totalorder %v237, %v99
    %vm338 = vcmp.eq.s32.totalorder %v240, %v99
    %vm339 = vcmp.eq.s32.totalorder %v243, %v99
    %vm340 = vcmp.eq.s32.totalorder %v246, %v99
    %vm341 = vcmp.eq.s32.totalorder %v249, %v99
    %vm342 = vcmp.eq.s32.totalorder %v252, %v99
    %vm343 = vcmp.eq.s32.totalorder %v255, %v99
    %vm344 = vcmp.eq.s32.totalorder %v258, %v99
    %vm345 = vcmp.eq.s32.totalorder %v261, %v99
    %vm346 = vcmp.eq.s32.totalorder %v264, %v99
    %vm347 = vcmp.eq.s32.totalorder %v267, %v99
    %vm348 = vcmp.eq.s32.totalorder %v270, %v99
    %vm349 = vcmp.eq.s32.totalorder %v273, %v99
    %vm350 = vcmp.eq.s32.totalorder %v276, %v99
    %vm351 = vcmp.eq.s32.totalorder %v279, %v99
    %vm352 = vcmp.eq.s32.totalorder %v282, %v99
    %vm353 = vcmp.eq.s32.totalorder %v285, %v99
    %vm354 = vcmp.eq.s32.totalorder %v288, %v99
    %vm355 = vcmp.eq.s32.totalorder %v291, %v99
    %v356 = vsel %vm292, 1, 0
    %v357 = vsel %vm293, 1, 0
    %v358 = vsel %vm294, 1, 0
    %v359 = vsel %vm295, 1, 0
    %v360 = vsel %vm296, 1, 0
    %v361 = vsel %vm297, 1, 0
    %v362 = vsel %vm298, 1, 0
    %v363 = vsel %vm299, 1, 0
    %v364 = vsel %vm300, 1, 0
    %v365 = vsel %vm301, 1, 0
    %v366 = vsel %vm302, 1, 0
    %v367 = vsel %vm303, 1, 0
    %v368 = vsel %vm304, 1, 0
    %v369 = vsel %vm305, 1, 0
    %v370 = vsel %vm306, 1, 0
    %v371 = vsel %vm307, 1, 0
    %v372 = vsel %vm308, 1, 0
    %v373 = vsel %vm309, 1, 0
    %v374 = vsel %vm310, 1, 0
    %v375 = vsel %vm311, 1, 0
    %v376 = vsel %vm312, 1, 0
    %v377 = vsel %vm313, 1, 0
    %v378 = vsel %vm314, 1, 0
    %v379 = vsel %vm315, 1, 0
    %v380 = vsel %vm316, 1, 0
    %v381 = vsel %vm317, 1, 0
    %v382 = vsel %vm318, 1, 0
    %v383 = vsel %vm319, 1, 0
    %v384 = vsel %vm320, 1, 0
    %v385 = vsel %vm321, 1, 0
    %v386 = vsel %vm322, 1, 0
    %v387 = vsel %vm323, 1, 0
    %v388 = vsel %vm324, 1, 0
    %v389 = vsel %vm325, 1, 0
    %v390 = vsel %vm326, 1, 0
    %v391 = vsel %vm327, 1, 0
    %v392 = vsel %vm328, 1, 0
    %v393 = vsel %vm329, 1, 0
    %v394 = vsel %vm330, 1, 0
    %v395 = vsel %vm331, 1, 0
    %v396 = vsel %vm332, 1, 0
    %v397 = vsel %vm333, 1, 0
    %v398 = vsel %vm334, 1, 0
    %v399 = vsel %vm335, 1, 0
    %v400 = vsel %vm336, 1, 0
    %v401 = vsel %vm337, 1, 0
    %v402 = vsel %vm338, 1, 0
    %v403 = vsel %vm339, 1, 0
    %v404 = vsel %vm340, 1, 0
    %v405 = vsel %vm341, 1, 0
    %v406 = vsel %vm342, 1, 0
    %v407 = vsel %vm343, 1, 0
    %v408 = vsel %vm344, 1, 0
    %v409 = vsel %vm345, 1, 0
    %v410 = vsel %vm346, 1, 0
    %v411 = vsel %vm347, 1, 0
    %v412 = vsel %vm348, 1, 0
    %v413 = vsel %vm349, 1, 0
    %v414 = vsel %vm350, 1, 0
    %v415 = vsel %vm351, 1, 0
    %v416 = vsel %vm352, 1, 0
    %v417 = vsel %vm353, 1, 0
    %v418 = vsel %vm354, 1, 0
    %v419 = vsel %vm355, 1, 0
    %v420 = vcvt.s32.f32 %v356
    %v421 = vcvt.s32.f32 %v357
    %v422 = vcvt.s32.f32 %v358
    %v423 = vcvt.s32.f32 %v359
    %v424 = vcvt.s32.f32 %v360
    %v425 = vcvt.s32.f32 %v361
    %v426 = vcvt.s32.f32 %v362
    %v427 = vcvt.s32.f32 %v363
    %v428 = vcvt.s32.f32 %v364
    %v429 = vcvt.s32.f32 %v365
    %v430 = vcvt.s32.f32 %v366
    %v431 = vcvt.s32.f32 %v367
    %v432 = vcvt.s32.f32 %v368
    %v433 = vcvt.s32.f32 %v369
    %v434 = vcvt.s32.f32 %v370
    %v435 = vcvt.s32.f32 %v371
    %v436 = vcvt.s32.f32 %v372
    %v437 = vcvt.s32.f32 %v373
    %v438 = vcvt.s32.f32 %v374
    %v439 = vcvt.s32.f32 %v375
    %v440 = vcvt.s32.f32 %v376
    %v441 = vcvt.s32.f32 %v377
    %v442 = vcvt.s32.f32 %v378
    %v443 = vcvt.s32.f32 %v379
    %v444 = vcvt.s32.f32 %v380
    %v445 = vcvt.s32.f32 %v381
    %v446 = vcvt.s32.f32 %v382
    %v447 = vcvt.s32.f32 %v383
    %v448 = vcvt.s32.f32 %v384
    %v449 = vcvt.s32.f32 %v385
    %v450 = vcvt.s32.f32 %v386
    %v451 = vcvt.s32.f32 %v387
    %v452 = vcvt.s32.f32 %v388
    %v453 = vcvt.s32.f32 %v389
    %v454 = vcvt.s32.f32 %v390
    %v455 = vcvt.s32.f32 %v391
    %v456 = vcvt.s32.f32 %v392
    %v457 = vcvt.s32.f32 %v393
    %v458 = vcvt.s32.f32 %v394
    %v459 = vcvt.s32.f32 %v395
    %v460 = vcvt.s32.f32 %v396
    %v461 = vcvt.s32.f32 %v397
    %v462 = vcvt.s32.f32 %v398
    %v463 = vcvt.s32.f32 %v399
    %v464 = vcvt.s32.f32 %v400
    %v465 = vcvt.s32.f32 %v401
    %v466 = vcvt.s32.f32 %v402
    %v467 = vcvt.s32.f32 %v403
    %v468 = vcvt.s32.f32 %v404
    %v469 = vcvt.s32.f32 %v405
    %v470 = vcvt.s32.f32 %v406
    %v471 = vcvt.s32.f32 %v407
    %v472 = vcvt.s32.f32 %v408
    %v473 = vcvt.s32.f32 %v409
    %v474 = vcvt.s32.f32 %v410
    %v475 = vcvt.s32.f32 %v411
    %v476 = vcvt.s32.f32 %v412
    %v477 = vcvt.s32.f32 %v413
    %v478 = vcvt.s32.f32 %v414
    %v479 = vcvt.s32.f32 %v415
    %v480 = vcvt.s32.f32 %v416
    %v481 = vcvt.s32.f32 %v417
    %v482 = vcvt.s32.f32 %v418
    %v483 = vcvt.s32.f32 %v419
    %v484 = vld [vmem:[%s2] sm:$0xff]
    %v485 = vld [vmem:[%s2 + $0x8] sm:$0xff]
    %v486 = vld [vmem:[%s2 + $0x10] sm:$0xff]
    %vm487 = vcmask 195584
    %v489 = vsel %vm487, %v420, 0
    %v492 = vsel %vm487, %v421, 0
    %v495 = vsel %vm487, %v422, 0
    %v498 = vsel %vm487, %v423, 0
    %v501 = vsel %vm487, %v424, 0
    %v504 = vsel %vm487, %v425, 0
    %v507 = vsel %vm487, %v426, 0
    %v510 = vsel %vm487, %v427, 0
    %v513 = vsel %vm487, %v428, 0
    %v516 = vsel %vm487, %v429, 0
    %v519 = vsel %vm487, %v430, 0
    %v522 = vsel %vm487, %v431, 0
    %v525 = vsel %vm487, %v432, 0
    %v528 = vsel %vm487, %v433, 0
    %v531 = vsel %vm487, %v434, 0
    %v534 = vsel %vm487, %v435, 0
    %v537 = vsel %vm487, %v436, 0
    %v540 = vsel %vm487, %v437, 0
    %v543 = vsel %vm487, %v438, 0
    %v546 = vsel %vm487, %v439, 0
    %v549 = vsel %vm487, %v440, 0
    %v552 = vsel %vm487, %v441, 0
    %v555 = vsel %vm487, %v442, 0
    %v558 = vsel %vm487, %v443, 0
    %v561 = vsel %vm487, %v444, 0
    %v564 = vsel %vm487, %v445, 0
    %v567 = vsel %vm487, %v446, 0
    %v570 = vsel %vm487, %v447, 0
    %v573 = vsel %vm487, %v448, 0
    %v576 = vsel %vm487, %v449, 0
    %v579 = vsel %vm487, %v450, 0
    %v582 = vsel %vm487, %v451, 0
    %v585 = vsel %vm487, %v452, 0
    %v588 = vsel %vm487, %v453, 0
    %v591 = vsel %vm487, %v454, 0
    %v594 = vsel %vm487, %v455, 0
    %v597 = vsel %vm487, %v456, 0
    %v600 = vsel %vm487, %v457, 0
    %v603 = vsel %vm487, %v458, 0
    %v606 = vsel %vm487, %v459, 0
    %v609 = vsel %vm487, %v460, 0
    %v612 = vsel %vm487, %v461, 0
    %v615 = vsel %vm487, %v462, 0
    %v618 = vsel %vm487, %v463, 0
    %v621 = vsel %vm487, %v464, 0
    %v624 = vsel %vm487, %v465, 0
    %v627 = vsel %vm487, %v466, 0
    %v630 = vsel %vm487, %v467, 0
    %v633 = vsel %vm487, %v468, 0
    %v636 = vsel %vm487, %v469, 0
    %v639 = vsel %vm487, %v470, 0
    %v642 = vsel %vm487, %v471, 0
    %v645 = vsel %vm487, %v472, 0
    %v648 = vsel %vm487, %v473, 0
    %v651 = vsel %vm487, %v474, 0
    %v654 = vsel %vm487, %v475, 0
    %v657 = vsel %vm487, %v476, 0
    %v660 = vsel %vm487, %v477, 0
    %v663 = vsel %vm487, %v478, 0
    %v666 = vsel %vm487, %v479, 0
    %v669 = vsel %vm487, %v480, 0
    %v672 = vsel %vm487, %v481, 0
    %v675 = vsel %vm487, %v482, 0
    %v678 = vsel %vm487, %v483, 0
    %680 = vmatprep.subr.mxu0 0.0
    %681 = vmatpush1.msra.mxu0 0.0
    %682 = vmatprep.subr.mxu0 0.0
    %683 = vmatpush1.msra.mxu0 0.0
    %684 = vmatprep.subr.mxu0 0.0
    %685 = vmatpush1.msra.mxu0 0.0
    %686 = vmatprep.subr.mxu0 0.0
    %687 = vmatpush1.msra.mxu0 0.0
    %688 = vmatprep.subr.mxu0 0.0
    %689 = vmatpush1.msra.mxu0 0.0
    %690 = vmatprep.subr.mxu0 0.0
    %691 = vmatpush1.msra.mxu0 0.0
    %692 = vmatprep.subr.mxu0 0.0
    %693 = vmatpush1.msra.mxu0 0.0
    %694 = vmatprep.subr.mxu0 0.0
    %695 = vmatpush1.msra.mxu0 0.0
    %696 = vmatprep.subr.mxu0 0.0
    %697 = vmatpush1.msra.mxu0 0.0
    %698 = vmatprep.subr.mxu0 0.0
    %699 = vmatpush1.msra.mxu0 0.0
    %700 = vmatprep.subr.mxu0 0.0
    %701 = vmatpush1.msra.mxu0 0.0
    %702 = vmatprep.subr.mxu0 0.0
    %703 = vmatpush1.msra.mxu0 0.0
    %704 = vmatprep.subr.mxu0 0.0
    %705 = vmatpush1.msra.mxu0 0.0
    %706 = vmatprep.subr.mxu0 0.0
    %707 = vmatpush1.msra.mxu0 %v486
    %708 = vmatprep.subr.mxu0 0.0
    %709 = vmatpush1.msra.mxu0 %v485
    %710 = vmatprep.subr.mxu0 0.0
    %711 = vmatpush1.msra.mxu0 %v484
    %712 = vmatprep.subr.mxu0 0.0
    %713 = vmatpush2.msra.mxu0 0.0
    %714 = vmatprep.subr.mxu0 0.0
    %715 = vmatpush2.msra.mxu0 0.0
    %716 = vmatprep.subr.mxu0 0.0
    %717 = vmatpush2.msra.mxu0 0.0
    %718 = vmatprep.subr.mxu0 0.0
    %719 = vmatpush2.msra.mxu0 0.0
    %720 = vmatprep.subr.mxu0 0.0
    %721 = vmatpush2.msra.mxu0 0.0
    %722 = vmatprep.subr.mxu0 0.0
    %723 = vmatpush2.msra.mxu0 0.0
    %724 = vmatprep.subr.mxu0 0.0
    %725 = vmatpush2.msra.mxu0 0.0
    %726 = vmatprep.subr.mxu0 0.0
    %727 = vmatpush2.msra.mxu0 0.0
    %728 = vmatprep.subr.mxu0 0.0
    %729 = vmatpush2.msra.mxu0 0.0
    %730 = vmatprep.subr.mxu0 0.0
    %731 = vmatpush2.msra.mxu0 0.0
    %732 = vmatprep.subr.mxu0 0.0
    %733 = vmatpush2.msra.mxu0 0.0
    %734 = vmatprep.subr.mxu0 0.0
    %735 = vmatpush2.msra.mxu0 0.0
    %736 = vmatprep.subr.mxu0 0.0
    %737 = vmatpush2.msra.mxu0 0.0
    %738 = vmatprep.subr.mxu0 0.0
    %739 = vmatpush2.msra.mxu0 0.0
    %740 = vmatprep.subr.mxu0 0.0
    %741 = vmatpush2.msra.mxu0 0.0
    %742 = vmatprep.subr.mxu0 0.0
    %743 = vmatpush2.msra.mxu0 0.0
    %744 = vmatprep.mubr.f32.mxu0 0.0
    %745 = vmatmul.mubr.f32.gmra.mxu0 %v489
    %v746 = vpop.f32.mrf.mxu0
    %v747 = vadd.f32 0.0, %v746
    %v748 = vpop.f32.mrf.mxu0
    %749 = vmatprep.mubr.f32.mxu0 0.0
    %750 = vmatmul.mubr.f32.gmra.mxu0 %v492
    %v751 = vpop.f32.mrf.mxu0
    %v752 = vadd.f32 0.0, %v751
    %v753 = vpop.f32.mrf.mxu0
    %754 = vmatprep.mubr.f32.mxu0 0.0
    %755 = vmatmul.mubr.f32.gmra.mxu0 %v495
    %v756 = vpop.f32.mrf.mxu0
    %v757 = vadd.f32 0.0, %v756
    %v758 = vpop.f32.mrf.mxu0
    %759 = vmatprep.mubr.f32.mxu0 0.0
    %760 = vmatmul.mubr.f32.gmra.mxu0 %v498
    %v761 = vpop.f32.mrf.mxu0
    %v762 = vadd.f32 0.0, %v761
    %v763 = vpop.f32.mrf.mxu0
    %764 = vmatprep.mubr.f32.mxu0 0.0
    %765 = vmatmul.mubr.f32.gmra.mxu0 %v501
    %v766 = vpop.f32.mrf.mxu0
    %v767 = vadd.f32 0.0, %v766
    %v768 = vpop.f32.mrf.mxu0
    %769 = vmatprep.mubr.f32.mxu0 0.0
    %770 = vmatmul.mubr.f32.gmra.mxu0 %v504
    %v771 = vpop.f32.mrf.mxu0
    %v772 = vadd.f32 0.0, %v771
    %v773 = vpop.f32.mrf.mxu0
    %774 = vmatprep.mubr.f32.mxu0 0.0
    %775 = vmatmul.mubr.f32.gmra.mxu0 %v507
    %v776 = vpop.f32.mrf.mxu0
    %v777 = vadd.f32 0.0, %v776
    %v778 = vpop.f32.mrf.mxu0
    %779 = vmatprep.mubr.f32.mxu0 0.0
    %780 = vmatmul.mubr.f32.gmra.mxu0 %v510
    %v781 = vpop.f32.mrf.mxu0
    %v782 = vadd.f32 0.0, %v781
    %v783 = vpop.f32.mrf.mxu0
    %784 = vmatprep.mubr.f32.mxu0 0.0
    %785 = vmatmul.mubr.f32.gmra.mxu0 %v513
    %v786 = vpop.f32.mrf.mxu0
    %v787 = vadd.f32 0.0, %v786
    %v788 = vpop.f32.mrf.mxu0
    %789 = vmatprep.mubr.f32.mxu0 0.0
    %790 = vmatmul.mubr.f32.gmra.mxu0 %v516
    %v791 = vpop.f32.mrf.mxu0
    %v792 = vadd.f32 0.0, %v791
    %v793 = vpop.f32.mrf.mxu0
    %794 = vmatprep.mubr.f32.mxu0 0.0
    %795 = vmatmul.mubr.f32.gmra.mxu0 %v519
    %v796 = vpop.f32.mrf.mxu0
    %v797 = vadd.f32 0.0, %v796
    %v798 = vpop.f32.mrf.mxu0
    %799 = vmatprep.mubr.f32.mxu0 0.0
    %800 = vmatmul.mubr.f32.gmra.mxu0 %v522
    %v801 = vpop.f32.mrf.mxu0
    %v802 = vadd.f32 0.0, %v801
    %v803 = vpop.f32.mrf.mxu0
    %804 = vmatprep.mubr.f32.mxu0 0.0
    %805 = vmatmul.mubr.f32.gmra.mxu0 %v525
    %v806 = vpop.f32.mrf.mxu0
    %v807 = vadd.f32 0.0, %v806
    %v808 = vpop.f32.mrf.mxu0
    %809 = vmatprep.mubr.f32.mxu0 0.0
    %810 = vmatmul.mubr.f32.gmra.mxu0 %v528
    %v811 = vpop.f32.mrf.mxu0
    %v812 = vadd.f32 0.0, %v811
    %v813 = vpop.f32.mrf.mxu0
    %814 = vmatprep.mubr.f32.mxu0 0.0
    %815 = vmatmul.mubr.f32.gmra.mxu0 %v531
    %v816 = vpop.f32.mrf.mxu0
    %v817 = vadd.f32 0.0, %v816
    %v818 = vpop.f32.mrf.mxu0
    %819 = vmatprep.mubr.f32.mxu0 0.0
    %820 = vmatmul.mubr.f32.gmra.mxu0 %v534
    %v821 = vpop.f32.mrf.mxu0
    %v822 = vadd.f32 0.0, %v821
    %v823 = vpop.f32.mrf.mxu0
    %824 = vmatprep.mubr.f32.mxu0 0.0
    %825 = vmatmul.mubr.f32.gmra.mxu0 %v537
    %v826 = vpop.f32.mrf.mxu0
    %v827 = vadd.f32 0.0, %v826
    %v828 = vpop.f32.mrf.mxu0
    %829 = vmatprep.mubr.f32.mxu0 0.0
    %830 = vmatmul.mubr.f32.gmra.mxu0 %v540
    %v831 = vpop.f32.mrf.mxu0
    %v832 = vadd.f32 0.0, %v831
    %v833 = vpop.f32.mrf.mxu0
    %834 = vmatprep.mubr.f32.mxu0 0.0
    %835 = vmatmul.mubr.f32.gmra.mxu0 %v543
    %v836 = vpop.f32.mrf.mxu0
    %v837 = vadd.f32 0.0, %v836
    %v838 = vpop.f32.mrf.mxu0
    %839 = vmatprep.mubr.f32.mxu0 0.0
    %840 = vmatmul.mubr.f32.gmra.mxu0 %v546
    %v841 = vpop.f32.mrf.mxu0
    %v842 = vadd.f32 0.0, %v841
    %v843 = vpop.f32.mrf.mxu0
    %844 = vmatprep.mubr.f32.mxu0 0.0
    %845 = vmatmul.mubr.f32.gmra.mxu0 %v549
    %v846 = vpop.f32.mrf.mxu0
    %v847 = vadd.f32 0.0, %v846
    %v848 = vpop.f32.mrf.mxu0
    %849 = vmatprep.mubr.f32.mxu0 0.0
    %850 = vmatmul.mubr.f32.gmra.mxu0 %v552
    %v851 = vpop.f32.mrf.mxu0
    %v852 = vadd.f32 0.0, %v851
    %v853 = vpop.f32.mrf.mxu0
    %854 = vmatprep.mubr.f32.mxu0 0.0
    %855 = vmatmul.mubr.f32.gmra.mxu0 %v555
    %v856 = vpop.f32.mrf.mxu0
    %v857 = vadd.f32 0.0, %v856
    %v858 = vpop.f32.mrf.mxu0
    %859 = vmatprep.mubr.f32.mxu0 0.0
    %860 = vmatmul.mubr.f32.gmra.mxu0 %v558
    %v861 = vpop.f32.mrf.mxu0
    %v862 = vadd.f32 0.0, %v861
    %v863 = vpop.f32.mrf.mxu0
    %864 = vmatprep.mubr.f32.mxu0 0.0
    %865 = vmatmul.mubr.f32.gmra.mxu0 %v561
    %v866 = vpop.f32.mrf.mxu0
    %v867 = vadd.f32 0.0, %v866
    %v868 = vpop.f32.mrf.mxu0
    %869 = vmatprep.mubr.f32.mxu0 0.0
    %870 = vmatmul.mubr.f32.gmra.mxu0 %v564
    %v871 = vpop.f32.mrf.mxu0
    %v872 = vadd.f32 0.0, %v871
    %v873 = vpop.f32.mrf.mxu0
    %874 = vmatprep.mubr.f32.mxu0 0.0
    %875 = vmatmul.mubr.f32.gmra.mxu0 %v567
    %v876 = vpop.f32.mrf.mxu0
    %v877 = vadd.f32 0.0, %v876
    %v878 = vpop.f32.mrf.mxu0
    %879 = vmatprep.mubr.f32.mxu0 0.0
    %880 = vmatmul.mubr.f32.gmra.mxu0 %v570
    %v881 = vpop.f32.mrf.mxu0
    %v882 = vadd.f32 0.0, %v881
    %v883 = vpop.f32.mrf.mxu0
    %884 = vmatprep.mubr.f32.mxu0 0.0
    %885 = vmatmul.mubr.f32.gmra.mxu0 %v573
    %v886 = vpop.f32.mrf.mxu0
    %v887 = vadd.f32 0.0, %v886
    %v888 = vpop.f32.mrf.mxu0
    %889 = vmatprep.mubr.f32.mxu0 0.0
    %890 = vmatmul.mubr.f32.gmra.mxu0 %v576
    %v891 = vpop.f32.mrf.mxu0
    %v892 = vadd.f32 0.0, %v891
    %v893 = vpop.f32.mrf.mxu0
    %894 = vmatprep.mubr.f32.mxu0 0.0
    %895 = vmatmul.mubr.f32.gmra.mxu0 %v579
    %v896 = vpop.f32.mrf.mxu0
    %v897 = vadd.f32 0.0, %v896
    %v898 = vpop.f32.mrf.mxu0
    %899 = vmatprep.mubr.f32.mxu0 0.0
    %900 = vmatmul.mubr.f32.gmra.mxu0 %v582
    %v901 = vpop.f32.mrf.mxu0
    %v902 = vadd.f32 0.0, %v901
    %v903 = vpop.f32.mrf.mxu0
    %904 = vmatprep.mubr.f32.mxu0 0.0
    %905 = vmatmul.mubr.f32.gmra.mxu0 %v585
    %v906 = vpop.f32.mrf.mxu0
    %v907 = vadd.f32 0.0, %v906
    %v908 = vpop.f32.mrf.mxu0
    %909 = vmatprep.mubr.f32.mxu0 0.0
    %910 = vmatmul.mubr.f32.gmra.mxu0 %v588
    %v911 = vpop.f32.mrf.mxu0
    %v912 = vadd.f32 0.0, %v911
    %v913 = vpop.f32.mrf.mxu0
    %914 = vmatprep.mubr.f32.mxu0 0.0
    %915 = vmatmul.mubr.f32.gmra.mxu0 %v591
    %v916 = vpop.f32.mrf.mxu0
    %v917 = vadd.f32 0.0, %v916
    %v918 = vpop.f32.mrf.mxu0
    %919 = vmatprep.mubr.f32.mxu0 0.0
    %920 = vmatmul.mubr.f32.gmra.mxu0 %v594
    %v921 = vpop.f32.mrf.mxu0
    %v922 = vadd.f32 0.0, %v921
    %v923 = vpop.f32.mrf.mxu0
    %924 = vmatprep.mubr.f32.mxu0 0.0
    %925 = vmatmul.mubr.f32.gmra.mxu0 %v597
    %v926 = vpop.f32.mrf.mxu0
    %v927 = vadd.f32 0.0, %v926
    %v928 = vpop.f32.mrf.mxu0
    %929 = vmatprep.mubr.f32.mxu0 0.0
    %930 = vmatmul.mubr.f32.gmra.mxu0 %v600
    %v931 = vpop.f32.mrf.mxu0
    %v932 = vadd.f32 0.0, %v931
    %v933 = vpop.f32.mrf.mxu0
    %934 = vmatprep.mubr.f32.mxu0 0.0
    %935 = vmatmul.mubr.f32.gmra.mxu0 %v603
    %v936 = vpop.f32.mrf.mxu0
    %v937 = vadd.f32 0.0, %v936
    %v938 = vpop.f32.mrf.mxu0
    %939 = vmatprep.mubr.f32.mxu0 0.0
    %940 = vmatmul.mubr.f32.gmra.mxu0 %v606
    %v941 = vpop.f32.mrf.mxu0
    %v942 = vadd.f32 0.0, %v941
    %v943 = vpop.f32.mrf.mxu0
    %944 = vmatprep.mubr.f32.mxu0 0.0
    %945 = vmatmul.mubr.f32.gmra.mxu0 %v609
    %v946 = vpop.f32.mrf.mxu0
    %v947 = vadd.f32 0.0, %v946
    %v948 = vpop.f32.mrf.mxu0
    %949 = vmatprep.mubr.f32.mxu0 0.0
    %950 = vmatmul.mubr.f32.gmra.mxu0 %v612
    %v951 = vpop.f32.mrf.mxu0
    %v952 = vadd.f32 0.0, %v951
    %v953 = vpop.f32.mrf.mxu0
    %954 = vmatprep.mubr.f32.mxu0 0.0
    %955 = vmatmul.mubr.f32.gmra.mxu0 %v615
    %v956 = vpop.f32.mrf.mxu0
    %v957 = vadd.f32 0.0, %v956
    %v958 = vpop.f32.mrf.mxu0
    %959 = vmatprep.mubr.f32.mxu0 0.0
    %960 = vmatmul.mubr.f32.gmra.mxu0 %v618
    %v961 = vpop.f32.mrf.mxu0
    %v962 = vadd.f32 0.0, %v961
    %v963 = vpop.f32.mrf.mxu0
    %964 = vmatprep.mubr.f32.mxu0 0.0
    %965 = vmatmul.mubr.f32.gmra.mxu0 %v621
    %v966 = vpop.f32.mrf.mxu0
    %v967 = vadd.f32 0.0, %v966
    %v968 = vpop.f32.mrf.mxu0
    %969 = vmatprep.mubr.f32.mxu0 0.0
    %970 = vmatmul.mubr.f32.gmra.mxu0 %v624
    %v971 = vpop.f32.mrf.mxu0
    %v972 = vadd.f32 0.0, %v971
    %v973 = vpop.f32.mrf.mxu0
    %974 = vmatprep.mubr.f32.mxu0 0.0
    %975 = vmatmul.mubr.f32.gmra.mxu0 %v627
    %v976 = vpop.f32.mrf.mxu0
    %v977 = vadd.f32 0.0, %v976
    %v978 = vpop.f32.mrf.mxu0
    %979 = vmatprep.mubr.f32.mxu0 0.0
    %980 = vmatmul.mubr.f32.gmra.mxu0 %v630
    %v981 = vpop.f32.mrf.mxu0
    %v982 = vadd.f32 0.0, %v981
    %v983 = vpop.f32.mrf.mxu0
    %984 = vmatprep.mubr.f32.mxu0 0.0
    %985 = vmatmul.mubr.f32.gmra.mxu0 %v633
    %v986 = vpop.f32.mrf.mxu0
    %v987 = vadd.f32 0.0, %v986
    %v988 = vpop.f32.mrf.mxu0
    %989 = vmatprep.mubr.f32.mxu0 0.0
    %990 = vmatmul.mubr.f32.gmra.mxu0 %v636
    %v991 = vpop.f32.mrf.mxu0
    %v992 = vadd.f32 0.0, %v991
    %v993 = vpop.f32.mrf.mxu0
    %994 = vmatprep.mubr.f32.mxu0 0.0
    %995 = vmatmul.mubr.f32.gmra.mxu0 %v639
    %v996 = vpop.f32.mrf.mxu0
    %v997 = vadd.f32 0.0, %v996
    %v998 = vpop.f32.mrf.mxu0
    %999 = vmatprep.mubr.f32.mxu0 0.0
    %1000 = vmatmul.mubr.f32.gmra.mxu0 %v642
    %v1001 = vpop.f32.mrf.mxu0
    %v1002 = vadd.f32 0.0, %v1001
    %v1003 = vpop.f32.mrf.mxu0
    %1004 = vmatprep.mubr.f32.mxu0 0.0
    %1005 = vmatmul.mubr.f32.gmra.mxu0 %v645
    %v1006 = vpop.f32.mrf.mxu0
    %v1007 = vadd.f32 0.0, %v1006
    %v1008 = vpop.f32.mrf.mxu0
    %1009 = vmatprep.mubr.f32.mxu0 0.0
    %1010 = vmatmul.mubr.f32.gmra.mxu0 %v648
    %v1011 = vpop.f32.mrf.mxu0
    %v1012 = vadd.f32 0.0, %v1011
    %v1013 = vpop.f32.mrf.mxu0
    %1014 = vmatprep.mubr.f32.mxu0 0.0
    %1015 = vmatmul.mubr.f32.gmra.mxu0 %v651
    %v1016 = vpop.f32.mrf.mxu0
    %v1017 = vadd.f32 0.0, %v1016
    %v1018 = vpop.f32.mrf.mxu0
    %1019 = vmatprep.mubr.f32.mxu0 0.0
    %1020 = vmatmul.mubr.f32.gmra.mxu0 %v654
    %v1021 = vpop.f32.mrf.mxu0
    %v1022 = vadd.f32 0.0, %v1021
    %v1023 = vpop.f32.mrf.mxu0
    %1024 = vmatprep.mubr.f32.mxu0 0.0
    %1025 = vmatmul.mubr.f32.gmra.mxu0 %v657
    %v1026 = vpop.f32.mrf.mxu0
    %v1027 = vadd.f32 0.0, %v1026
    %v1028 = vpop.f32.mrf.mxu0
    %1029 = vmatprep.mubr.f32.mxu0 0.0
    %1030 = vmatmul.mubr.f32.gmra.mxu0 %v660
    %v1031 = vpop.f32.mrf.mxu0
    %v1032 = vadd.f32 0.0, %v1031
    %v1033 = vpop.f32.mrf.mxu0
    %1034 = vmatprep.mubr.f32.mxu0 0.0
    %1035 = vmatmul.mubr.f32.gmra.mxu0 %v663
    %v1036 = vpop.f32.mrf.mxu0
    %v1037 = vadd.f32 0.0, %v1036
    %v1038 = vpop.f32.mrf.mxu0
    %1039 = vmatprep.mubr.f32.mxu0 0.0
    %1040 = vmatmul.mubr.f32.gmra.mxu0 %v666
    %v1041 = vpop.f32.mrf.mxu0
    %v1042 = vadd.f32 0.0, %v1041
    %v1043 = vpop.f32.mrf.mxu0
    %1044 = vmatprep.mubr.f32.mxu0 0.0
    %1045 = vmatmul.mubr.f32.gmra.mxu0 %v669
    %v1046 = vpop.f32.mrf.mxu0
    %v1047 = vadd.f32 0.0, %v1046
    %v1048 = vpop.f32.mrf.mxu0
    %1049 = vmatprep.mubr.f32.mxu0 0.0
    %1050 = vmatmul.mubr.f32.gmra.mxu0 %v672
    %v1051 = vpop.f32.mrf.mxu0
    %v1052 = vadd.f32 0.0, %v1051
    %v1053 = vpop.f32.mrf.mxu0
    %1054 = vmatprep.mubr.f32.mxu0 0.0
    %1055 = vmatmul.mubr.f32.gmra.mxu0 %v675
    %v1056 = vpop.f32.mrf.mxu0
    %v1057 = vadd.f32 0.0, %v1056
    %v1058 = vpop.f32.mrf.mxu0
    %1059 = vmatprep.mubr.f32.mxu0 0.0
    %1060 = vmatmul.mubr.f32.gmra.mxu0 %v678
    %v1061 = vpop.f32.mrf.mxu0
    %v1062 = vadd.f32 0.0, %v1061
    %v1063 = vpop.f32.mrf.mxu0
    %1064 = vdwg.mxu0
    %v1065 = vld [vmem:[%s3] sm:$0xff]
    %v1066 = vld [vmem:[%s3 + $0x8] sm:$0xff]
    %v1067 = vld [vmem:[%s3 + $0x10] sm:$0xff]
    %v1068 = vld [vmem:[%s3 + $0x18] sm:$0xff]
    %v1069 = vld [vmem:[%s3 + $0x20] sm:$0xff]
    %v1070 = vld [vmem:[%s3 + $0x28] sm:$0xff]
    %v1071 = vld [vmem:[%s3 + $0x30] sm:$0xff]
    %v1072 = vld [vmem:[%s3 + $0x38] sm:$0xff]
    %v1073 = vld [vmem:[%s3 + $0x40] sm:$0xff]
    %v1074 = vld [vmem:[%s3 + $0x48] sm:$0xff]
    %v1075 = vld [vmem:[%s3 + $0x50] sm:$0xff]
    %v1076 = vld [vmem:[%s3 + $0x58] sm:$0xff]
    %v1077 = vld [vmem:[%s3 + $0x60] sm:$0xff]
    %v1078 = vld [vmem:[%s3 + $0x68] sm:$0xff]
    %v1079 = vld [vmem:[%s3 + $0x70] sm:$0xff]
    %v1080 = vld [vmem:[%s3 + $0x78] sm:$0xff]
    %v1081 = vld [vmem:[%s3 + $0x80] sm:$0xff]
    %v1082 = vld [vmem:[%s3 + $0x88] sm:$0xff]
    %v1083 = vld [vmem:[%s3 + $0x90] sm:$0xff]
    %v1084 = vld [vmem:[%s3 + $0x98] sm:$0xff]
    %v1085 = vld [vmem:[%s3 + $0xa0] sm:$0xff]
    %v1086 = vld [vmem:[%s3 + $0xa8] sm:$0xff]
    %v1087 = vld [vmem:[%s3 + $0xb0] sm:$0xff]
    %v1088 = vld [vmem:[%s3 + $0xb8] sm:$0xff]
    %v1089 = vld [vmem:[%s3 + $0xc0] sm:$0xff]
    %v1090 = vld [vmem:[%s3 + $0xc8] sm:$0xff]
    %v1091 = vld [vmem:[%s3 + $0xd0] sm:$0xff]
    %v1092 = vld [vmem:[%s3 + $0xd8] sm:$0xff]
    %v1093 = vld [vmem:[%s3 + $0xe0] sm:$0xff]
    %v1094 = vld [vmem:[%s3 + $0xe8] sm:$0xff]
    %v1095 = vld [vmem:[%s3 + $0xf0] sm:$0xff]
    %v1096 = vld [vmem:[%s3 + $0xf8] sm:$0xff]
    %v1097 = vld [vmem:[%s3 + $0x100] sm:$0xff]
    %v1098 = vld [vmem:[%s3 + $0x108] sm:$0xff]
    %v1099 = vld [vmem:[%s3 + $0x110] sm:$0xff]
    %v1100 = vld [vmem:[%s3 + $0x118] sm:$0xff]
    %v1101 = vld [vmem:[%s3 + $0x120] sm:$0xff]
    %v1102 = vld [vmem:[%s3 + $0x128] sm:$0xff]
    %v1103 = vld [vmem:[%s3 + $0x130] sm:$0xff]
    %v1104 = vld [vmem:[%s3 + $0x138] sm:$0xff]
    %v1105 = vld [vmem:[%s3 + $0x140] sm:$0xff]
    %v1106 = vld [vmem:[%s3 + $0x148] sm:$0xff]
    %v1107 = vld [vmem:[%s3 + $0x150] sm:$0xff]
    %v1108 = vld [vmem:[%s3 + $0x158] sm:$0xff]
    %v1109 = vld [vmem:[%s3 + $0x160] sm:$0xff]
    %v1110 = vld [vmem:[%s3 + $0x168] sm:$0xff]
    %v1111 = vld [vmem:[%s3 + $0x170] sm:$0xff]
    %v1112 = vld [vmem:[%s3 + $0x178] sm:$0xff]
    %v1113 = vld [vmem:[%s3 + $0x180] sm:$0xff]
    %v1114 = vld [vmem:[%s3 + $0x188] sm:$0xff]
    %v1115 = vld [vmem:[%s3 + $0x190] sm:$0xff]
    %v1116 = vld [vmem:[%s3 + $0x198] sm:$0xff]
    %v1117 = vld [vmem:[%s3 + $0x1a0] sm:$0xff]
    %v1118 = vld [vmem:[%s3 + $0x1a8] sm:$0xff]
    %v1119 = vld [vmem:[%s3 + $0x1b0] sm:$0xff]
    %v1120 = vld [vmem:[%s3 + $0x1b8] sm:$0xff]
    %v1121 = vld [vmem:[%s3 + $0x1c0] sm:$0xff]
    %v1122 = vld [vmem:[%s3 + $0x1c8] sm:$0xff]
    %v1123 = vld [vmem:[%s3 + $0x1d0] sm:$0xff]
    %v1124 = vld [vmem:[%s3 + $0x1d8] sm:$0xff]
    %v1125 = vld [vmem:[%s3 + $0x1e0] sm:$0xff]
    %v1126 = vld [vmem:[%s3 + $0x1e8] sm:$0xff]
    %v1127 = vld [vmem:[%s3 + $0x1f0] sm:$0xff]
    %v1128 = vld [vmem:[%s3 + $0x1f8] sm:$0xff]
    %1130 = vset.pattern.permute.xlu0 0
    %1131 = vperm.xlu0 %1130, %v747
    %v1132 = vpop.permute.xlu0 %1131
    %1135 = vset.pattern.permute.xlu0 0
    %1136 = vperm.xlu0 %1135, %v752
    %v1137 = vpop.permute.xlu0 %1136
    %1140 = vset.pattern.permute.xlu0 0
    %1141 = vperm.xlu0 %1140, %v757
    %v1142 = vpop.permute.xlu0 %1141
    %1145 = vset.pattern.permute.xlu0 0
    %1146 = vperm.xlu0 %1145, %v762
    %v1147 = vpop.permute.xlu0 %1146
    %1150 = vset.pattern.permute.xlu0 0
    %1151 = vperm.xlu0 %1150, %v767
    %v1152 = vpop.permute.xlu0 %1151
    %1155 = vset.pattern.permute.xlu0 0
    %1156 = vperm.xlu0 %1155, %v772
    %v1157 = vpop.permute.xlu0 %1156
    %1160 = vset.pattern.permute.xlu0 0
    %1161 = vperm.xlu0 %1160, %v777
    %v1162 = vpop.permute.xlu0 %1161
    %1165 = vset.pattern.permute.xlu0 0
    %1166 = vperm.xlu0 %1165, %v782
    %v1167 = vpop.permute.xlu0 %1166
    %1170 = vset.pattern.permute.xlu0 0
    %1171 = vperm.xlu0 %1170, %v787
    %v1172 = vpop.permute.xlu0 %1171
    %1175 = vset.pattern.permute.xlu0 0
    %1176 = vperm.xlu0 %1175, %v792
    %v1177 = vpop.permute.xlu0 %1176
    %1180 = vset.pattern.permute.xlu0 0
    %1181 = vperm.xlu0 %1180, %v797
    %v1182 = vpop.permute.xlu0 %1181
    %1185 = vset.pattern.permute.xlu0 0
    %1186 = vperm.xlu0 %1185, %v802
    %v1187 = vpop.permute.xlu0 %1186
    %1190 = vset.pattern.permute.xlu0 0
    %1191 = vperm.xlu0 %1190, %v807
    %v1192 = vpop.permute.xlu0 %1191
    %1195 = vset.pattern.permute.xlu0 0
    %1196 = vperm.xlu0 %1195, %v812
    %v1197 = vpop.permute.xlu0 %1196
    %1200 = vset.pattern.permute.xlu0 0
    %1201 = vperm.xlu0 %1200, %v817
    %v1202 = vpop.permute.xlu0 %1201
    %1205 = vset.pattern.permute.xlu0 0
    %1206 = vperm.xlu0 %1205, %v822
    %v1207 = vpop.permute.xlu0 %1206
    %1210 = vset.pattern.permute.xlu0 0
    %1211 = vperm.xlu0 %1210, %v827
    %v1212 = vpop.permute.xlu0 %1211
    %1215 = vset.pattern.permute.xlu0 0
    %1216 = vperm.xlu0 %1215, %v832
    %v1217 = vpop.permute.xlu0 %1216
    %1220 = vset.pattern.permute.xlu0 0
    %1221 = vperm.xlu0 %1220, %v837
    %v1222 = vpop.permute.xlu0 %1221
    %1225 = vset.pattern.permute.xlu0 0
    %1226 = vperm.xlu0 %1225, %v842
    %v1227 = vpop.permute.xlu0 %1226
    %1230 = vset.pattern.permute.xlu0 0
    %1231 = vperm.xlu0 %1230, %v847
    %v1232 = vpop.permute.xlu0 %1231
    %1235 = vset.pattern.permute.xlu0 0
    %1236 = vperm.xlu0 %1235, %v852
    %v1237 = vpop.permute.xlu0 %1236
    %1240 = vset.pattern.permute.xlu0 0
    %1241 = vperm.xlu0 %1240, %v857
    %v1242 = vpop.permute.xlu0 %1241
    %1245 = vset.pattern.permute.xlu0 0
    %1246 = vperm.xlu0 %1245, %v862
    %v1247 = vpop.permute.xlu0 %1246
    %1250 = vset.pattern.permute.xlu0 0
    %1251 = vperm.xlu0 %1250, %v867
    %v1252 = vpop.permute.xlu0 %1251
    %1255 = vset.pattern.permute.xlu0 0
    %1256 = vperm.xlu0 %1255, %v872
    %v1257 = vpop.permute.xlu0 %1256
    %1260 = vset.pattern.permute.xlu0 0
    %1261 = vperm.xlu0 %1260, %v877
    %v1262 = vpop.permute.xlu0 %1261
    %1265 = vset.pattern.permute.xlu0 0
    %1266 = vperm.xlu0 %1265, %v882
    %v1267 = vpop.permute.xlu0 %1266
    %1270 = vset.pattern.permute.xlu0 0
    %1271 = vperm.xlu0 %1270, %v887
    %v1272 = vpop.permute.xlu0 %1271
    %1275 = vset.pattern.permute.xlu0 0
    %1276 = vperm.xlu0 %1275, %v892
    %v1277 = vpop.permute.xlu0 %1276
    %1280 = vset.pattern.permute.xlu0 0
    %1281 = vperm.xlu0 %1280, %v897
    %v1282 = vpop.permute.xlu0 %1281
    %1285 = vset.pattern.permute.xlu0 0
    %1286 = vperm.xlu0 %1285, %v902
    %v1287 = vpop.permute.xlu0 %1286
    %1290 = vset.pattern.permute.xlu0 0
    %1291 = vperm.xlu0 %1290, %v907
    %v1292 = vpop.permute.xlu0 %1291
    %1295 = vset.pattern.permute.xlu0 0
    %1296 = vperm.xlu0 %1295, %v912
    %v1297 = vpop.permute.xlu0 %1296
    %1300 = vset.pattern.permute.xlu0 0
    %1301 = vperm.xlu0 %1300, %v917
    %v1302 = vpop.permute.xlu0 %1301
    %1305 = vset.pattern.permute.xlu0 0
    %1306 = vperm.xlu0 %1305, %v922
    %v1307 = vpop.permute.xlu0 %1306
    %1310 = vset.pattern.permute.xlu0 0
    %1311 = vperm.xlu0 %1310, %v927
    %v1312 = vpop.permute.xlu0 %1311
    %1315 = vset.pattern.permute.xlu0 0
    %1316 = vperm.xlu0 %1315, %v932
    %v1317 = vpop.permute.xlu0 %1316
    %1320 = vset.pattern.permute.xlu0 0
    %1321 = vperm.xlu0 %1320, %v937
    %v1322 = vpop.permute.xlu0 %1321
    %1325 = vset.pattern.permute.xlu0 0
    %1326 = vperm.xlu0 %1325, %v942
    %v1327 = vpop.permute.xlu0 %1326
    %1330 = vset.pattern.permute.xlu0 0
    %1331 = vperm.xlu0 %1330, %v947
    %v1332 = vpop.permute.xlu0 %1331
    %1335 = vset.pattern.permute.xlu0 0
    %1336 = vperm.xlu0 %1335, %v952
    %v1337 = vpop.permute.xlu0 %1336
    %1340 = vset.pattern.permute.xlu0 0
    %1341 = vperm.xlu0 %1340, %v957
    %v1342 = vpop.permute.xlu0 %1341
    %1345 = vset.pattern.permute.xlu0 0
    %1346 = vperm.xlu0 %1345, %v962
    %v1347 = vpop.permute.xlu0 %1346
    %1350 = vset.pattern.permute.xlu0 0
    %1351 = vperm.xlu0 %1350, %v967
    %v1352 = vpop.permute.xlu0 %1351
    %1355 = vset.pattern.permute.xlu0 0
    %1356 = vperm.xlu0 %1355, %v972
    %v1357 = vpop.permute.xlu0 %1356
    %1360 = vset.pattern.permute.xlu0 0
    %1361 = vperm.xlu0 %1360, %v977
    %v1362 = vpop.permute.xlu0 %1361
    %1365 = vset.pattern.permute.xlu0 0
    %1366 = vperm.xlu0 %1365, %v982
    %v1367 = vpop.permute.xlu0 %1366
    %1370 = vset.pattern.permute.xlu0 0
    %1371 = vperm.xlu0 %1370, %v987
    %v1372 = vpop.permute.xlu0 %1371
    %1375 = vset.pattern.permute.xlu0 0
    %1376 = vperm.xlu0 %1375, %v992
    %v1377 = vpop.permute.xlu0 %1376
    %1380 = vset.pattern.permute.xlu0 0
    %1381 = vperm.xlu0 %1380, %v997
    %v1382 = vpop.permute.xlu0 %1381
    %1385 = vset.pattern.permute.xlu0 0
    %1386 = vperm.xlu0 %1385, %v1002
    %v1387 = vpop.permute.xlu0 %1386
    %1390 = vset.pattern.permute.xlu0 0
    %1391 = vperm.xlu0 %1390, %v1007
    %v1392 = vpop.permute.xlu0 %1391
    %1395 = vset.pattern.permute.xlu0 0
    %1396 = vperm.xlu0 %1395, %v1012
    %v1397 = vpop.permute.xlu0 %1396
    %1400 = vset.pattern.permute.xlu0 0
    %1401 = vperm.xlu0 %1400, %v1017
    %v1402 = vpop.permute.xlu0 %1401
    %1405 = vset.pattern.permute.xlu0 0
    %1406 = vperm.xlu0 %1405, %v1022
    %v1407 = vpop.permute.xlu0 %1406
    %1410 = vset.pattern.permute.xlu0 0
    %1411 = vperm.xlu0 %1410, %v1027
    %v1412 = vpop.permute.xlu0 %1411
    %1415 = vset.pattern.permute.xlu0 0
    %1416 = vperm.xlu0 %1415, %v1032
    %v1417 = vpop.permute.xlu0 %1416
    %1420 = vset.pattern.permute.xlu0 0
    %1421 = vperm.xlu0 %1420, %v1037
    %v1422 = vpop.permute.xlu0 %1421
    %1425 = vset.pattern.permute.xlu0 0
    %1426 = vperm.xlu0 %1425, %v1042
    %v1427 = vpop.permute.xlu0 %1426
    %1430 = vset.pattern.permute.xlu0 0
    %1431 = vperm.xlu0 %1430, %v1047
    %v1432 = vpop.permute.xlu0 %1431
    %1435 = vset.pattern.permute.xlu0 0
    %1436 = vperm.xlu0 %1435, %v1052
    %v1437 = vpop.permute.xlu0 %1436
    %1440 = vset.pattern.permute.xlu0 0
    %1441 = vperm.xlu0 %1440, %v1057
    %v1442 = vpop.permute.xlu0 %1441
    %1445 = vset.pattern.permute.xlu0 0
    %1446 = vperm.xlu0 %1445, %v1062
    %v1447 = vpop.permute.xlu0 %1446
    %v1449 = vmul.f32 %v1132, %v1065
    %v1450 = vmul.f32 %v1137, %v1066
    %v1451 = vmul.f32 %v1142, %v1067
    %v1452 = vmul.f32 %v1147, %v1068
    %v1453 = vmul.f32 %v1152, %v1069
    %v1454 = vmul.f32 %v1157, %v1070
    %v1455 = vmul.f32 %v1162, %v1071
    %v1456 = vmul.f32 %v1167, %v1072
    %v1457 = vmul.f32 %v1172, %v1073
    %v1458 = vmul.f32 %v1177, %v1074
    %v1459 = vmul.f32 %v1182, %v1075
    %v1460 = vmul.f32 %v1187, %v1076
    %v1461 = vmul.f32 %v1192, %v1077
    %v1462 = vmul.f32 %v1197, %v1078
    %v1463 = vmul.f32 %v1202, %v1079
    %v1464 = vmul.f32 %v1207, %v1080
    %v1465 = vmul.f32 %v1212, %v1081
    %v1466 = vmul.f32 %v1217, %v1082
    %v1467 = vmul.f32 %v1222, %v1083
    %v1468 = vmul.f32 %v1227, %v1084
    %v1469 = vmul.f32 %v1232, %v1085
    %v1470 = vmul.f32 %v1237, %v1086
    %v1471 = vmul.f32 %v1242, %v1087
    %v1472 = vmul.f32 %v1247, %v1088
    %v1473 = vmul.f32 %v1252, %v1089
    %v1474 = vmul.f32 %v1257, %v1090
    %v1475 = vmul.f32 %v1262, %v1091
    %v1476 = vmul.f32 %v1267, %v1092
    %v1477 = vmul.f32 %v1272, %v1093
    %v1478 = vmul.f32 %v1277, %v1094
    %v1479 = vmul.f32 %v1282, %v1095
    %v1480 = vmul.f32 %v1287, %v1096
    %v1481 = vmul.f32 %v1292, %v1097
    %v1482 = vmul.f32 %v1297, %v1098
    %v1483 = vmul.f32 %v1302, %v1099
    %v1484 = vmul.f32 %v1307, %v1100
    %v1485 = vmul.f32 %v1312, %v1101
    %v1486 = vmul.f32 %v1317, %v1102
    %v1487 = vmul.f32 %v1322, %v1103
    %v1488 = vmul.f32 %v1327, %v1104
    %v1489 = vmul.f32 %v1332, %v1105
    %v1490 = vmul.f32 %v1337, %v1106
    %v1491 = vmul.f32 %v1342, %v1107
    %v1492 = vmul.f32 %v1347, %v1108
    %v1493 = vmul.f32 %v1352, %v1109
    %v1494 = vmul.f32 %v1357, %v1110
    %v1495 = vmul.f32 %v1362, %v1111
    %v1496 = vmul.f32 %v1367, %v1112
    %v1497 = vmul.f32 %v1372, %v1113
    %v1498 = vmul.f32 %v1377, %v1114
    %v1499 = vmul.f32 %v1382, %v1115
    %v1500 = vmul.f32 %v1387, %v1116
    %v1501 = vmul.f32 %v1392, %v1117
    %v1502 = vmul.f32 %v1397, %v1118
    %v1503 = vmul.f32 %v1402, %v1119
    %v1504 = vmul.f32 %v1407, %v1120
    %v1505 = vmul.f32 %v1412, %v1121
    %v1506 = vmul.f32 %v1417, %v1122
    %v1507 = vmul.f32 %v1422, %v1123
    %v1508 = vmul.f32 %v1427, %v1124
    %v1509 = vmul.f32 %v1432, %v1125
    %v1510 = vmul.f32 %v1437, %v1126
    %v1511 = vmul.f32 %v1442, %v1127
    %v1512 = vmul.f32 %v1447, %v1128
    %1513 = vset.pattern.permute.xlu0 1
    %1514 = vperm.xlu0 %1513, %v747
    %v1515 = vpop.permute.xlu0 %1514
    %1517 = vset.pattern.permute.xlu0 1
    %1518 = vperm.xlu0 %1517, %v752
    %v1519 = vpop.permute.xlu0 %1518
    %1521 = vset.pattern.permute.xlu0 1
    %1522 = vperm.xlu0 %1521, %v757
    %v1523 = vpop.permute.xlu0 %1522
    %1525 = vset.pattern.permute.xlu0 1
    %1526 = vperm.xlu0 %1525, %v762
    %v1527 = vpop.permute.xlu0 %1526
    %1529 = vset.pattern.permute.xlu0 1
    %1530 = vperm.xlu0 %1529, %v767
    %v1531 = vpop.permute.xlu0 %1530
    %1533 = vset.pattern.permute.xlu0 1
    %1534 = vperm.xlu0 %1533, %v772
    %v1535 = vpop.permute.xlu0 %1534
    %1537 = vset.pattern.permute.xlu0 1
    %1538 = vperm.xlu0 %1537, %v777
    %v1539 = vpop.permute.xlu0 %1538
    %1541 = vset.pattern.permute.xlu0 1
    %1542 = vperm.xlu0 %1541, %v782
    %v1543 = vpop.permute.xlu0 %1542
    %1545 = vset.pattern.permute.xlu0 1
    %1546 = vperm.xlu0 %1545, %v787
    %v1547 = vpop.permute.xlu0 %1546
    %1549 = vset.pattern.permute.xlu0 1
    %1550 = vperm.xlu0 %1549, %v792
    %v1551 = vpop.permute.xlu0 %1550
    %1553 = vset.pattern.permute.xlu0 1
    %1554 = vperm.xlu0 %1553, %v797
    %v1555 = vpop.permute.xlu0 %1554
    %1557 = vset.pattern.permute.xlu0 1
    %1558 = vperm.xlu0 %1557, %v802
    %v1559 = vpop.permute.xlu0 %1558
    %1561 = vset.pattern.permute.xlu0 1
    %1562 = vperm.xlu0 %1561, %v807
    %v1563 = vpop.permute.xlu0 %1562
    %1565 = vset.pattern.permute.xlu0 1
    %1566 = vperm.xlu0 %1565, %v812
    %v1567 = vpop.permute.xlu0 %1566
    %1569 = vset.pattern.permute.xlu0 1
    %1570 = vperm.xlu0 %1569, %v817
    %v1571 = vpop.permute.xlu0 %1570
    %1573 = vset.pattern.permute.xlu0 1
    %1574 = vperm.xlu0 %1573, %v822
    %v1575 = vpop.permute.xlu0 %1574
    %1577 = vset.pattern.permute.xlu0 1
    %1578 = vperm.xlu0 %1577, %v827
    %v1579 = vpop.permute.xlu0 %1578
    %1581 = vset.pattern.permute.xlu0 1
    %1582 = vperm.xlu0 %1581, %v832
    %v1583 = vpop.permute.xlu0 %1582
    %1585 = vset.pattern.permute.xlu0 1
    %1586 = vperm.xlu0 %1585, %v837
    %v1587 = vpop.permute.xlu0 %1586
    %1589 = vset.pattern.permute.xlu0 1
    %1590 = vperm.xlu0 %1589, %v842
    %v1591 = vpop.permute.xlu0 %1590
    %1593 = vset.pattern.permute.xlu0 1
    %1594 = vperm.xlu0 %1593, %v847
    %v1595 = vpop.permute.xlu0 %1594
    %1597 = vset.pattern.permute.xlu0 1
    %1598 = vperm.xlu0 %1597, %v852
    %v1599 = vpop.permute.xlu0 %1598
    %1601 = vset.pattern.permute.xlu0 1
    %1602 = vperm.xlu0 %1601, %v857
    %v1603 = vpop.permute.xlu0 %1602
    %1605 = vset.pattern.permute.xlu0 1
    %1606 = vperm.xlu0 %1605, %v862
    %v1607 = vpop.permute.xlu0 %1606
    %1609 = vset.pattern.permute.xlu0 1
    %1610 = vperm.xlu0 %1609, %v867
    %v1611 = vpop.permute.xlu0 %1610
    %1613 = vset.pattern.permute.xlu0 1
    %1614 = vperm.xlu0 %1613, %v872
    %v1615 = vpop.permute.xlu0 %1614
    %1617 = vset.pattern.permute.xlu0 1
    %1618 = vperm.xlu0 %1617, %v877
    %v1619 = vpop.permute.xlu0 %1618
    %1621 = vset.pattern.permute.xlu0 1
    %1622 = vperm.xlu0 %1621, %v882
    %v1623 = vpop.permute.xlu0 %1622
    %1625 = vset.pattern.permute.xlu0 1
    %1626 = vperm.xlu0 %1625, %v887
    %v1627 = vpop.permute.xlu0 %1626
    %1629 = vset.pattern.permute.xlu0 1
    %1630 = vperm.xlu0 %1629, %v892
    %v1631 = vpop.permute.xlu0 %1630
    %1633 = vset.pattern.permute.xlu0 1
    %1634 = vperm.xlu0 %1633, %v897
    %v1635 = vpop.permute.xlu0 %1634
    %1637 = vset.pattern.permute.xlu0 1
    %1638 = vperm.xlu0 %1637, %v902
    %v1639 = vpop.permute.xlu0 %1638
    %1641 = vset.pattern.permute.xlu0 1
    %1642 = vperm.xlu0 %1641, %v907
    %v1643 = vpop.permute.xlu0 %1642
    %1645 = vset.pattern.permute.xlu0 1
    %1646 = vperm.xlu0 %1645, %v912
    %v1647 = vpop.permute.xlu0 %1646
    %1649 = vset.pattern.permute.xlu0 1
    %1650 = vperm.xlu0 %1649, %v917
    %v1651 = vpop.permute.xlu0 %1650
    %1653 = vset.pattern.permute.xlu0 1
    %1654 = vperm.xlu0 %1653, %v922
    %v1655 = vpop.permute.xlu0 %1654
    %1657 = vset.pattern.permute.xlu0 1
    %1658 = vperm.xlu0 %1657, %v927
    %v1659 = vpop.permute.xlu0 %1658
    %1661 = vset.pattern.permute.xlu0 1
    %1662 = vperm.xlu0 %1661, %v932
    %v1663 = vpop.permute.xlu0 %1662
    %1665 = vset.pattern.permute.xlu0 1
    %1666 = vperm.xlu0 %1665, %v937
    %v1667 = vpop.permute.xlu0 %1666
    %1669 = vset.pattern.permute.xlu0 1
    %1670 = vperm.xlu0 %1669, %v942
    %v1671 = vpop.permute.xlu0 %1670
    %1673 = vset.pattern.permute.xlu0 1
    %1674 = vperm.xlu0 %1673, %v947
    %v1675 = vpop.permute.xlu0 %1674
    %1677 = vset.pattern.permute.xlu0 1
    %1678 = vperm.xlu0 %1677, %v952
    %v1679 = vpop.permute.xlu0 %1678
    %1681 = vset.pattern.permute.xlu0 1
    %1682 = vperm.xlu0 %1681, %v957
    %v1683 = vpop.permute.xlu0 %1682
    %1685 = vset.pattern.permute.xlu0 1
    %1686 = vperm.xlu0 %1685, %v962
    %v1687 = vpop.permute.xlu0 %1686
    %1689 = vset.pattern.permute.xlu0 1
    %1690 = vperm.xlu0 %1689, %v967
    %v1691 = vpop.permute.xlu0 %1690
    %1693 = vset.pattern.permute.xlu0 1
    %1694 = vperm.xlu0 %1693, %v972
    %v1695 = vpop.permute.xlu0 %1694
    %1697 = vset.pattern.permute.xlu0 1
    %1698 = vperm.xlu0 %1697, %v977
    %v1699 = vpop.permute.xlu0 %1698
    %1701 = vset.pattern.permute.xlu0 1
    %1702 = vperm.xlu0 %1701, %v982
    %v1703 = vpop.permute.xlu0 %1702
    %1705 = vset.pattern.permute.xlu0 1
    %1706 = vperm.xlu0 %1705, %v987
    %v1707 = vpop.permute.xlu0 %1706
    %1709 = vset.pattern.permute.xlu0 1
    %1710 = vperm.xlu0 %1709, %v992
    %v1711 = vpop.permute.xlu0 %1710
    %1713 = vset.pattern.permute.xlu0 1
    %1714 = vperm.xlu0 %1713, %v997
    %v1715 = vpop.permute.xlu0 %1714
    %1717 = vset.pattern.permute.xlu0 1
    %1718 = vperm.xlu0 %1717, %v1002
    %v1719 = vpop.permute.xlu0 %1718
    %1721 = vset.pattern.permute.xlu0 1
    %1722 = vperm.xlu0 %1721, %v1007
    %v1723 = vpop.permute.xlu0 %1722
    %1725 = vset.pattern.permute.xlu0 1
    %1726 = vperm.xlu0 %1725, %v1012
    %v1727 = vpop.permute.xlu0 %1726
    %1729 = vset.pattern.permute.xlu0 1
    %1730 = vperm.xlu0 %1729, %v1017
    %v1731 = vpop.permute.xlu0 %1730
    %1733 = vset.pattern.permute.xlu0 1
    %1734 = vperm.xlu0 %1733, %v1022
    %v1735 = vpop.permute.xlu0 %1734
    %1737 = vset.pattern.permute.xlu0 1
    %1738 = vperm.xlu0 %1737, %v1027
    %v1739 = vpop.permute.xlu0 %1738
    %1741 = vset.pattern.permute.xlu0 1
    %1742 = vperm.xlu0 %1741, %v1032
    %v1743 = vpop.permute.xlu0 %1742
    %1745 = vset.pattern.permute.xlu0 1
    %1746 = vperm.xlu0 %1745, %v1037
    %v1747 = vpop.permute.xlu0 %1746
    %1749 = vset.pattern.permute.xlu0 1
    %1750 = vperm.xlu0 %1749, %v1042
    %v1751 = vpop.permute.xlu0 %1750
    %1753 = vset.pattern.permute.xlu0 1
    %1754 = vperm.xlu0 %1753, %v1047
    %v1755 = vpop.permute.xlu0 %1754
    %1757 = vset.pattern.permute.xlu0 1
    %1758 = vperm.xlu0 %1757, %v1052
    %v1759 = vpop.permute.xlu0 %1758
    %1761 = vset.pattern.permute.xlu0 1
    %1762 = vperm.xlu0 %1761, %v1057
    %v1763 = vpop.permute.xlu0 %1762
    %1765 = vset.pattern.permute.xlu0 1
    %1766 = vperm.xlu0 %1765, %v1062
    %v1767 = vpop.permute.xlu0 %1766
    %v1769 = vmul.f32 %v1515, %v1065
    %v1770 = vmul.f32 %v1519, %v1066
    %v1771 = vmul.f32 %v1523, %v1067
    %v1772 = vmul.f32 %v1527, %v1068
    %v1773 = vmul.f32 %v1531, %v1069
    %v1774 = vmul.f32 %v1535, %v1070
    %v1775 = vmul.f32 %v1539, %v1071
    %v1776 = vmul.f32 %v1543, %v1072
    %v1777 = vmul.f32 %v1547, %v1073
    %v1778 = vmul.f32 %v1551, %v1074
    %v1779 = vmul.f32 %v1555, %v1075
    %v1780 = vmul.f32 %v1559, %v1076
    %v1781 = vmul.f32 %v1563, %v1077
    %v1782 = vmul.f32 %v1567, %v1078
    %v1783 = vmul.f32 %v1571, %v1079
    %v1784 = vmul.f32 %v1575, %v1080
    %v1785 = vmul.f32 %v1579, %v1081
    %v1786 = vmul.f32 %v1583, %v1082
    %v1787 = vmul.f32 %v1587, %v1083
    %v1788 = vmul.f32 %v1591, %v1084
    %v1789 = vmul.f32 %v1595, %v1085
    %v1790 = vmul.f32 %v1599, %v1086
    %v1791 = vmul.f32 %v1603, %v1087
    %v1792 = vmul.f32 %v1607, %v1088
    %v1793 = vmul.f32 %v1611, %v1089
    %v1794 = vmul.f32 %v1615, %v1090
    %v1795 = vmul.f32 %v1619, %v1091
    %v1796 = vmul.f32 %v1623, %v1092
    %v1797 = vmul.f32 %v1627, %v1093
    %v1798 = vmul.f32 %v1631, %v1094
    %v1799 = vmul.f32 %v1635, %v1095
    %v1800 = vmul.f32 %v1639, %v1096
    %v1801 = vmul.f32 %v1643, %v1097
    %v1802 = vmul.f32 %v1647, %v1098
    %v1803 = vmul.f32 %v1651, %v1099
    %v1804 = vmul.f32 %v1655, %v1100
    %v1805 = vmul.f32 %v1659, %v1101
    %v1806 = vmul.f32 %v1663, %v1102
    %v1807 = vmul.f32 %v1667, %v1103
    %v1808 = vmul.f32 %v1671, %v1104
    %v1809 = vmul.f32 %v1675, %v1105
    %v1810 = vmul.f32 %v1679, %v1106
    %v1811 = vmul.f32 %v1683, %v1107
    %v1812 = vmul.f32 %v1687, %v1108
    %v1813 = vmul.f32 %v1691, %v1109
    %v1814 = vmul.f32 %v1695, %v1110
    %v1815 = vmul.f32 %v1699, %v1111
    %v1816 = vmul.f32 %v1703, %v1112
    %v1817 = vmul.f32 %v1707, %v1113
    %v1818 = vmul.f32 %v1711, %v1114
    %v1819 = vmul.f32 %v1715, %v1115
    %v1820 = vmul.f32 %v1719, %v1116
    %v1821 = vmul.f32 %v1723, %v1117
    %v1822 = vmul.f32 %v1727, %v1118
    %v1823 = vmul.f32 %v1731, %v1119
    %v1824 = vmul.f32 %v1735, %v1120
    %v1825 = vmul.f32 %v1739, %v1121
    %v1826 = vmul.f32 %v1743, %v1122
    %v1827 = vmul.f32 %v1747, %v1123
    %v1828 = vmul.f32 %v1751, %v1124
    %v1829 = vmul.f32 %v1755, %v1125
    %v1830 = vmul.f32 %v1759, %v1126
    %v1831 = vmul.f32 %v1763, %v1127
    %v1832 = vmul.f32 %v1767, %v1128
    %1833 = vset.pattern.permute.xlu0 2
    %1834 = vperm.xlu0 %1833, %v747
    %v1835 = vpop.permute.xlu0 %1834
    %1837 = vset.pattern.permute.xlu0 2
    %1838 = vperm.xlu0 %1837, %v752
    %v1839 = vpop.permute.xlu0 %1838
    %1841 = vset.pattern.permute.xlu0 2
    %1842 = vperm.xlu0 %1841, %v757
    %v1843 = vpop.permute.xlu0 %1842
    %1845 = vset.pattern.permute.xlu0 2
    %1846 = vperm.xlu0 %1845, %v762
    %v1847 = vpop.permute.xlu0 %1846
    %1849 = vset.pattern.permute.xlu0 2
    %1850 = vperm.xlu0 %1849, %v767
    %v1851 = vpop.permute.xlu0 %1850
    %1853 = vset.pattern.permute.xlu0 2
    %1854 = vperm.xlu0 %1853, %v772
    %v1855 = vpop.permute.xlu0 %1854
    %1857 = vset.pattern.permute.xlu0 2
    %1858 = vperm.xlu0 %1857, %v777
    %v1859 = vpop.permute.xlu0 %1858
    %1861 = vset.pattern.permute.xlu0 2
    %1862 = vperm.xlu0 %1861, %v782
    %v1863 = vpop.permute.xlu0 %1862
    %1865 = vset.pattern.permute.xlu0 2
    %1866 = vperm.xlu0 %1865, %v787
    %v1867 = vpop.permute.xlu0 %1866
    %1869 = vset.pattern.permute.xlu0 2
    %1870 = vperm.xlu0 %1869, %v792
    %v1871 = vpop.permute.xlu0 %1870
    %1873 = vset.pattern.permute.xlu0 2
    %1874 = vperm.xlu0 %1873, %v797
    %v1875 = vpop.permute.xlu0 %1874
    %1877 = vset.pattern.permute.xlu0 2
    %1878 = vperm.xlu0 %1877, %v802
    %v1879 = vpop.permute.xlu0 %1878
    %1881 = vset.pattern.permute.xlu0 2
    %1882 = vperm.xlu0 %1881, %v807
    %v1883 = vpop.permute.xlu0 %1882
    %1885 = vset.pattern.permute.xlu0 2
    %1886 = vperm.xlu0 %1885, %v812
    %v1887 = vpop.permute.xlu0 %1886
    %1889 = vset.pattern.permute.xlu0 2
    %1890 = vperm.xlu0 %1889, %v817
    %v1891 = vpop.permute.xlu0 %1890
    %1893 = vset.pattern.permute.xlu0 2
    %1894 = vperm.xlu0 %1893, %v822
    %v1895 = vpop.permute.xlu0 %1894
    %1897 = vset.pattern.permute.xlu0 2
    %1898 = vperm.xlu0 %1897, %v827
    %v1899 = vpop.permute.xlu0 %1898
    %1901 = vset.pattern.permute.xlu0 2
    %1902 = vperm.xlu0 %1901, %v832
    %v1903 = vpop.permute.xlu0 %1902
    %1905 = vset.pattern.permute.xlu0 2
    %1906 = vperm.xlu0 %1905, %v837
    %v1907 = vpop.permute.xlu0 %1906
    %1909 = vset.pattern.permute.xlu0 2
    %1910 = vperm.xlu0 %1909, %v842
    %v1911 = vpop.permute.xlu0 %1910
    %1913 = vset.pattern.permute.xlu0 2
    %1914 = vperm.xlu0 %1913, %v847
    %v1915 = vpop.permute.xlu0 %1914
    %1917 = vset.pattern.permute.xlu0 2
    %1918 = vperm.xlu0 %1917, %v852
    %v1919 = vpop.permute.xlu0 %1918
    %1921 = vset.pattern.permute.xlu0 2
    %1922 = vperm.xlu0 %1921, %v857
    %v1923 = vpop.permute.xlu0 %1922
    %1925 = vset.pattern.permute.xlu0 2
    %1926 = vperm.xlu0 %1925, %v862
    %v1927 = vpop.permute.xlu0 %1926
    %1929 = vset.pattern.permute.xlu0 2
    %1930 = vperm.xlu0 %1929, %v867
    %v1931 = vpop.permute.xlu0 %1930
    %1933 = vset.pattern.permute.xlu0 2
    %1934 = vperm.xlu0 %1933, %v872
    %v1935 = vpop.permute.xlu0 %1934
    %1937 = vset.pattern.permute.xlu0 2
    %1938 = vperm.xlu0 %1937, %v877
    %v1939 = vpop.permute.xlu0 %1938
    %1941 = vset.pattern.permute.xlu0 2
    %1942 = vperm.xlu0 %1941, %v882
    %v1943 = vpop.permute.xlu0 %1942
    %1945 = vset.pattern.permute.xlu0 2
    %1946 = vperm.xlu0 %1945, %v887
    %v1947 = vpop.permute.xlu0 %1946
    %1949 = vset.pattern.permute.xlu0 2
    %1950 = vperm.xlu0 %1949, %v892
    %v1951 = vpop.permute.xlu0 %1950
    %1953 = vset.pattern.permute.xlu0 2
    %1954 = vperm.xlu0 %1953, %v897
    %v1955 = vpop.permute.xlu0 %1954
    %1957 = vset.pattern.permute.xlu0 2
    %1958 = vperm.xlu0 %1957, %v902
    %v1959 = vpop.permute.xlu0 %1958
    %1961 = vset.pattern.permute.xlu0 2
    %1962 = vperm.xlu0 %1961, %v907
    %v1963 = vpop.permute.xlu0 %1962
    %1965 = vset.pattern.permute.xlu0 2
    %1966 = vperm.xlu0 %1965, %v912
    %v1967 = vpop.permute.xlu0 %1966
    %1969 = vset.pattern.permute.xlu0 2
    %1970 = vperm.xlu0 %1969, %v917
    %v1971 = vpop.permute.xlu0 %1970
    %1973 = vset.pattern.permute.xlu0 2
    %1974 = vperm.xlu0 %1973, %v922
    %v1975 = vpop.permute.xlu0 %1974
    %1977 = vset.pattern.permute.xlu0 2
    %1978 = vperm.xlu0 %1977, %v927
    %v1979 = vpop.permute.xlu0 %1978
    %1981 = vset.pattern.permute.xlu0 2
    %1982 = vperm.xlu0 %1981, %v932
    %v1983 = vpop.permute.xlu0 %1982
    %1985 = vset.pattern.permute.xlu0 2
    %1986 = vperm.xlu0 %1985, %v937
    %v1987 = vpop.permute.xlu0 %1986
    %1989 = vset.pattern.permute.xlu0 2
    %1990 = vperm.xlu0 %1989, %v942
    %v1991 = vpop.permute.xlu0 %1990
    %1993 = vset.pattern.permute.xlu0 2
    %1994 = vperm.xlu0 %1993, %v947
    %v1995 = vpop.permute.xlu0 %1994
    %1997 = vset.pattern.permute.xlu0 2
    %1998 = vperm.xlu0 %1997, %v952
    %v1999 = vpop.permute.xlu0 %1998
    %2001 = vset.pattern.permute.xlu0 2
    %2002 = vperm.xlu0 %2001, %v957
    %v2003 = vpop.permute.xlu0 %2002
    %2005 = vset.pattern.permute.xlu0 2
    %2006 = vperm.xlu0 %2005, %v962
    %v2007 = vpop.permute.xlu0 %2006
    %2009 = vset.pattern.permute.xlu0 2
    %2010 = vperm.xlu0 %2009, %v967
    %v2011 = vpop.permute.xlu0 %2010
    %2013 = vset.pattern.permute.xlu0 2
    %2014 = vperm.xlu0 %2013, %v972
    %v2015 = vpop.permute.xlu0 %2014
    %2017 = vset.pattern.permute.xlu0 2
    %2018 = vperm.xlu0 %2017, %v977
    %v2019 = vpop.permute.xlu0 %2018
    %2021 = vset.pattern.permute.xlu0 2
    %2022 = vperm.xlu0 %2021, %v982
    %v2023 = vpop.permute.xlu0 %2022
    %2025 = vset.pattern.permute.xlu0 2
    %2026 = vperm.xlu0 %2025, %v987
    %v2027 = vpop.permute.xlu0 %2026
    %2029 = vset.pattern.permute.xlu0 2
    %2030 = vperm.xlu0 %2029, %v992
    %v2031 = vpop.permute.xlu0 %2030
    %2033 = vset.pattern.permute.xlu0 2
    %2034 = vperm.xlu0 %2033, %v997
    %v2035 = vpop.permute.xlu0 %2034
    %2037 = vset.pattern.permute.xlu0 2
    %2038 = vperm.xlu0 %2037, %v1002
    %v2039 = vpop.permute.xlu0 %2038
    %2041 = vset.pattern.permute.xlu0 2
    %2042 = vperm.xlu0 %2041, %v1007
    %v2043 = vpop.permute.xlu0 %2042
    %2045 = vset.pattern.permute.xlu0 2
    %2046 = vperm.xlu0 %2045, %v1012
    %v2047 = vpop.permute.xlu0 %2046
    %2049 = vset.pattern.permute.xlu0 2
    %2050 = vperm.xlu0 %2049, %v1017
    %v2051 = vpop.permute.xlu0 %2050
    %2053 = vset.pattern.permute.xlu0 2
    %2054 = vperm.xlu0 %2053, %v1022
    %v2055 = vpop.permute.xlu0 %2054
    %2057 = vset.pattern.permute.xlu0 2
    %2058 = vperm.xlu0 %2057, %v1027
    %v2059 = vpop.permute.xlu0 %2058
    %2061 = vset.pattern.permute.xlu0 2
    %2062 = vperm.xlu0 %2061, %v1032
    %v2063 = vpop.permute.xlu0 %2062
    %2065 = vset.pattern.permute.xlu0 2
    %2066 = vperm.xlu0 %2065, %v1037
    %v2067 = vpop.permute.xlu0 %2066
    %2069 = vset.pattern.permute.xlu0 2
    %2070 = vperm.xlu0 %2069, %v1042
    %v2071 = vpop.permute.xlu0 %2070
    %2073 = vset.pattern.permute.xlu0 2
    %2074 = vperm.xlu0 %2073, %v1047
    %v2075 = vpop.permute.xlu0 %2074
    %2077 = vset.pattern.permute.xlu0 2
    %2078 = vperm.xlu0 %2077, %v1052
    %v2079 = vpop.permute.xlu0 %2078
    %2081 = vset.pattern.permute.xlu0 2
    %2082 = vperm.xlu0 %2081, %v1057
    %v2083 = vpop.permute.xlu0 %2082
    %2085 = vset.pattern.permute.xlu0 2
    %2086 = vperm.xlu0 %2085, %v1062
    %v2087 = vpop.permute.xlu0 %2086
    %v2089 = vmul.f32 %v1835, %v1065
    %v2090 = vmul.f32 %v1839, %v1066
    %v2091 = vmul.f32 %v1843, %v1067
    %v2092 = vmul.f32 %v1847, %v1068
    %v2093 = vmul.f32 %v1851, %v1069
    %v2094 = vmul.f32 %v1855, %v1070
    %v2095 = vmul.f32 %v1859, %v1071
    %v2096 = vmul.f32 %v1863, %v1072
    %v2097 = vmul.f32 %v1867, %v1073
    %v2098 = vmul.f32 %v1871, %v1074
    %v2099 = vmul.f32 %v1875, %v1075
    %v2100 = vmul.f32 %v1879, %v1076
    %v2101 = vmul.f32 %v1883, %v1077
    %v2102 = vmul.f32 %v1887, %v1078
    %v2103 = vmul.f32 %v1891, %v1079
    %v2104 = vmul.f32 %v1895, %v1080
    %v2105 = vmul.f32 %v1899, %v1081
    %v2106 = vmul.f32 %v1903, %v1082
    %v2107 = vmul.f32 %v1907, %v1083
    %v2108 = vmul.f32 %v1911, %v1084
    %v2109 = vmul.f32 %v1915, %v1085
    %v2110 = vmul.f32 %v1919, %v1086
    %v2111 = vmul.f32 %v1923, %v1087
    %v2112 = vmul.f32 %v1927, %v1088
    %v2113 = vmul.f32 %v1931, %v1089
    %v2114 = vmul.f32 %v1935, %v1090
    %v2115 = vmul.f32 %v1939, %v1091
    %v2116 = vmul.f32 %v1943, %v1092
    %v2117 = vmul.f32 %v1947, %v1093
    %v2118 = vmul.f32 %v1951, %v1094
    %v2119 = vmul.f32 %v1955, %v1095
    %v2120 = vmul.f32 %v1959, %v1096
    %v2121 = vmul.f32 %v1963, %v1097
    %v2122 = vmul.f32 %v1967, %v1098
    %v2123 = vmul.f32 %v1971, %v1099
    %v2124 = vmul.f32 %v1975, %v1100
    %v2125 = vmul.f32 %v1979, %v1101
    %v2126 = vmul.f32 %v1983, %v1102
    %v2127 = vmul.f32 %v1987, %v1103
    %v2128 = vmul.f32 %v1991, %v1104
    %v2129 = vmul.f32 %v1995, %v1105
    %v2130 = vmul.f32 %v1999, %v1106
    %v2131 = vmul.f32 %v2003, %v1107
    %v2132 = vmul.f32 %v2007, %v1108
    %v2133 = vmul.f32 %v2011, %v1109
    %v2134 = vmul.f32 %v2015, %v1110
    %v2135 = vmul.f32 %v2019, %v1111
    %v2136 = vmul.f32 %v2023, %v1112
    %v2137 = vmul.f32 %v2027, %v1113
    %v2138 = vmul.f32 %v2031, %v1114
    %v2139 = vmul.f32 %v2035, %v1115
    %v2140 = vmul.f32 %v2039, %v1116
    %v2141 = vmul.f32 %v2043, %v1117
    %v2142 = vmul.f32 %v2047, %v1118
    %v2143 = vmul.f32 %v2051, %v1119
    %v2144 = vmul.f32 %v2055, %v1120
    %v2145 = vmul.f32 %v2059, %v1121
    %v2146 = vmul.f32 %v2063, %v1122
    %v2147 = vmul.f32 %v2067, %v1123
    %v2148 = vmul.f32 %v2071, %v1124
    %v2149 = vmul.f32 %v2075, %v1125
    %v2150 = vmul.f32 %v2079, %v1126
    %v2151 = vmul.f32 %v2083, %v1127
    %v2152 = vmul.f32 %v2087, %v1128
    %2153 = vset.pattern.permute.xlu0 3
    %2154 = vperm.xlu0 %2153, %v747
    %v2155 = vpop.permute.xlu0 %2154
    %2157 = vset.pattern.permute.xlu0 3
    %2158 = vperm.xlu0 %2157, %v752
    %v2159 = vpop.permute.xlu0 %2158
    %2161 = vset.pattern.permute.xlu0 3
    %2162 = vperm.xlu0 %2161, %v757
    %v2163 = vpop.permute.xlu0 %2162
    %2165 = vset.pattern.permute.xlu0 3
    %2166 = vperm.xlu0 %2165, %v762
    %v2167 = vpop.permute.xlu0 %2166
    %2169 = vset.pattern.permute.xlu0 3
    %2170 = vperm.xlu0 %2169, %v767
    %v2171 = vpop.permute.xlu0 %2170
    %2173 = vset.pattern.permute.xlu0 3
    %2174 = vperm.xlu0 %2173, %v772
    %v2175 = vpop.permute.xlu0 %2174
    %2177 = vset.pattern.permute.xlu0 3
    %2178 = vperm.xlu0 %2177, %v777
    %v2179 = vpop.permute.xlu0 %2178
    %2181 = vset.pattern.permute.xlu0 3
    %2182 = vperm.xlu0 %2181, %v782
    %v2183 = vpop.permute.xlu0 %2182
    %2185 = vset.pattern.permute.xlu0 3
    %2186 = vperm.xlu0 %2185, %v787
    %v2187 = vpop.permute.xlu0 %2186
    %2189 = vset.pattern.permute.xlu0 3
    %2190 = vperm.xlu0 %2189, %v792
    %v2191 = vpop.permute.xlu0 %2190
    %2193 = vset.pattern.permute.xlu0 3
    %2194 = vperm.xlu0 %2193, %v797
    %v2195 = vpop.permute.xlu0 %2194
    %2197 = vset.pattern.permute.xlu0 3
    %2198 = vperm.xlu0 %2197, %v802
    %v2199 = vpop.permute.xlu0 %2198
    %2201 = vset.pattern.permute.xlu0 3
    %2202 = vperm.xlu0 %2201, %v807
    %v2203 = vpop.permute.xlu0 %2202
    %2205 = vset.pattern.permute.xlu0 3
    %2206 = vperm.xlu0 %2205, %v812
    %v2207 = vpop.permute.xlu0 %2206
    %2209 = vset.pattern.permute.xlu0 3
    %2210 = vperm.xlu0 %2209, %v817
    %v2211 = vpop.permute.xlu0 %2210
    %2213 = vset.pattern.permute.xlu0 3
    %2214 = vperm.xlu0 %2213, %v822
    %v2215 = vpop.permute.xlu0 %2214
    %2217 = vset.pattern.permute.xlu0 3
    %2218 = vperm.xlu0 %2217, %v827
    %v2219 = vpop.permute.xlu0 %2218
    %2221 = vset.pattern.permute.xlu0 3
    %2222 = vperm.xlu0 %2221, %v832
    %v2223 = vpop.permute.xlu0 %2222
    %2225 = vset.pattern.permute.xlu0 3
    %2226 = vperm.xlu0 %2225, %v837
    %v2227 = vpop.permute.xlu0 %2226
    %2229 = vset.pattern.permute.xlu0 3
    %2230 = vperm.xlu0 %2229, %v842
    %v2231 = vpop.permute.xlu0 %2230
    %2233 = vset.pattern.permute.xlu0 3
    %2234 = vperm.xlu0 %2233, %v847
    %v2235 = vpop.permute.xlu0 %2234
    %2237 = vset.pattern.permute.xlu0 3
    %2238 = vperm.xlu0 %2237, %v852
    %v2239 = vpop.permute.xlu0 %2238
    %2241 = vset.pattern.permute.xlu0 3
    %2242 = vperm.xlu0 %2241, %v857
    %v2243 = vpop.permute.xlu0 %2242
    %2245 = vset.pattern.permute.xlu0 3
    %2246 = vperm.xlu0 %2245, %v862
    %v2247 = vpop.permute.xlu0 %2246
    %2249 = vset.pattern.permute.xlu0 3
    %2250 = vperm.xlu0 %2249, %v867
    %v2251 = vpop.permute.xlu0 %2250
    %2253 = vset.pattern.permute.xlu0 3
    %2254 = vperm.xlu0 %2253, %v872
    %v2255 = vpop.permute.xlu0 %2254
    %2257 = vset.pattern.permute.xlu0 3
    %2258 = vperm.xlu0 %2257, %v877
    %v2259 = vpop.permute.xlu0 %2258
    %2261 = vset.pattern.permute.xlu0 3
    %2262 = vperm.xlu0 %2261, %v882
    %v2263 = vpop.permute.xlu0 %2262
    %2265 = vset.pattern.permute.xlu0 3
    %2266 = vperm.xlu0 %2265, %v887
    %v2267 = vpop.permute.xlu0 %2266
    %2269 = vset.pattern.permute.xlu0 3
    %2270 = vperm.xlu0 %2269, %v892
    %v2271 = vpop.permute.xlu0 %2270
    %2273 = vset.pattern.permute.xlu0 3
    %2274 = vperm.xlu0 %2273, %v897
    %v2275 = vpop.permute.xlu0 %2274
    %2277 = vset.pattern.permute.xlu0 3
    %2278 = vperm.xlu0 %2277, %v902
    %v2279 = vpop.permute.xlu0 %2278
    %2281 = vset.pattern.permute.xlu0 3
    %2282 = vperm.xlu0 %2281, %v907
    %v2283 = vpop.permute.xlu0 %2282
    %2285 = vset.pattern.permute.xlu0 3
    %2286 = vperm.xlu0 %2285, %v912
    %v2287 = vpop.permute.xlu0 %2286
    %2289 = vset.pattern.permute.xlu0 3
    %2290 = vperm.xlu0 %2289, %v917
    %v2291 = vpop.permute.xlu0 %2290
    %2293 = vset.pattern.permute.xlu0 3
    %2294 = vperm.xlu0 %2293, %v922
    %v2295 = vpop.permute.xlu0 %2294
    %2297 = vset.pattern.permute.xlu0 3
    %2298 = vperm.xlu0 %2297, %v927
    %v2299 = vpop.permute.xlu0 %2298
    %2301 = vset.pattern.permute.xlu0 3
    %2302 = vperm.xlu0 %2301, %v932
    %v2303 = vpop.permute.xlu0 %2302
    %2305 = vset.pattern.permute.xlu0 3
    %2306 = vperm.xlu0 %2305, %v937
    %v2307 = vpop.permute.xlu0 %2306
    %2309 = vset.pattern.permute.xlu0 3
    %2310 = vperm.xlu0 %2309, %v942
    %v2311 = vpop.permute.xlu0 %2310
    %2313 = vset.pattern.permute.xlu0 3
    %2314 = vperm.xlu0 %2313, %v947
    %v2315 = vpop.permute.xlu0 %2314
    %2317 = vset.pattern.permute.xlu0 3
    %2318 = vperm.xlu0 %2317, %v952
    %v2319 = vpop.permute.xlu0 %2318
    %2321 = vset.pattern.permute.xlu0 3
    %2322 = vperm.xlu0 %2321, %v957
    %v2323 = vpop.permute.xlu0 %2322
    %2325 = vset.pattern.permute.xlu0 3
    %2326 = vperm.xlu0 %2325, %v962
    %v2327 = vpop.permute.xlu0 %2326
    %2329 = vset.pattern.permute.xlu0 3
    %2330 = vperm.xlu0 %2329, %v967
    %v2331 = vpop.permute.xlu0 %2330
    %2333 = vset.pattern.permute.xlu0 3
    %2334 = vperm.xlu0 %2333, %v972
    %v2335 = vpop.permute.xlu0 %2334
    %2337 = vset.pattern.permute.xlu0 3
    %2338 = vperm.xlu0 %2337, %v977
    %v2339 = vpop.permute.xlu0 %2338
    %2341 = vset.pattern.permute.xlu0 3
    %2342 = vperm.xlu0 %2341, %v982
    %v2343 = vpop.permute.xlu0 %2342
    %2345 = vset.pattern.permute.xlu0 3
    %2346 = vperm.xlu0 %2345, %v987
    %v2347 = vpop.permute.xlu0 %2346
    %2349 = vset.pattern.permute.xlu0 3
    %2350 = vperm.xlu0 %2349, %v992
    %v2351 = vpop.permute.xlu0 %2350
    %2353 = vset.pattern.permute.xlu0 3
    %2354 = vperm.xlu0 %2353, %v997
    %v2355 = vpop.permute.xlu0 %2354
    %2357 = vset.pattern.permute.xlu0 3
    %2358 = vperm.xlu0 %2357, %v1002
    %v2359 = vpop.permute.xlu0 %2358
    %2361 = vset.pattern.permute.xlu0 3
    %2362 = vperm.xlu0 %2361, %v1007
    %v2363 = vpop.permute.xlu0 %2362
    %2365 = vset.pattern.permute.xlu0 3
    %2366 = vperm.xlu0 %2365, %v1012
    %v2367 = vpop.permute.xlu0 %2366
    %2369 = vset.pattern.permute.xlu0 3
    %2370 = vperm.xlu0 %2369, %v1017
    %v2371 = vpop.permute.xlu0 %2370
    %2373 = vset.pattern.permute.xlu0 3
    %2374 = vperm.xlu0 %2373, %v1022
    %v2375 = vpop.permute.xlu0 %2374
    %2377 = vset.pattern.permute.xlu0 3
    %2378 = vperm.xlu0 %2377, %v1027
    %v2379 = vpop.permute.xlu0 %2378
    %2381 = vset.pattern.permute.xlu0 3
    %2382 = vperm.xlu0 %2381, %v1032
    %v2383 = vpop.permute.xlu0 %2382
    %2385 = vset.pattern.permute.xlu0 3
    %2386 = vperm.xlu0 %2385, %v1037
    %v2387 = vpop.permute.xlu0 %2386
    %2389 = vset.pattern.permute.xlu0 3
    %2390 = vperm.xlu0 %2389, %v1042
    %v2391 = vpop.permute.xlu0 %2390
    %2393 = vset.pattern.permute.xlu0 3
    %2394 = vperm.xlu0 %2393, %v1047
    %v2395 = vpop.permute.xlu0 %2394
    %2397 = vset.pattern.permute.xlu0 3
    %2398 = vperm.xlu0 %2397, %v1052
    %v2399 = vpop.permute.xlu0 %2398
    %2401 = vset.pattern.permute.xlu0 3
    %2402 = vperm.xlu0 %2401, %v1057
    %v2403 = vpop.permute.xlu0 %2402
    %2405 = vset.pattern.permute.xlu0 3
    %2406 = vperm.xlu0 %2405, %v1062
    %v2407 = vpop.permute.xlu0 %2406
    %v2409 = vmul.f32 %v2155, %v1065
    %v2410 = vmul.f32 %v2159, %v1066
    %v2411 = vmul.f32 %v2163, %v1067
    %v2412 = vmul.f32 %v2167, %v1068
    %v2413 = vmul.f32 %v2171, %v1069
    %v2414 = vmul.f32 %v2175, %v1070
    %v2415 = vmul.f32 %v2179, %v1071
    %v2416 = vmul.f32 %v2183, %v1072
    %v2417 = vmul.f32 %v2187, %v1073
    %v2418 = vmul.f32 %v2191, %v1074
    %v2419 = vmul.f32 %v2195, %v1075
    %v2420 = vmul.f32 %v2199, %v1076
    %v2421 = vmul.f32 %v2203, %v1077
    %v2422 = vmul.f32 %v2207, %v1078
    %v2423 = vmul.f32 %v2211, %v1079
    %v2424 = vmul.f32 %v2215, %v1080
    %v2425 = vmul.f32 %v2219, %v1081
    %v2426 = vmul.f32 %v2223, %v1082
    %v2427 = vmul.f32 %v2227, %v1083
    %v2428 = vmul.f32 %v2231, %v1084
    %v2429 = vmul.f32 %v2235, %v1085
    %v2430 = vmul.f32 %v2239, %v1086
    %v2431 = vmul.f32 %v2243, %v1087
    %v2432 = vmul.f32 %v2247, %v1088
    %v2433 = vmul.f32 %v2251, %v1089
    %v2434 = vmul.f32 %v2255, %v1090
    %v2435 = vmul.f32 %v2259, %v1091
    %v2436 = vmul.f32 %v2263, %v1092
    %v2437 = vmul.f32 %v2267, %v1093
    %v2438 = vmul.f32 %v2271, %v1094
    %v2439 = vmul.f32 %v2275, %v1095
    %v2440 = vmul.f32 %v2279, %v1096
    %v2441 = vmul.f32 %v2283, %v1097
    %v2442 = vmul.f32 %v2287, %v1098
    %v2443 = vmul.f32 %v2291, %v1099
    %v2444 = vmul.f32 %v2295, %v1100
    %v2445 = vmul.f32 %v2299, %v1101
    %v2446 = vmul.f32 %v2303, %v1102
    %v2447 = vmul.f32 %v2307, %v1103
    %v2448 = vmul.f32 %v2311, %v1104
    %v2449 = vmul.f32 %v2315, %v1105
    %v2450 = vmul.f32 %v2319, %v1106
    %v2451 = vmul.f32 %v2323, %v1107
    %v2452 = vmul.f32 %v2327, %v1108
    %v2453 = vmul.f32 %v2331, %v1109
    %v2454 = vmul.f32 %v2335, %v1110
    %v2455 = vmul.f32 %v2339, %v1111
    %v2456 = vmul.f32 %v2343, %v1112
    %v2457 = vmul.f32 %v2347, %v1113
    %v2458 = vmul.f32 %v2351, %v1114
    %v2459 = vmul.f32 %v2355, %v1115
    %v2460 = vmul.f32 %v2359, %v1116
    %v2461 = vmul.f32 %v2363, %v1117
    %v2462 = vmul.f32 %v2367, %v1118
    %v2463 = vmul.f32 %v2371, %v1119
    %v2464 = vmul.f32 %v2375, %v1120
    %v2465 = vmul.f32 %v2379, %v1121
    %v2466 = vmul.f32 %v2383, %v1122
    %v2467 = vmul.f32 %v2387, %v1123
    %v2468 = vmul.f32 %v2391, %v1124
    %v2469 = vmul.f32 %v2395, %v1125
    %v2470 = vmul.f32 %v2399, %v1126
    %v2471 = vmul.f32 %v2403, %v1127
    %v2472 = vmul.f32 %v2407, %v1128
    %2473 = vset.pattern.permute.xlu0 4
    %2474 = vperm.xlu0 %2473, %v747
    %v2475 = vpop.permute.xlu0 %2474
    %2477 = vset.pattern.permute.xlu0 4
    %2478 = vperm.xlu0 %2477, %v752
    %v2479 = vpop.permute.xlu0 %2478
    %2481 = vset.pattern.permute.xlu0 4
    %2482 = vperm.xlu0 %2481, %v757
    %v2483 = vpop.permute.xlu0 %2482
    %2485 = vset.pattern.permute.xlu0 4
    %2486 = vperm.xlu0 %2485, %v762
    %v2487 = vpop.permute.xlu0 %2486
    %2489 = vset.pattern.permute.xlu0 4
    %2490 = vperm.xlu0 %2489, %v767
    %v2491 = vpop.permute.xlu0 %2490
    %2493 = vset.pattern.permute.xlu0 4
    %2494 = vperm.xlu0 %2493, %v772
    %v2495 = vpop.permute.xlu0 %2494
    %2497 = vset.pattern.permute.xlu0 4
    %2498 = vperm.xlu0 %2497, %v777
    %v2499 = vpop.permute.xlu0 %2498
    %2501 = vset.pattern.permute.xlu0 4
    %2502 = vperm.xlu0 %2501, %v782
    %v2503 = vpop.permute.xlu0 %2502
    %2505 = vset.pattern.permute.xlu0 4
    %2506 = vperm.xlu0 %2505, %v787
    %v2507 = vpop.permute.xlu0 %2506
    %2509 = vset.pattern.permute.xlu0 4
    %2510 = vperm.xlu0 %2509, %v792
    %v2511 = vpop.permute.xlu0 %2510
    %2513 = vset.pattern.permute.xlu0 4
    %2514 = vperm.xlu0 %2513, %v797
    %v2515 = vpop.permute.xlu0 %2514
    %2517 = vset.pattern.permute.xlu0 4
    %2518 = vperm.xlu0 %2517, %v802
    %v2519 = vpop.permute.xlu0 %2518
    %2521 = vset.pattern.permute.xlu0 4
    %2522 = vperm.xlu0 %2521, %v807
    %v2523 = vpop.permute.xlu0 %2522
    %2525 = vset.pattern.permute.xlu0 4
    %2526 = vperm.xlu0 %2525, %v812
    %v2527 = vpop.permute.xlu0 %2526
    %2529 = vset.pattern.permute.xlu0 4
    %2530 = vperm.xlu0 %2529, %v817
    %v2531 = vpop.permute.xlu0 %2530
    %2533 = vset.pattern.permute.xlu0 4
    %2534 = vperm.xlu0 %2533, %v822
    %v2535 = vpop.permute.xlu0 %2534
    %2537 = vset.pattern.permute.xlu0 4
    %2538 = vperm.xlu0 %2537, %v827
    %v2539 = vpop.permute.xlu0 %2538
    %2541 = vset.pattern.permute.xlu0 4
    %2542 = vperm.xlu0 %2541, %v832
    %v2543 = vpop.permute.xlu0 %2542
    %2545 = vset.pattern.permute.xlu0 4
    %2546 = vperm.xlu0 %2545, %v837
    %v2547 = vpop.permute.xlu0 %2546
    %2549 = vset.pattern.permute.xlu0 4
    %2550 = vperm.xlu0 %2549, %v842
    %v2551 = vpop.permute.xlu0 %2550
    %2553 = vset.pattern.permute.xlu0 4
    %2554 = vperm.xlu0 %2553, %v847
    %v2555 = vpop.permute.xlu0 %2554
    %2557 = vset.pattern.permute.xlu0 4
    %2558 = vperm.xlu0 %2557, %v852
    %v2559 = vpop.permute.xlu0 %2558
    %2561 = vset.pattern.permute.xlu0 4
    %2562 = vperm.xlu0 %2561, %v857
    %v2563 = vpop.permute.xlu0 %2562
    %2565 = vset.pattern.permute.xlu0 4
    %2566 = vperm.xlu0 %2565, %v862
    %v2567 = vpop.permute.xlu0 %2566
    %2569 = vset.pattern.permute.xlu0 4
    %2570 = vperm.xlu0 %2569, %v867
    %v2571 = vpop.permute.xlu0 %2570
    %2573 = vset.pattern.permute.xlu0 4
    %2574 = vperm.xlu0 %2573, %v872
    %v2575 = vpop.permute.xlu0 %2574
    %2577 = vset.pattern.permute.xlu0 4
    %2578 = vperm.xlu0 %2577, %v877
    %v2579 = vpop.permute.xlu0 %2578
    %2581 = vset.pattern.permute.xlu0 4
    %2582 = vperm.xlu0 %2581, %v882
    %v2583 = vpop.permute.xlu0 %2582
    %2585 = vset.pattern.permute.xlu0 4
    %2586 = vperm.xlu0 %2585, %v887
    %v2587 = vpop.permute.xlu0 %2586
    %2589 = vset.pattern.permute.xlu0 4
    %2590 = vperm.xlu0 %2589, %v892
    %v2591 = vpop.permute.xlu0 %2590
    %2593 = vset.pattern.permute.xlu0 4
    %2594 = vperm.xlu0 %2593, %v897
    %v2595 = vpop.permute.xlu0 %2594
    %2597 = vset.pattern.permute.xlu0 4
    %2598 = vperm.xlu0 %2597, %v902
    %v2599 = vpop.permute.xlu0 %2598
    %2601 = vset.pattern.permute.xlu0 4
    %2602 = vperm.xlu0 %2601, %v907
    %v2603 = vpop.permute.xlu0 %2602
    %2605 = vset.pattern.permute.xlu0 4
    %2606 = vperm.xlu0 %2605, %v912
    %v2607 = vpop.permute.xlu0 %2606
    %2609 = vset.pattern.permute.xlu0 4
    %2610 = vperm.xlu0 %2609, %v917
    %v2611 = vpop.permute.xlu0 %2610
    %2613 = vset.pattern.permute.xlu0 4
    %2614 = vperm.xlu0 %2613, %v922
    %v2615 = vpop.permute.xlu0 %2614
    %2617 = vset.pattern.permute.xlu0 4
    %2618 = vperm.xlu0 %2617, %v927
    %v2619 = vpop.permute.xlu0 %2618
    %2621 = vset.pattern.permute.xlu0 4
    %2622 = vperm.xlu0 %2621, %v932
    %v2623 = vpop.permute.xlu0 %2622
    %2625 = vset.pattern.permute.xlu0 4
    %2626 = vperm.xlu0 %2625, %v937
    %v2627 = vpop.permute.xlu0 %2626
    %2629 = vset.pattern.permute.xlu0 4
    %2630 = vperm.xlu0 %2629, %v942
    %v2631 = vpop.permute.xlu0 %2630
    %2633 = vset.pattern.permute.xlu0 4
    %2634 = vperm.xlu0 %2633, %v947
    %v2635 = vpop.permute.xlu0 %2634
    %2637 = vset.pattern.permute.xlu0 4
    %2638 = vperm.xlu0 %2637, %v952
    %v2639 = vpop.permute.xlu0 %2638
    %2641 = vset.pattern.permute.xlu0 4
    %2642 = vperm.xlu0 %2641, %v957
    %v2643 = vpop.permute.xlu0 %2642
    %2645 = vset.pattern.permute.xlu0 4
    %2646 = vperm.xlu0 %2645, %v962
    %v2647 = vpop.permute.xlu0 %2646
    %2649 = vset.pattern.permute.xlu0 4
    %2650 = vperm.xlu0 %2649, %v967
    %v2651 = vpop.permute.xlu0 %2650
    %2653 = vset.pattern.permute.xlu0 4
    %2654 = vperm.xlu0 %2653, %v972
    %v2655 = vpop.permute.xlu0 %2654
    %2657 = vset.pattern.permute.xlu0 4
    %2658 = vperm.xlu0 %2657, %v977
    %v2659 = vpop.permute.xlu0 %2658
    %2661 = vset.pattern.permute.xlu0 4
    %2662 = vperm.xlu0 %2661, %v982
    %v2663 = vpop.permute.xlu0 %2662
    %2665 = vset.pattern.permute.xlu0 4
    %2666 = vperm.xlu0 %2665, %v987
    %v2667 = vpop.permute.xlu0 %2666
    %2669 = vset.pattern.permute.xlu0 4
    %2670 = vperm.xlu0 %2669, %v992
    %v2671 = vpop.permute.xlu0 %2670
    %2673 = vset.pattern.permute.xlu0 4
    %2674 = vperm.xlu0 %2673, %v997
    %v2675 = vpop.permute.xlu0 %2674
    %2677 = vset.pattern.permute.xlu0 4
    %2678 = vperm.xlu0 %2677, %v1002
    %v2679 = vpop.permute.xlu0 %2678
    %2681 = vset.pattern.permute.xlu0 4
    %2682 = vperm.xlu0 %2681, %v1007
    %v2683 = vpop.permute.xlu0 %2682
    %2685 = vset.pattern.permute.xlu0 4
    %2686 = vperm.xlu0 %2685, %v1012
    %v2687 = vpop.permute.xlu0 %2686
    %2689 = vset.pattern.permute.xlu0 4
    %2690 = vperm.xlu0 %2689, %v1017
    %v2691 = vpop.permute.xlu0 %2690
    %2693 = vset.pattern.permute.xlu0 4
    %2694 = vperm.xlu0 %2693, %v1022
    %v2695 = vpop.permute.xlu0 %2694
    %2697 = vset.pattern.permute.xlu0 4
    %2698 = vperm.xlu0 %2697, %v1027
    %v2699 = vpop.permute.xlu0 %2698
    %2701 = vset.pattern.permute.xlu0 4
    %2702 = vperm.xlu0 %2701, %v1032
    %v2703 = vpop.permute.xlu0 %2702
    %2705 = vset.pattern.permute.xlu0 4
    %2706 = vperm.xlu0 %2705, %v1037
    %v2707 = vpop.permute.xlu0 %2706
    %2709 = vset.pattern.permute.xlu0 4
    %2710 = vperm.xlu0 %2709, %v1042
    %v2711 = vpop.permute.xlu0 %2710
    %2713 = vset.pattern.permute.xlu0 4
    %2714 = vperm.xlu0 %2713, %v1047
    %v2715 = vpop.permute.xlu0 %2714
    %2717 = vset.pattern.permute.xlu0 4
    %2718 = vperm.xlu0 %2717, %v1052
    %v2719 = vpop.permute.xlu0 %2718
    %2721 = vset.pattern.permute.xlu0 4
    %2722 = vperm.xlu0 %2721, %v1057
    %v2723 = vpop.permute.xlu0 %2722
    %2725 = vset.pattern.permute.xlu0 4
    %2726 = vperm.xlu0 %2725, %v1062
    %v2727 = vpop.permute.xlu0 %2726
    %v2729 = vmul.f32 %v2475, %v1065
    %v2730 = vmul.f32 %v2479, %v1066
    %v2731 = vmul.f32 %v2483, %v1067
    %v2732 = vmul.f32 %v2487, %v1068
    %v2733 = vmul.f32 %v2491, %v1069
    %v2734 = vmul.f32 %v2495, %v1070
    %v2735 = vmul.f32 %v2499, %v1071
    %v2736 = vmul.f32 %v2503, %v1072
    %v2737 = vmul.f32 %v2507, %v1073
    %v2738 = vmul.f32 %v2511, %v1074
    %v2739 = vmul.f32 %v2515, %v1075
    %v2740 = vmul.f32 %v2519, %v1076
    %v2741 = vmul.f32 %v2523, %v1077
    %v2742 = vmul.f32 %v2527, %v1078
    %v2743 = vmul.f32 %v2531, %v1079
    %v2744 = vmul.f32 %v2535, %v1080
    %v2745 = vmul.f32 %v2539, %v1081
    %v2746 = vmul.f32 %v2543, %v1082
    %v2747 = vmul.f32 %v2547, %v1083
    %v2748 = vmul.f32 %v2551, %v1084
    %v2749 = vmul.f32 %v2555, %v1085
    %v2750 = vmul.f32 %v2559, %v1086
    %v2751 = vmul.f32 %v2563, %v1087
    %v2752 = vmul.f32 %v2567, %v1088
    %v2753 = vmul.f32 %v2571, %v1089
    %v2754 = vmul.f32 %v2575, %v1090
    %v2755 = vmul.f32 %v2579, %v1091
    %v2756 = vmul.f32 %v2583, %v1092
    %v2757 = vmul.f32 %v2587, %v1093
    %v2758 = vmul.f32 %v2591, %v1094
    %v2759 = vmul.f32 %v2595, %v1095
    %v2760 = vmul.f32 %v2599, %v1096
    %v2761 = vmul.f32 %v2603, %v1097
    %v2762 = vmul.f32 %v2607, %v1098
    %v2763 = vmul.f32 %v2611, %v1099
    %v2764 = vmul.f32 %v2615, %v1100
    %v2765 = vmul.f32 %v2619, %v1101
    %v2766 = vmul.f32 %v2623, %v1102
    %v2767 = vmul.f32 %v2627, %v1103
    %v2768 = vmul.f32 %v2631, %v1104
    %v2769 = vmul.f32 %v2635, %v1105
    %v2770 = vmul.f32 %v2639, %v1106
    %v2771 = vmul.f32 %v2643, %v1107
    %v2772 = vmul.f32 %v2647, %v1108
    %v2773 = vmul.f32 %v2651, %v1109
    %v2774 = vmul.f32 %v2655, %v1110
    %v2775 = vmul.f32 %v2659, %v1111
    %v2776 = vmul.f32 %v2663, %v1112
    %v2777 = vmul.f32 %v2667, %v1113
    %v2778 = vmul.f32 %v2671, %v1114
    %v2779 = vmul.f32 %v2675, %v1115
    %v2780 = vmul.f32 %v2679, %v1116
    %v2781 = vmul.f32 %v2683, %v1117
    %v2782 = vmul.f32 %v2687, %v1118
    %v2783 = vmul.f32 %v2691, %v1119
    %v2784 = vmul.f32 %v2695, %v1120
    %v2785 = vmul.f32 %v2699, %v1121
    %v2786 = vmul.f32 %v2703, %v1122
    %v2787 = vmul.f32 %v2707, %v1123
    %v2788 = vmul.f32 %v2711, %v1124
    %v2789 = vmul.f32 %v2715, %v1125
    %v2790 = vmul.f32 %v2719, %v1126
    %v2791 = vmul.f32 %v2723, %v1127
    %v2792 = vmul.f32 %v2727, %v1128
    %2793 = vset.pattern.permute.xlu0 5
    %2794 = vperm.xlu0 %2793, %v747
    %v2795 = vpop.permute.xlu0 %2794
    %2797 = vset.pattern.permute.xlu0 5
    %2798 = vperm.xlu0 %2797, %v752
    %v2799 = vpop.permute.xlu0 %2798
    %2801 = vset.pattern.permute.xlu0 5
    %2802 = vperm.xlu0 %2801, %v757
    %v2803 = vpop.permute.xlu0 %2802
    %2805 = vset.pattern.permute.xlu0 5
    %2806 = vperm.xlu0 %2805, %v762
    %v2807 = vpop.permute.xlu0 %2806
    %2809 = vset.pattern.permute.xlu0 5
    %2810 = vperm.xlu0 %2809, %v767
    %v2811 = vpop.permute.xlu0 %2810
    %2813 = vset.pattern.permute.xlu0 5
    %2814 = vperm.xlu0 %2813, %v772
    %v2815 = vpop.permute.xlu0 %2814
    %2817 = vset.pattern.permute.xlu0 5
    %2818 = vperm.xlu0 %2817, %v777
    %v2819 = vpop.permute.xlu0 %2818
    %2821 = vset.pattern.permute.xlu0 5
    %2822 = vperm.xlu0 %2821, %v782
    %v2823 = vpop.permute.xlu0 %2822
    %2825 = vset.pattern.permute.xlu0 5
    %2826 = vperm.xlu0 %2825, %v787
    %v2827 = vpop.permute.xlu0 %2826
    %2829 = vset.pattern.permute.xlu0 5
    %2830 = vperm.xlu0 %2829, %v792
    %v2831 = vpop.permute.xlu0 %2830
    %2833 = vset.pattern.permute.xlu0 5
    %2834 = vperm.xlu0 %2833, %v797
    %v2835 = vpop.permute.xlu0 %2834
    %2837 = vset.pattern.permute.xlu0 5
    %2838 = vperm.xlu0 %2837, %v802
    %v2839 = vpop.permute.xlu0 %2838
    %2841 = vset.pattern.permute.xlu0 5
    %2842 = vperm.xlu0 %2841, %v807
    %v2843 = vpop.permute.xlu0 %2842
    %2845 = vset.pattern.permute.xlu0 5
    %2846 = vperm.xlu0 %2845, %v812
    %v2847 = vpop.permute.xlu0 %2846
    %2849 = vset.pattern.permute.xlu0 5
    %2850 = vperm.xlu0 %2849, %v817
    %v2851 = vpop.permute.xlu0 %2850
    %2853 = vset.pattern.permute.xlu0 5
    %2854 = vperm.xlu0 %2853, %v822
    %v2855 = vpop.permute.xlu0 %2854
    %2857 = vset.pattern.permute.xlu0 5
    %2858 = vperm.xlu0 %2857, %v827
    %v2859 = vpop.permute.xlu0 %2858
    %2861 = vset.pattern.permute.xlu0 5
    %2862 = vperm.xlu0 %2861, %v832
    %v2863 = vpop.permute.xlu0 %2862
    %2865 = vset.pattern.permute.xlu0 5
    %2866 = vperm.xlu0 %2865, %v837
    %v2867 = vpop.permute.xlu0 %2866
    %2869 = vset.pattern.permute.xlu0 5
    %2870 = vperm.xlu0 %2869, %v842
    %v2871 = vpop.permute.xlu0 %2870
    %2873 = vset.pattern.permute.xlu0 5
    %2874 = vperm.xlu0 %2873, %v847
    %v2875 = vpop.permute.xlu0 %2874
    %2877 = vset.pattern.permute.xlu0 5
    %2878 = vperm.xlu0 %2877, %v852
    %v2879 = vpop.permute.xlu0 %2878
    %2881 = vset.pattern.permute.xlu0 5
    %2882 = vperm.xlu0 %2881, %v857
    %v2883 = vpop.permute.xlu0 %2882
    %2885 = vset.pattern.permute.xlu0 5
    %2886 = vperm.xlu0 %2885, %v862
    %v2887 = vpop.permute.xlu0 %2886
    %2889 = vset.pattern.permute.xlu0 5
    %2890 = vperm.xlu0 %2889, %v867
    %v2891 = vpop.permute.xlu0 %2890
    %2893 = vset.pattern.permute.xlu0 5
    %2894 = vperm.xlu0 %2893, %v872
    %v2895 = vpop.permute.xlu0 %2894
    %2897 = vset.pattern.permute.xlu0 5
    %2898 = vperm.xlu0 %2897, %v877
    %v2899 = vpop.permute.xlu0 %2898
    %2901 = vset.pattern.permute.xlu0 5
    %2902 = vperm.xlu0 %2901, %v882
    %v2903 = vpop.permute.xlu0 %2902
    %2905 = vset.pattern.permute.xlu0 5
    %2906 = vperm.xlu0 %2905, %v887
    %v2907 = vpop.permute.xlu0 %2906
    %2909 = vset.pattern.permute.xlu0 5
    %2910 = vperm.xlu0 %2909, %v892
    %v2911 = vpop.permute.xlu0 %2910
    %2913 = vset.pattern.permute.xlu0 5
    %2914 = vperm.xlu0 %2913, %v897
    %v2915 = vpop.permute.xlu0 %2914
    %2917 = vset.pattern.permute.xlu0 5
    %2918 = vperm.xlu0 %2917, %v902
    %v2919 = vpop.permute.xlu0 %2918
    %2921 = vset.pattern.permute.xlu0 5
    %2922 = vperm.xlu0 %2921, %v907
    %v2923 = vpop.permute.xlu0 %2922
    %2925 = vset.pattern.permute.xlu0 5
    %2926 = vperm.xlu0 %2925, %v912
    %v2927 = vpop.permute.xlu0 %2926
    %2929 = vset.pattern.permute.xlu0 5
    %2930 = vperm.xlu0 %2929, %v917
    %v2931 = vpop.permute.xlu0 %2930
    %2933 = vset.pattern.permute.xlu0 5
    %2934 = vperm.xlu0 %2933, %v922
    %v2935 = vpop.permute.xlu0 %2934
    %2937 = vset.pattern.permute.xlu0 5
    %2938 = vperm.xlu0 %2937, %v927
    %v2939 = vpop.permute.xlu0 %2938
    %2941 = vset.pattern.permute.xlu0 5
    %2942 = vperm.xlu0 %2941, %v932
    %v2943 = vpop.permute.xlu0 %2942
    %2945 = vset.pattern.permute.xlu0 5
    %2946 = vperm.xlu0 %2945, %v937
    %v2947 = vpop.permute.xlu0 %2946
    %2949 = vset.pattern.permute.xlu0 5
    %2950 = vperm.xlu0 %2949, %v942
    %v2951 = vpop.permute.xlu0 %2950
    %2953 = vset.pattern.permute.xlu0 5
    %2954 = vperm.xlu0 %2953, %v947
    %v2955 = vpop.permute.xlu0 %2954
    %2957 = vset.pattern.permute.xlu0 5
    %2958 = vperm.xlu0 %2957, %v952
    %v2959 = vpop.permute.xlu0 %2958
    %2961 = vset.pattern.permute.xlu0 5
    %2962 = vperm.xlu0 %2961, %v957
    %v2963 = vpop.permute.xlu0 %2962
    %2965 = vset.pattern.permute.xlu0 5
    %2966 = vperm.xlu0 %2965, %v962
    %v2967 = vpop.permute.xlu0 %2966
    %2969 = vset.pattern.permute.xlu0 5
    %2970 = vperm.xlu0 %2969, %v967
    %v2971 = vpop.permute.xlu0 %2970
    %2973 = vset.pattern.permute.xlu0 5
    %2974 = vperm.xlu0 %2973, %v972
    %v2975 = vpop.permute.xlu0 %2974
    %2977 = vset.pattern.permute.xlu0 5
    %2978 = vperm.xlu0 %2977, %v977
    %v2979 = vpop.permute.xlu0 %2978
    %2981 = vset.pattern.permute.xlu0 5
    %2982 = vperm.xlu0 %2981, %v982
    %v2983 = vpop.permute.xlu0 %2982
    %2985 = vset.pattern.permute.xlu0 5
    %2986 = vperm.xlu0 %2985, %v987
    %v2987 = vpop.permute.xlu0 %2986
    %2989 = vset.pattern.permute.xlu0 5
    %2990 = vperm.xlu0 %2989, %v992
    %v2991 = vpop.permute.xlu0 %2990
    %2993 = vset.pattern.permute.xlu0 5
    %2994 = vperm.xlu0 %2993, %v997
    %v2995 = vpop.permute.xlu0 %2994
    %2997 = vset.pattern.permute.xlu0 5
    %2998 = vperm.xlu0 %2997, %v1002
    %v2999 = vpop.permute.xlu0 %2998
    %3001 = vset.pattern.permute.xlu0 5
    %3002 = vperm.xlu0 %3001, %v1007
    %v3003 = vpop.permute.xlu0 %3002
    %3005 = vset.pattern.permute.xlu0 5
    %3006 = vperm.xlu0 %3005, %v1012
    %v3007 = vpop.permute.xlu0 %3006
    %3009 = vset.pattern.permute.xlu0 5
    %3010 = vperm.xlu0 %3009, %v1017
    %v3011 = vpop.permute.xlu0 %3010
    %3013 = vset.pattern.permute.xlu0 5
    %3014 = vperm.xlu0 %3013, %v1022
    %v3015 = vpop.permute.xlu0 %3014
    %3017 = vset.pattern.permute.xlu0 5
    %3018 = vperm.xlu0 %3017, %v1027
    %v3019 = vpop.permute.xlu0 %3018
    %3021 = vset.pattern.permute.xlu0 5
    %3022 = vperm.xlu0 %3021, %v1032
    %v3023 = vpop.permute.xlu0 %3022
    %3025 = vset.pattern.permute.xlu0 5
    %3026 = vperm.xlu0 %3025, %v1037
    %v3027 = vpop.permute.xlu0 %3026
    %3029 = vset.pattern.permute.xlu0 5
    %3030 = vperm.xlu0 %3029, %v1042
    %v3031 = vpop.permute.xlu0 %3030
    %3033 = vset.pattern.permute.xlu0 5
    %3034 = vperm.xlu0 %3033, %v1047
    %v3035 = vpop.permute.xlu0 %3034
    %3037 = vset.pattern.permute.xlu0 5
    %3038 = vperm.xlu0 %3037, %v1052
    %v3039 = vpop.permute.xlu0 %3038
    %3041 = vset.pattern.permute.xlu0 5
    %3042 = vperm.xlu0 %3041, %v1057
    %v3043 = vpop.permute.xlu0 %3042
    %3045 = vset.pattern.permute.xlu0 5
    %3046 = vperm.xlu0 %3045, %v1062
    %v3047 = vpop.permute.xlu0 %3046
    %v3049 = vmul.f32 %v2795, %v1065
    %v3050 = vmul.f32 %v2799, %v1066
    %v3051 = vmul.f32 %v2803, %v1067
    %v3052 = vmul.f32 %v2807, %v1068
    %v3053 = vmul.f32 %v2811, %v1069
    %v3054 = vmul.f32 %v2815, %v1070
    %v3055 = vmul.f32 %v2819, %v1071
    %v3056 = vmul.f32 %v2823, %v1072
    %v3057 = vmul.f32 %v2827, %v1073
    %v3058 = vmul.f32 %v2831, %v1074
    %v3059 = vmul.f32 %v2835, %v1075
    %v3060 = vmul.f32 %v2839, %v1076
    %v3061 = vmul.f32 %v2843, %v1077
    %v3062 = vmul.f32 %v2847, %v1078
    %v3063 = vmul.f32 %v2851, %v1079
    %v3064 = vmul.f32 %v2855, %v1080
    %v3065 = vmul.f32 %v2859, %v1081
    %v3066 = vmul.f32 %v2863, %v1082
    %v3067 = vmul.f32 %v2867, %v1083
    %v3068 = vmul.f32 %v2871, %v1084
    %v3069 = vmul.f32 %v2875, %v1085
    %v3070 = vmul.f32 %v2879, %v1086
    %v3071 = vmul.f32 %v2883, %v1087
    %v3072 = vmul.f32 %v2887, %v1088
    %v3073 = vmul.f32 %v2891, %v1089
    %v3074 = vmul.f32 %v2895, %v1090
    %v3075 = vmul.f32 %v2899, %v1091
    %v3076 = vmul.f32 %v2903, %v1092
    %v3077 = vmul.f32 %v2907, %v1093
    %v3078 = vmul.f32 %v2911, %v1094
    %v3079 = vmul.f32 %v2915, %v1095
    %v3080 = vmul.f32 %v2919, %v1096
    %v3081 = vmul.f32 %v2923, %v1097
    %v3082 = vmul.f32 %v2927, %v1098
    %v3083 = vmul.f32 %v2931, %v1099
    %v3084 = vmul.f32 %v2935, %v1100
    %v3085 = vmul.f32 %v2939, %v1101
    %v3086 = vmul.f32 %v2943, %v1102
    %v3087 = vmul.f32 %v2947, %v1103
    %v3088 = vmul.f32 %v2951, %v1104
    %v3089 = vmul.f32 %v2955, %v1105
    %v3090 = vmul.f32 %v2959, %v1106
    %v3091 = vmul.f32 %v2963, %v1107
    %v3092 = vmul.f32 %v2967, %v1108
    %v3093 = vmul.f32 %v2971, %v1109
    %v3094 = vmul.f32 %v2975, %v1110
    %v3095 = vmul.f32 %v2979, %v1111
    %v3096 = vmul.f32 %v2983, %v1112
    %v3097 = vmul.f32 %v2987, %v1113
    %v3098 = vmul.f32 %v2991, %v1114
    %v3099 = vmul.f32 %v2995, %v1115
    %v3100 = vmul.f32 %v2999, %v1116
    %v3101 = vmul.f32 %v3003, %v1117
    %v3102 = vmul.f32 %v3007, %v1118
    %v3103 = vmul.f32 %v3011, %v1119
    %v3104 = vmul.f32 %v3015, %v1120
    %v3105 = vmul.f32 %v3019, %v1121
    %v3106 = vmul.f32 %v3023, %v1122
    %v3107 = vmul.f32 %v3027, %v1123
    %v3108 = vmul.f32 %v3031, %v1124
    %v3109 = vmul.f32 %v3035, %v1125
    %v3110 = vmul.f32 %v3039, %v1126
    %v3111 = vmul.f32 %v3043, %v1127
    %v3112 = vmul.f32 %v3047, %v1128
    %3113 = vset.pattern.permute.xlu0 6
    %3114 = vperm.xlu0 %3113, %v747
    %v3115 = vpop.permute.xlu0 %3114
    %3117 = vset.pattern.permute.xlu0 6
    %3118 = vperm.xlu0 %3117, %v752
    %v3119 = vpop.permute.xlu0 %3118
    %3121 = vset.pattern.permute.xlu0 6
    %3122 = vperm.xlu0 %3121, %v757
    %v3123 = vpop.permute.xlu0 %3122
    %3125 = vset.pattern.permute.xlu0 6
    %3126 = vperm.xlu0 %3125, %v762
    %v3127 = vpop.permute.xlu0 %3126
    %3129 = vset.pattern.permute.xlu0 6
    %3130 = vperm.xlu0 %3129, %v767
    %v3131 = vpop.permute.xlu0 %3130
    %3133 = vset.pattern.permute.xlu0 6
    %3134 = vperm.xlu0 %3133, %v772
    %v3135 = vpop.permute.xlu0 %3134
    %3137 = vset.pattern.permute.xlu0 6
    %3138 = vperm.xlu0 %3137, %v777
    %v3139 = vpop.permute.xlu0 %3138
    %3141 = vset.pattern.permute.xlu0 6
    %3142 = vperm.xlu0 %3141, %v782
    %v3143 = vpop.permute.xlu0 %3142
    %3145 = vset.pattern.permute.xlu0 6
    %3146 = vperm.xlu0 %3145, %v787
    %v3147 = vpop.permute.xlu0 %3146
    %3149 = vset.pattern.permute.xlu0 6
    %3150 = vperm.xlu0 %3149, %v792
    %v3151 = vpop.permute.xlu0 %3150
    %3153 = vset.pattern.permute.xlu0 6
    %3154 = vperm.xlu0 %3153, %v797
    %v3155 = vpop.permute.xlu0 %3154
    %3157 = vset.pattern.permute.xlu0 6
    %3158 = vperm.xlu0 %3157, %v802
    %v3159 = vpop.permute.xlu0 %3158
    %3161 = vset.pattern.permute.xlu0 6
    %3162 = vperm.xlu0 %3161, %v807
    %v3163 = vpop.permute.xlu0 %3162
    %3165 = vset.pattern.permute.xlu0 6
    %3166 = vperm.xlu0 %3165, %v812
    %v3167 = vpop.permute.xlu0 %3166
    %3169 = vset.pattern.permute.xlu0 6
    %3170 = vperm.xlu0 %3169, %v817
    %v3171 = vpop.permute.xlu0 %3170
    %3173 = vset.pattern.permute.xlu0 6
    %3174 = vperm.xlu0 %3173, %v822
    %v3175 = vpop.permute.xlu0 %3174
    %3177 = vset.pattern.permute.xlu0 6
    %3178 = vperm.xlu0 %3177, %v827
    %v3179 = vpop.permute.xlu0 %3178
    %3181 = vset.pattern.permute.xlu0 6
    %3182 = vperm.xlu0 %3181, %v832
    %v3183 = vpop.permute.xlu0 %3182
    %3185 = vset.pattern.permute.xlu0 6
    %3186 = vperm.xlu0 %3185, %v837
    %v3187 = vpop.permute.xlu0 %3186
    %3189 = vset.pattern.permute.xlu0 6
    %3190 = vperm.xlu0 %3189, %v842
    %v3191 = vpop.permute.xlu0 %3190
    %3193 = vset.pattern.permute.xlu0 6
    %3194 = vperm.xlu0 %3193, %v847
    %v3195 = vpop.permute.xlu0 %3194
    %3197 = vset.pattern.permute.xlu0 6
    %3198 = vperm.xlu0 %3197, %v852
    %v3199 = vpop.permute.xlu0 %3198
    %3201 = vset.pattern.permute.xlu0 6
    %3202 = vperm.xlu0 %3201, %v857
    %v3203 = vpop.permute.xlu0 %3202
    %3205 = vset.pattern.permute.xlu0 6
    %3206 = vperm.xlu0 %3205, %v862
    %v3207 = vpop.permute.xlu0 %3206
    %3209 = vset.pattern.permute.xlu0 6
    %3210 = vperm.xlu0 %3209, %v867
    %v3211 = vpop.permute.xlu0 %3210
    %3213 = vset.pattern.permute.xlu0 6
    %3214 = vperm.xlu0 %3213, %v872
    %v3215 = vpop.permute.xlu0 %3214
    %3217 = vset.pattern.permute.xlu0 6
    %3218 = vperm.xlu0 %3217, %v877
    %v3219 = vpop.permute.xlu0 %3218
    %3221 = vset.pattern.permute.xlu0 6
    %3222 = vperm.xlu0 %3221, %v882
    %v3223 = vpop.permute.xlu0 %3222
    %3225 = vset.pattern.permute.xlu0 6
    %3226 = vperm.xlu0 %3225, %v887
    %v3227 = vpop.permute.xlu0 %3226
    %3229 = vset.pattern.permute.xlu0 6
    %3230 = vperm.xlu0 %3229, %v892
    %v3231 = vpop.permute.xlu0 %3230
    %3233 = vset.pattern.permute.xlu0 6
    %3234 = vperm.xlu0 %3233, %v897
    %v3235 = vpop.permute.xlu0 %3234
    %3237 = vset.pattern.permute.xlu0 6
    %3238 = vperm.xlu0 %3237, %v902
    %v3239 = vpop.permute.xlu0 %3238
    %3241 = vset.pattern.permute.xlu0 6
    %3242 = vperm.xlu0 %3241, %v907
    %v3243 = vpop.permute.xlu0 %3242
    %3245 = vset.pattern.permute.xlu0 6
    %3246 = vperm.xlu0 %3245, %v912
    %v3247 = vpop.permute.xlu0 %3246
    %3249 = vset.pattern.permute.xlu0 6
    %3250 = vperm.xlu0 %3249, %v917
    %v3251 = vpop.permute.xlu0 %3250
    %3253 = vset.pattern.permute.xlu0 6
    %3254 = vperm.xlu0 %3253, %v922
    %v3255 = vpop.permute.xlu0 %3254
    %3257 = vset.pattern.permute.xlu0 6
    %3258 = vperm.xlu0 %3257, %v927
    %v3259 = vpop.permute.xlu0 %3258
    %3261 = vset.pattern.permute.xlu0 6
    %3262 = vperm.xlu0 %3261, %v932
    %v3263 = vpop.permute.xlu0 %3262
    %3265 = vset.pattern.permute.xlu0 6
    %3266 = vperm.xlu0 %3265, %v937
    %v3267 = vpop.permute.xlu0 %3266
    %3269 = vset.pattern.permute.xlu0 6
    %3270 = vperm.xlu0 %3269, %v942
    %v3271 = vpop.permute.xlu0 %3270
    %3273 = vset.pattern.permute.xlu0 6
    %3274 = vperm.xlu0 %3273, %v947
    %v3275 = vpop.permute.xlu0 %3274
    %3277 = vset.pattern.permute.xlu0 6
    %3278 = vperm.xlu0 %3277, %v952
    %v3279 = vpop.permute.xlu0 %3278
    %3281 = vset.pattern.permute.xlu0 6
    %3282 = vperm.xlu0 %3281, %v957
    %v3283 = vpop.permute.xlu0 %3282
    %3285 = vset.pattern.permute.xlu0 6
    %3286 = vperm.xlu0 %3285, %v962
    %v3287 = vpop.permute.xlu0 %3286
    %3289 = vset.pattern.permute.xlu0 6
    %3290 = vperm.xlu0 %3289, %v967
    %v3291 = vpop.permute.xlu0 %3290
    %3293 = vset.pattern.permute.xlu0 6
    %3294 = vperm.xlu0 %3293, %v972
    %v3295 = vpop.permute.xlu0 %3294
    %3297 = vset.pattern.permute.xlu0 6
    %3298 = vperm.xlu0 %3297, %v977
    %v3299 = vpop.permute.xlu0 %3298
    %3301 = vset.pattern.permute.xlu0 6
    %3302 = vperm.xlu0 %3301, %v982
    %v3303 = vpop.permute.xlu0 %3302
    %3305 = vset.pattern.permute.xlu0 6
    %3306 = vperm.xlu0 %3305, %v987
    %v3307 = vpop.permute.xlu0 %3306
    %3309 = vset.pattern.permute.xlu0 6
    %3310 = vperm.xlu0 %3309, %v992
    %v3311 = vpop.permute.xlu0 %3310
    %3313 = vset.pattern.permute.xlu0 6
    %3314 = vperm.xlu0 %3313, %v997
    %v3315 = vpop.permute.xlu0 %3314
    %3317 = vset.pattern.permute.xlu0 6
    %3318 = vperm.xlu0 %3317, %v1002
    %v3319 = vpop.permute.xlu0 %3318
    %3321 = vset.pattern.permute.xlu0 6
    %3322 = vperm.xlu0 %3321, %v1007
    %v3323 = vpop.permute.xlu0 %3322
    %3325 = vset.pattern.permute.xlu0 6
    %3326 = vperm.xlu0 %3325, %v1012
    %v3327 = vpop.permute.xlu0 %3326
    %3329 = vset.pattern.permute.xlu0 6
    %3330 = vperm.xlu0 %3329, %v1017
    %v3331 = vpop.permute.xlu0 %3330
    %3333 = vset.pattern.permute.xlu0 6
    %3334 = vperm.xlu0 %3333, %v1022
    %v3335 = vpop.permute.xlu0 %3334
    %3337 = vset.pattern.permute.xlu0 6
    %3338 = vperm.xlu0 %3337, %v1027
    %v3339 = vpop.permute.xlu0 %3338
    %3341 = vset.pattern.permute.xlu0 6
    %3342 = vperm.xlu0 %3341, %v1032
    %v3343 = vpop.permute.xlu0 %3342
    %3345 = vset.pattern.permute.xlu0 6
    %3346 = vperm.xlu0 %3345, %v1037
    %v3347 = vpop.permute.xlu0 %3346
    %3349 = vset.pattern.permute.xlu0 6
    %3350 = vperm.xlu0 %3349, %v1042
    %v3351 = vpop.permute.xlu0 %3350
    %3353 = vset.pattern.permute.xlu0 6
    %3354 = vperm.xlu0 %3353, %v1047
    %v3355 = vpop.permute.xlu0 %3354
    %3357 = vset.pattern.permute.xlu0 6
    %3358 = vperm.xlu0 %3357, %v1052
    %v3359 = vpop.permute.xlu0 %3358
    %3361 = vset.pattern.permute.xlu0 6
    %3362 = vperm.xlu0 %3361, %v1057
    %v3363 = vpop.permute.xlu0 %3362
    %3365 = vset.pattern.permute.xlu0 6
    %3366 = vperm.xlu0 %3365, %v1062
    %v3367 = vpop.permute.xlu0 %3366
    %v3369 = vmul.f32 %v3115, %v1065
    %v3370 = vmul.f32 %v3119, %v1066
    %v3371 = vmul.f32 %v3123, %v1067
    %v3372 = vmul.f32 %v3127, %v1068
    %v3373 = vmul.f32 %v3131, %v1069
    %v3374 = vmul.f32 %v3135, %v1070
    %v3375 = vmul.f32 %v3139, %v1071
    %v3376 = vmul.f32 %v3143, %v1072
    %v3377 = vmul.f32 %v3147, %v1073
    %v3378 = vmul.f32 %v3151, %v1074
    %v3379 = vmul.f32 %v3155, %v1075
    %v3380 = vmul.f32 %v3159, %v1076
    %v3381 = vmul.f32 %v3163, %v1077
    %v3382 = vmul.f32 %v3167, %v1078
    %v3383 = vmul.f32 %v3171, %v1079
    %v3384 = vmul.f32 %v3175, %v1080
    %v3385 = vmul.f32 %v3179, %v1081
    %v3386 = vmul.f32 %v3183, %v1082
    %v3387 = vmul.f32 %v3187, %v1083
    %v3388 = vmul.f32 %v3191, %v1084
    %v3389 = vmul.f32 %v3195, %v1085
    %v3390 = vmul.f32 %v3199, %v1086
    %v3391 = vmul.f32 %v3203, %v1087
    %v3392 = vmul.f32 %v3207, %v1088
    %v3393 = vmul.f32 %v3211, %v1089
    %v3394 = vmul.f32 %v3215, %v1090
    %v3395 = vmul.f32 %v3219, %v1091
    %v3396 = vmul.f32 %v3223, %v1092
    %v3397 = vmul.f32 %v3227, %v1093
    %v3398 = vmul.f32 %v3231, %v1094
    %v3399 = vmul.f32 %v3235, %v1095
    %v3400 = vmul.f32 %v3239, %v1096
    %v3401 = vmul.f32 %v3243, %v1097
    %v3402 = vmul.f32 %v3247, %v1098
    %v3403 = vmul.f32 %v3251, %v1099
    %v3404 = vmul.f32 %v3255, %v1100
    %v3405 = vmul.f32 %v3259, %v1101
    %v3406 = vmul.f32 %v3263, %v1102
    %v3407 = vmul.f32 %v3267, %v1103
    %v3408 = vmul.f32 %v3271, %v1104
    %v3409 = vmul.f32 %v3275, %v1105
    %v3410 = vmul.f32 %v3279, %v1106
    %v3411 = vmul.f32 %v3283, %v1107
    %v3412 = vmul.f32 %v3287, %v1108
    %v3413 = vmul.f32 %v3291, %v1109
    %v3414 = vmul.f32 %v3295, %v1110
    %v3415 = vmul.f32 %v3299, %v1111
    %v3416 = vmul.f32 %v3303, %v1112
    %v3417 = vmul.f32 %v3307, %v1113
    %v3418 = vmul.f32 %v3311, %v1114
    %v3419 = vmul.f32 %v3315, %v1115
    %v3420 = vmul.f32 %v3319, %v1116
    %v3421 = vmul.f32 %v3323, %v1117
    %v3422 = vmul.f32 %v3327, %v1118
    %v3423 = vmul.f32 %v3331, %v1119
    %v3424 = vmul.f32 %v3335, %v1120
    %v3425 = vmul.f32 %v3339, %v1121
    %v3426 = vmul.f32 %v3343, %v1122
    %v3427 = vmul.f32 %v3347, %v1123
    %v3428 = vmul.f32 %v3351, %v1124
    %v3429 = vmul.f32 %v3355, %v1125
    %v3430 = vmul.f32 %v3359, %v1126
    %v3431 = vmul.f32 %v3363, %v1127
    %v3432 = vmul.f32 %v3367, %v1128
    %3433 = vset.pattern.permute.xlu0 7
    %3434 = vperm.xlu0 %3433, %v747
    %v3435 = vpop.permute.xlu0 %3434
    %3437 = vset.pattern.permute.xlu0 7
    %3438 = vperm.xlu0 %3437, %v752
    %v3439 = vpop.permute.xlu0 %3438
    %3441 = vset.pattern.permute.xlu0 7
    %3442 = vperm.xlu0 %3441, %v757
    %v3443 = vpop.permute.xlu0 %3442
    %3445 = vset.pattern.permute.xlu0 7
    %3446 = vperm.xlu0 %3445, %v762
    %v3447 = vpop.permute.xlu0 %3446
    %3449 = vset.pattern.permute.xlu0 7
    %3450 = vperm.xlu0 %3449, %v767
    %v3451 = vpop.permute.xlu0 %3450
    %3453 = vset.pattern.permute.xlu0 7
    %3454 = vperm.xlu0 %3453, %v772
    %v3455 = vpop.permute.xlu0 %3454
    %3457 = vset.pattern.permute.xlu0 7
    %3458 = vperm.xlu0 %3457, %v777
    %v3459 = vpop.permute.xlu0 %3458
    %3461 = vset.pattern.permute.xlu0 7
    %3462 = vperm.xlu0 %3461, %v782
    %v3463 = vpop.permute.xlu0 %3462
    %3465 = vset.pattern.permute.xlu0 7
    %3466 = vperm.xlu0 %3465, %v787
    %v3467 = vpop.permute.xlu0 %3466
    %3469 = vset.pattern.permute.xlu0 7
    %3470 = vperm.xlu0 %3469, %v792
    %v3471 = vpop.permute.xlu0 %3470
    %3473 = vset.pattern.permute.xlu0 7
    %3474 = vperm.xlu0 %3473, %v797
    %v3475 = vpop.permute.xlu0 %3474
    %3477 = vset.pattern.permute.xlu0 7
    %3478 = vperm.xlu0 %3477, %v802
    %v3479 = vpop.permute.xlu0 %3478
    %3481 = vset.pattern.permute.xlu0 7
    %3482 = vperm.xlu0 %3481, %v807
    %v3483 = vpop.permute.xlu0 %3482
    %3485 = vset.pattern.permute.xlu0 7
    %3486 = vperm.xlu0 %3485, %v812
    %v3487 = vpop.permute.xlu0 %3486
    %3489 = vset.pattern.permute.xlu0 7
    %3490 = vperm.xlu0 %3489, %v817
    %v3491 = vpop.permute.xlu0 %3490
    %3493 = vset.pattern.permute.xlu0 7
    %3494 = vperm.xlu0 %3493, %v822
    %v3495 = vpop.permute.xlu0 %3494
    %3497 = vset.pattern.permute.xlu0 7
    %3498 = vperm.xlu0 %3497, %v827
    %v3499 = vpop.permute.xlu0 %3498
    %3501 = vset.pattern.permute.xlu0 7
    %3502 = vperm.xlu0 %3501, %v832
    %v3503 = vpop.permute.xlu0 %3502
    %3505 = vset.pattern.permute.xlu0 7
    %3506 = vperm.xlu0 %3505, %v837
    %v3507 = vpop.permute.xlu0 %3506
    %3509 = vset.pattern.permute.xlu0 7
    %3510 = vperm.xlu0 %3509, %v842
    %v3511 = vpop.permute.xlu0 %3510
    %3513 = vset.pattern.permute.xlu0 7
    %3514 = vperm.xlu0 %3513, %v847
    %v3515 = vpop.permute.xlu0 %3514
    %3517 = vset.pattern.permute.xlu0 7
    %3518 = vperm.xlu0 %3517, %v852
    %v3519 = vpop.permute.xlu0 %3518
    %3521 = vset.pattern.permute.xlu0 7
    %3522 = vperm.xlu0 %3521, %v857
    %v3523 = vpop.permute.xlu0 %3522
    %3525 = vset.pattern.permute.xlu0 7
    %3526 = vperm.xlu0 %3525, %v862
    %v3527 = vpop.permute.xlu0 %3526
    %3529 = vset.pattern.permute.xlu0 7
    %3530 = vperm.xlu0 %3529, %v867
    %v3531 = vpop.permute.xlu0 %3530
    %3533 = vset.pattern.permute.xlu0 7
    %3534 = vperm.xlu0 %3533, %v872
    %v3535 = vpop.permute.xlu0 %3534
    %3537 = vset.pattern.permute.xlu0 7
    %3538 = vperm.xlu0 %3537, %v877
    %v3539 = vpop.permute.xlu0 %3538
    %3541 = vset.pattern.permute.xlu0 7
    %3542 = vperm.xlu0 %3541, %v882
    %v3543 = vpop.permute.xlu0 %3542
    %3545 = vset.pattern.permute.xlu0 7
    %3546 = vperm.xlu0 %3545, %v887
    %v3547 = vpop.permute.xlu0 %3546
    %3549 = vset.pattern.permute.xlu0 7
    %3550 = vperm.xlu0 %3549, %v892
    %v3551 = vpop.permute.xlu0 %3550
    %3553 = vset.pattern.permute.xlu0 7
    %3554 = vperm.xlu0 %3553, %v897
    %v3555 = vpop.permute.xlu0 %3554
    %3557 = vset.pattern.permute.xlu0 7
    %3558 = vperm.xlu0 %3557, %v902
    %v3559 = vpop.permute.xlu0 %3558
    %3561 = vset.pattern.permute.xlu0 7
    %3562 = vperm.xlu0 %3561, %v907
    %v3563 = vpop.permute.xlu0 %3562
    %3565 = vset.pattern.permute.xlu0 7
    %3566 = vperm.xlu0 %3565, %v912
    %v3567 = vpop.permute.xlu0 %3566
    %3569 = vset.pattern.permute.xlu0 7
    %3570 = vperm.xlu0 %3569, %v917
    %v3571 = vpop.permute.xlu0 %3570
    %3573 = vset.pattern.permute.xlu0 7
    %3574 = vperm.xlu0 %3573, %v922
    %v3575 = vpop.permute.xlu0 %3574
    %3577 = vset.pattern.permute.xlu0 7
    %3578 = vperm.xlu0 %3577, %v927
    %v3579 = vpop.permute.xlu0 %3578
    %3581 = vset.pattern.permute.xlu0 7
    %3582 = vperm.xlu0 %3581, %v932
    %v3583 = vpop.permute.xlu0 %3582
    %3585 = vset.pattern.permute.xlu0 7
    %3586 = vperm.xlu0 %3585, %v937
    %v3587 = vpop.permute.xlu0 %3586
    %3589 = vset.pattern.permute.xlu0 7
    %3590 = vperm.xlu0 %3589, %v942
    %v3591 = vpop.permute.xlu0 %3590
    %3593 = vset.pattern.permute.xlu0 7
    %3594 = vperm.xlu0 %3593, %v947
    %v3595 = vpop.permute.xlu0 %3594
    %3597 = vset.pattern.permute.xlu0 7
    %3598 = vperm.xlu0 %3597, %v952
    %v3599 = vpop.permute.xlu0 %3598
    %3601 = vset.pattern.permute.xlu0 7
    %3602 = vperm.xlu0 %3601, %v957
    %v3603 = vpop.permute.xlu0 %3602
    %3605 = vset.pattern.permute.xlu0 7
    %3606 = vperm.xlu0 %3605, %v962
    %v3607 = vpop.permute.xlu0 %3606
    %3609 = vset.pattern.permute.xlu0 7
    %3610 = vperm.xlu0 %3609, %v967
    %v3611 = vpop.permute.xlu0 %3610
    %3613 = vset.pattern.permute.xlu0 7
    %3614 = vperm.xlu0 %3613, %v972
    %v3615 = vpop.permute.xlu0 %3614
    %3617 = vset.pattern.permute.xlu0 7
    %3618 = vperm.xlu0 %3617, %v977
    %v3619 = vpop.permute.xlu0 %3618
    %3621 = vset.pattern.permute.xlu0 7
    %3622 = vperm.xlu0 %3621, %v982
    %v3623 = vpop.permute.xlu0 %3622
    %3625 = vset.pattern.permute.xlu0 7
    %3626 = vperm.xlu0 %3625, %v987
    %v3627 = vpop.permute.xlu0 %3626
    %3629 = vset.pattern.permute.xlu0 7
    %3630 = vperm.xlu0 %3629, %v992
    %v3631 = vpop.permute.xlu0 %3630
    %3633 = vset.pattern.permute.xlu0 7
    %3634 = vperm.xlu0 %3633, %v997
    %v3635 = vpop.permute.xlu0 %3634
    %3637 = vset.pattern.permute.xlu0 7
    %3638 = vperm.xlu0 %3637, %v1002
    %v3639 = vpop.permute.xlu0 %3638
    %3641 = vset.pattern.permute.xlu0 7
    %3642 = vperm.xlu0 %3641, %v1007
    %v3643 = vpop.permute.xlu0 %3642
    %3645 = vset.pattern.permute.xlu0 7
    %3646 = vperm.xlu0 %3645, %v1012
    %v3647 = vpop.permute.xlu0 %3646
    %3649 = vset.pattern.permute.xlu0 7
    %3650 = vperm.xlu0 %3649, %v1017
    %v3651 = vpop.permute.xlu0 %3650
    %3653 = vset.pattern.permute.xlu0 7
    %3654 = vperm.xlu0 %3653, %v1022
    %v3655 = vpop.permute.xlu0 %3654
    %3657 = vset.pattern.permute.xlu0 7
    %3658 = vperm.xlu0 %3657, %v1027
    %v3659 = vpop.permute.xlu0 %3658
    %3661 = vset.pattern.permute.xlu0 7
    %3662 = vperm.xlu0 %3661, %v1032
    %v3663 = vpop.permute.xlu0 %3662
    %3665 = vset.pattern.permute.xlu0 7
    %3666 = vperm.xlu0 %3665, %v1037
    %v3667 = vpop.permute.xlu0 %3666
    %3669 = vset.pattern.permute.xlu0 7
    %3670 = vperm.xlu0 %3669, %v1042
    %v3671 = vpop.permute.xlu0 %3670
    %3673 = vset.pattern.permute.xlu0 7
    %3674 = vperm.xlu0 %3673, %v1047
    %v3675 = vpop.permute.xlu0 %3674
    %3677 = vset.pattern.permute.xlu0 7
    %3678 = vperm.xlu0 %3677, %v1052
    %v3679 = vpop.permute.xlu0 %3678
    %3681 = vset.pattern.permute.xlu0 7
    %3682 = vperm.xlu0 %3681, %v1057
    %v3683 = vpop.permute.xlu0 %3682
    %3685 = vset.pattern.permute.xlu0 7
    %3686 = vperm.xlu0 %3685, %v1062
    %v3687 = vpop.permute.xlu0 %3686
    %v3689 = vmul.f32 %v3435, %v1065
    %v3690 = vmul.f32 %v3439, %v1066
    %v3691 = vmul.f32 %v3443, %v1067
    %v3692 = vmul.f32 %v3447, %v1068
    %v3693 = vmul.f32 %v3451, %v1069
    %v3694 = vmul.f32 %v3455, %v1070
    %v3695 = vmul.f32 %v3459, %v1071
    %v3696 = vmul.f32 %v3463, %v1072
    %v3697 = vmul.f32 %v3467, %v1073
    %v3698 = vmul.f32 %v3471, %v1074
    %v3699 = vmul.f32 %v3475, %v1075
    %v3700 = vmul.f32 %v3479, %v1076
    %v3701 = vmul.f32 %v3483, %v1077
    %v3702 = vmul.f32 %v3487, %v1078
    %v3703 = vmul.f32 %v3491, %v1079
    %v3704 = vmul.f32 %v3495, %v1080
    %v3705 = vmul.f32 %v3499, %v1081
    %v3706 = vmul.f32 %v3503, %v1082
    %v3707 = vmul.f32 %v3507, %v1083
    %v3708 = vmul.f32 %v3511, %v1084
    %v3709 = vmul.f32 %v3515, %v1085
    %v3710 = vmul.f32 %v3519, %v1086
    %v3711 = vmul.f32 %v3523, %v1087
    %v3712 = vmul.f32 %v3527, %v1088
    %v3713 = vmul.f32 %v3531, %v1089
    %v3714 = vmul.f32 %v3535, %v1090
    %v3715 = vmul.f32 %v3539, %v1091
    %v3716 = vmul.f32 %v3543, %v1092
    %v3717 = vmul.f32 %v3547, %v1093
    %v3718 = vmul.f32 %v3551, %v1094
    %v3719 = vmul.f32 %v3555, %v1095
    %v3720 = vmul.f32 %v3559, %v1096
    %v3721 = vmul.f32 %v3563, %v1097
    %v3722 = vmul.f32 %v3567, %v1098
    %v3723 = vmul.f32 %v3571, %v1099
    %v3724 = vmul.f32 %v3575, %v1100
    %v3725 = vmul.f32 %v3579, %v1101
    %v3726 = vmul.f32 %v3583, %v1102
    %v3727 = vmul.f32 %v3587, %v1103
    %v3728 = vmul.f32 %v3591, %v1104
    %v3729 = vmul.f32 %v3595, %v1105
    %v3730 = vmul.f32 %v3599, %v1106
    %v3731 = vmul.f32 %v3603, %v1107
    %v3732 = vmul.f32 %v3607, %v1108
    %v3733 = vmul.f32 %v3611, %v1109
    %v3734 = vmul.f32 %v3615, %v1110
    %v3735 = vmul.f32 %v3619, %v1111
    %v3736 = vmul.f32 %v3623, %v1112
    %v3737 = vmul.f32 %v3627, %v1113
    %v3738 = vmul.f32 %v3631, %v1114
    %v3739 = vmul.f32 %v3635, %v1115
    %v3740 = vmul.f32 %v3639, %v1116
    %v3741 = vmul.f32 %v3643, %v1117
    %v3742 = vmul.f32 %v3647, %v1118
    %v3743 = vmul.f32 %v3651, %v1119
    %v3744 = vmul.f32 %v3655, %v1120
    %v3745 = vmul.f32 %v3659, %v1121
    %v3746 = vmul.f32 %v3663, %v1122
    %v3747 = vmul.f32 %v3667, %v1123
    %v3748 = vmul.f32 %v3671, %v1124
    %v3749 = vmul.f32 %v3675, %v1125
    %v3750 = vmul.f32 %v3679, %v1126
    %v3751 = vmul.f32 %v3683, %v1127
    %v3752 = vmul.f32 %v3687, %v1128
    %3817 = vrot.lane.b32.xlu0 %v1769, 8
    %v3818 = vpop.permute.xlu0 %3817
    %3819 = vrot.lane.b32.xlu0 %v1770, 8
    %v3820 = vpop.permute.xlu0 %3819
    %3821 = vrot.lane.b32.xlu0 %v1771, 8
    %v3822 = vpop.permute.xlu0 %3821
    %3823 = vrot.lane.b32.xlu0 %v1772, 8
    %v3824 = vpop.permute.xlu0 %3823
    %3825 = vrot.lane.b32.xlu0 %v1773, 8
    %v3826 = vpop.permute.xlu0 %3825
    %3827 = vrot.lane.b32.xlu0 %v1774, 8
    %v3828 = vpop.permute.xlu0 %3827
    %3829 = vrot.lane.b32.xlu0 %v1775, 8
    %v3830 = vpop.permute.xlu0 %3829
    %3831 = vrot.lane.b32.xlu0 %v1776, 8
    %v3832 = vpop.permute.xlu0 %3831
    %3833 = vrot.lane.b32.xlu0 %v1777, 8
    %v3834 = vpop.permute.xlu0 %3833
    %3835 = vrot.lane.b32.xlu0 %v1778, 8
    %v3836 = vpop.permute.xlu0 %3835
    %3837 = vrot.lane.b32.xlu0 %v1779, 8
    %v3838 = vpop.permute.xlu0 %3837
    %3839 = vrot.lane.b32.xlu0 %v1780, 8
    %v3840 = vpop.permute.xlu0 %3839
    %3841 = vrot.lane.b32.xlu0 %v1781, 8
    %v3842 = vpop.permute.xlu0 %3841
    %3843 = vrot.lane.b32.xlu0 %v1782, 8
    %v3844 = vpop.permute.xlu0 %3843
    %3845 = vrot.lane.b32.xlu0 %v1783, 8
    %v3846 = vpop.permute.xlu0 %3845
    %3847 = vrot.lane.b32.xlu0 %v1784, 8
    %v3848 = vpop.permute.xlu0 %3847
    %3849 = vrot.lane.b32.xlu0 %v1785, 8
    %v3850 = vpop.permute.xlu0 %3849
    %3851 = vrot.lane.b32.xlu0 %v1786, 8
    %v3852 = vpop.permute.xlu0 %3851
    %3853 = vrot.lane.b32.xlu0 %v1787, 8
    %v3854 = vpop.permute.xlu0 %3853
    %3855 = vrot.lane.b32.xlu0 %v1788, 8
    %v3856 = vpop.permute.xlu0 %3855
    %3857 = vrot.lane.b32.xlu0 %v1789, 8
    %v3858 = vpop.permute.xlu0 %3857
    %3859 = vrot.lane.b32.xlu0 %v1790, 8
    %v3860 = vpop.permute.xlu0 %3859
    %3861 = vrot.lane.b32.xlu0 %v1791, 8
    %v3862 = vpop.permute.xlu0 %3861
    %3863 = vrot.lane.b32.xlu0 %v1792, 8
    %v3864 = vpop.permute.xlu0 %3863
    %3865 = vrot.lane.b32.xlu0 %v1793, 8
    %v3866 = vpop.permute.xlu0 %3865
    %3867 = vrot.lane.b32.xlu0 %v1794, 8
    %v3868 = vpop.permute.xlu0 %3867
    %3869 = vrot.lane.b32.xlu0 %v1795, 8
    %v3870 = vpop.permute.xlu0 %3869
    %3871 = vrot.lane.b32.xlu0 %v1796, 8
    %v3872 = vpop.permute.xlu0 %3871
    %3873 = vrot.lane.b32.xlu0 %v1797, 8
    %v3874 = vpop.permute.xlu0 %3873
    %3875 = vrot.lane.b32.xlu0 %v1798, 8
    %v3876 = vpop.permute.xlu0 %3875
    %3877 = vrot.lane.b32.xlu0 %v1799, 8
    %v3878 = vpop.permute.xlu0 %3877
    %3879 = vrot.lane.b32.xlu0 %v1800, 8
    %v3880 = vpop.permute.xlu0 %3879
    %3881 = vrot.lane.b32.xlu0 %v1801, 8
    %v3882 = vpop.permute.xlu0 %3881
    %3883 = vrot.lane.b32.xlu0 %v1802, 8
    %v3884 = vpop.permute.xlu0 %3883
    %3885 = vrot.lane.b32.xlu0 %v1803, 8
    %v3886 = vpop.permute.xlu0 %3885
    %3887 = vrot.lane.b32.xlu0 %v1804, 8
    %v3888 = vpop.permute.xlu0 %3887
    %3889 = vrot.lane.b32.xlu0 %v1805, 8
    %v3890 = vpop.permute.xlu0 %3889
    %3891 = vrot.lane.b32.xlu0 %v1806, 8
    %v3892 = vpop.permute.xlu0 %3891
    %3893 = vrot.lane.b32.xlu0 %v1807, 8
    %v3894 = vpop.permute.xlu0 %3893
    %3895 = vrot.lane.b32.xlu0 %v1808, 8
    %v3896 = vpop.permute.xlu0 %3895
    %3897 = vrot.lane.b32.xlu0 %v1809, 8
    %v3898 = vpop.permute.xlu0 %3897
    %3899 = vrot.lane.b32.xlu0 %v1810, 8
    %v3900 = vpop.permute.xlu0 %3899
    %3901 = vrot.lane.b32.xlu0 %v1811, 8
    %v3902 = vpop.permute.xlu0 %3901
    %3903 = vrot.lane.b32.xlu0 %v1812, 8
    %v3904 = vpop.permute.xlu0 %3903
    %3905 = vrot.lane.b32.xlu0 %v1813, 8
    %v3906 = vpop.permute.xlu0 %3905
    %3907 = vrot.lane.b32.xlu0 %v1814, 8
    %v3908 = vpop.permute.xlu0 %3907
    %3909 = vrot.lane.b32.xlu0 %v1815, 8
    %v3910 = vpop.permute.xlu0 %3909
    %3911 = vrot.lane.b32.xlu0 %v1816, 8
    %v3912 = vpop.permute.xlu0 %3911
    %3913 = vrot.lane.b32.xlu0 %v1817, 8
    %v3914 = vpop.permute.xlu0 %3913
    %3915 = vrot.lane.b32.xlu0 %v1818, 8
    %v3916 = vpop.permute.xlu0 %3915
    %3917 = vrot.lane.b32.xlu0 %v1819, 8
    %v3918 = vpop.permute.xlu0 %3917
    %3919 = vrot.lane.b32.xlu0 %v1820, 8
    %v3920 = vpop.permute.xlu0 %3919
    %3921 = vrot.lane.b32.xlu0 %v1821, 8
    %v3922 = vpop.permute.xlu0 %3921
    %3923 = vrot.lane.b32.xlu0 %v1822, 8
    %v3924 = vpop.permute.xlu0 %3923
    %3925 = vrot.lane.b32.xlu0 %v1823, 8
    %v3926 = vpop.permute.xlu0 %3925
    %3927 = vrot.lane.b32.xlu0 %v1824, 8
    %v3928 = vpop.permute.xlu0 %3927
    %3929 = vrot.lane.b32.xlu0 %v1825, 8
    %v3930 = vpop.permute.xlu0 %3929
    %3931 = vrot.lane.b32.xlu0 %v1826, 8
    %v3932 = vpop.permute.xlu0 %3931
    %3933 = vrot.lane.b32.xlu0 %v1827, 8
    %v3934 = vpop.permute.xlu0 %3933
    %3935 = vrot.lane.b32.xlu0 %v1828, 8
    %v3936 = vpop.permute.xlu0 %3935
    %3937 = vrot.lane.b32.xlu0 %v1829, 8
    %v3938 = vpop.permute.xlu0 %3937
    %3939 = vrot.lane.b32.xlu0 %v1830, 8
    %v3940 = vpop.permute.xlu0 %3939
    %3941 = vrot.lane.b32.xlu0 %v1831, 8
    %v3942 = vpop.permute.xlu0 %3941
    %3943 = vrot.lane.b32.xlu0 %v1832, 8
    %v3944 = vpop.permute.xlu0 %3943
    %4073 = vrot.lane.b32.xlu0 %v2089, 16
    %v4074 = vpop.permute.xlu0 %4073
    %4075 = vrot.lane.b32.xlu0 %v2090, 16
    %v4076 = vpop.permute.xlu0 %4075
    %4077 = vrot.lane.b32.xlu0 %v2091, 16
    %v4078 = vpop.permute.xlu0 %4077
    %4079 = vrot.lane.b32.xlu0 %v2092, 16
    %v4080 = vpop.permute.xlu0 %4079
    %4081 = vrot.lane.b32.xlu0 %v2093, 16
    %v4082 = vpop.permute.xlu0 %4081
    %4083 = vrot.lane.b32.xlu0 %v2094, 16
    %v4084 = vpop.permute.xlu0 %4083
    %4085 = vrot.lane.b32.xlu0 %v2095, 16
    %v4086 = vpop.permute.xlu0 %4085
    %4087 = vrot.lane.b32.xlu0 %v2096, 16
    %v4088 = vpop.permute.xlu0 %4087
    %4089 = vrot.lane.b32.xlu0 %v2097, 16
    %v4090 = vpop.permute.xlu0 %4089
    %4091 = vrot.lane.b32.xlu0 %v2098, 16
    %v4092 = vpop.permute.xlu0 %4091
    %4093 = vrot.lane.b32.xlu0 %v2099, 16
    %v4094 = vpop.permute.xlu0 %4093
    %4095 = vrot.lane.b32.xlu0 %v2100, 16
    %v4096 = vpop.permute.xlu0 %4095
    %4097 = vrot.lane.b32.xlu0 %v2101, 16
    %v4098 = vpop.permute.xlu0 %4097
    %4099 = vrot.lane.b32.xlu0 %v2102, 16
    %v4100 = vpop.permute.xlu0 %4099
    %4101 = vrot.lane.b32.xlu0 %v2103, 16
    %v4102 = vpop.permute.xlu0 %4101
    %4103 = vrot.lane.b32.xlu0 %v2104, 16
    %v4104 = vpop.permute.xlu0 %4103
    %4105 = vrot.lane.b32.xlu0 %v2105, 16
    %v4106 = vpop.permute.xlu0 %4105
    %4107 = vrot.lane.b32.xlu0 %v2106, 16
    %v4108 = vpop.permute.xlu0 %4107
    %4109 = vrot.lane.b32.xlu0 %v2107, 16
    %v4110 = vpop.permute.xlu0 %4109
    %4111 = vrot.lane.b32.xlu0 %v2108, 16
    %v4112 = vpop.permute.xlu0 %4111
    %4113 = vrot.lane.b32.xlu0 %v2109, 16
    %v4114 = vpop.permute.xlu0 %4113
    %4115 = vrot.lane.b32.xlu0 %v2110, 16
    %v4116 = vpop.permute.xlu0 %4115
    %4117 = vrot.lane.b32.xlu0 %v2111, 16
    %v4118 = vpop.permute.xlu0 %4117
    %4119 = vrot.lane.b32.xlu0 %v2112, 16
    %v4120 = vpop.permute.xlu0 %4119
    %4121 = vrot.lane.b32.xlu0 %v2113, 16
    %v4122 = vpop.permute.xlu0 %4121
    %4123 = vrot.lane.b32.xlu0 %v2114, 16
    %v4124 = vpop.permute.xlu0 %4123
    %4125 = vrot.lane.b32.xlu0 %v2115, 16
    %v4126 = vpop.permute.xlu0 %4125
    %4127 = vrot.lane.b32.xlu0 %v2116, 16
    %v4128 = vpop.permute.xlu0 %4127
    %4129 = vrot.lane.b32.xlu0 %v2117, 16
    %v4130 = vpop.permute.xlu0 %4129
    %4131 = vrot.lane.b32.xlu0 %v2118, 16
    %v4132 = vpop.permute.xlu0 %4131
    %4133 = vrot.lane.b32.xlu0 %v2119, 16
    %v4134 = vpop.permute.xlu0 %4133
    %4135 = vrot.lane.b32.xlu0 %v2120, 16
    %v4136 = vpop.permute.xlu0 %4135
    %4137 = vrot.lane.b32.xlu0 %v2121, 16
    %v4138 = vpop.permute.xlu0 %4137
    %4139 = vrot.lane.b32.xlu0 %v2122, 16
    %v4140 = vpop.permute.xlu0 %4139
    %4141 = vrot.lane.b32.xlu0 %v2123, 16
    %v4142 = vpop.permute.xlu0 %4141
    %4143 = vrot.lane.b32.xlu0 %v2124, 16
    %v4144 = vpop.permute.xlu0 %4143
    %4145 = vrot.lane.b32.xlu0 %v2125, 16
    %v4146 = vpop.permute.xlu0 %4145
    %4147 = vrot.lane.b32.xlu0 %v2126, 16
    %v4148 = vpop.permute.xlu0 %4147
    %4149 = vrot.lane.b32.xlu0 %v2127, 16
    %v4150 = vpop.permute.xlu0 %4149
    %4151 = vrot.lane.b32.xlu0 %v2128, 16
    %v4152 = vpop.permute.xlu0 %4151
    %4153 = vrot.lane.b32.xlu0 %v2129, 16
    %v4154 = vpop.permute.xlu0 %4153
    %4155 = vrot.lane.b32.xlu0 %v2130, 16
    %v4156 = vpop.permute.xlu0 %4155
    %4157 = vrot.lane.b32.xlu0 %v2131, 16
    %v4158 = vpop.permute.xlu0 %4157
    %4159 = vrot.lane.b32.xlu0 %v2132, 16
    %v4160 = vpop.permute.xlu0 %4159
    %4161 = vrot.lane.b32.xlu0 %v2133, 16
    %v4162 = vpop.permute.xlu0 %4161
    %4163 = vrot.lane.b32.xlu0 %v2134, 16
    %v4164 = vpop.permute.xlu0 %4163
    %4165 = vrot.lane.b32.xlu0 %v2135, 16
    %v4166 = vpop.permute.xlu0 %4165
    %4167 = vrot.lane.b32.xlu0 %v2136, 16
    %v4168 = vpop.permute.xlu0 %4167
    %4169 = vrot.lane.b32.xlu0 %v2137, 16
    %v4170 = vpop.permute.xlu0 %4169
    %4171 = vrot.lane.b32.xlu0 %v2138, 16
    %v4172 = vpop.permute.xlu0 %4171
    %4173 = vrot.lane.b32.xlu0 %v2139, 16
    %v4174 = vpop.permute.xlu0 %4173
    %4175 = vrot.lane.b32.xlu0 %v2140, 16
    %v4176 = vpop.permute.xlu0 %4175
    %4177 = vrot.lane.b32.xlu0 %v2141, 16
    %v4178 = vpop.permute.xlu0 %4177
    %4179 = vrot.lane.b32.xlu0 %v2142, 16
    %v4180 = vpop.permute.xlu0 %4179
    %4181 = vrot.lane.b32.xlu0 %v2143, 16
    %v4182 = vpop.permute.xlu0 %4181
    %4183 = vrot.lane.b32.xlu0 %v2144, 16
    %v4184 = vpop.permute.xlu0 %4183
    %4185 = vrot.lane.b32.xlu0 %v2145, 16
    %v4186 = vpop.permute.xlu0 %4185
    %4187 = vrot.lane.b32.xlu0 %v2146, 16
    %v4188 = vpop.permute.xlu0 %4187
    %4189 = vrot.lane.b32.xlu0 %v2147, 16
    %v4190 = vpop.permute.xlu0 %4189
    %4191 = vrot.lane.b32.xlu0 %v2148, 16
    %v4192 = vpop.permute.xlu0 %4191
    %4193 = vrot.lane.b32.xlu0 %v2149, 16
    %v4194 = vpop.permute.xlu0 %4193
    %4195 = vrot.lane.b32.xlu0 %v2150, 16
    %v4196 = vpop.permute.xlu0 %4195
    %4197 = vrot.lane.b32.xlu0 %v2151, 16
    %v4198 = vpop.permute.xlu0 %4197
    %4199 = vrot.lane.b32.xlu0 %v2152, 16
    %v4200 = vpop.permute.xlu0 %4199
    %4329 = vrot.lane.b32.xlu0 %v2409, 24
    %v4330 = vpop.permute.xlu0 %4329
    %4331 = vrot.lane.b32.xlu0 %v2410, 24
    %v4332 = vpop.permute.xlu0 %4331
    %4333 = vrot.lane.b32.xlu0 %v2411, 24
    %v4334 = vpop.permute.xlu0 %4333
    %4335 = vrot.lane.b32.xlu0 %v2412, 24
    %v4336 = vpop.permute.xlu0 %4335
    %4337 = vrot.lane.b32.xlu0 %v2413, 24
    %v4338 = vpop.permute.xlu0 %4337
    %4339 = vrot.lane.b32.xlu0 %v2414, 24
    %v4340 = vpop.permute.xlu0 %4339
    %4341 = vrot.lane.b32.xlu0 %v2415, 24
    %v4342 = vpop.permute.xlu0 %4341
    %4343 = vrot.lane.b32.xlu0 %v2416, 24
    %v4344 = vpop.permute.xlu0 %4343
    %4345 = vrot.lane.b32.xlu0 %v2417, 24
    %v4346 = vpop.permute.xlu0 %4345
    %4347 = vrot.lane.b32.xlu0 %v2418, 24
    %v4348 = vpop.permute.xlu0 %4347
    %4349 = vrot.lane.b32.xlu0 %v2419, 24
    %v4350 = vpop.permute.xlu0 %4349
    %4351 = vrot.lane.b32.xlu0 %v2420, 24
    %v4352 = vpop.permute.xlu0 %4351
    %4353 = vrot.lane.b32.xlu0 %v2421, 24
    %v4354 = vpop.permute.xlu0 %4353
    %4355 = vrot.lane.b32.xlu0 %v2422, 24
    %v4356 = vpop.permute.xlu0 %4355
    %4357 = vrot.lane.b32.xlu0 %v2423, 24
    %v4358 = vpop.permute.xlu0 %4357
    %4359 = vrot.lane.b32.xlu0 %v2424, 24
    %v4360 = vpop.permute.xlu0 %4359
    %4361 = vrot.lane.b32.xlu0 %v2425, 24
    %v4362 = vpop.permute.xlu0 %4361
    %4363 = vrot.lane.b32.xlu0 %v2426, 24
    %v4364 = vpop.permute.xlu0 %4363
    %4365 = vrot.lane.b32.xlu0 %v2427, 24
    %v4366 = vpop.permute.xlu0 %4365
    %4367 = vrot.lane.b32.xlu0 %v2428, 24
    %v4368 = vpop.permute.xlu0 %4367
    %4369 = vrot.lane.b32.xlu0 %v2429, 24
    %v4370 = vpop.permute.xlu0 %4369
    %4371 = vrot.lane.b32.xlu0 %v2430, 24
    %v4372 = vpop.permute.xlu0 %4371
    %4373 = vrot.lane.b32.xlu0 %v2431, 24
    %v4374 = vpop.permute.xlu0 %4373
    %4375 = vrot.lane.b32.xlu0 %v2432, 24
    %v4376 = vpop.permute.xlu0 %4375
    %4377 = vrot.lane.b32.xlu0 %v2433, 24
    %v4378 = vpop.permute.xlu0 %4377
    %4379 = vrot.lane.b32.xlu0 %v2434, 24
    %v4380 = vpop.permute.xlu0 %4379
    %4381 = vrot.lane.b32.xlu0 %v2435, 24
    %v4382 = vpop.permute.xlu0 %4381
    %4383 = vrot.lane.b32.xlu0 %v2436, 24
    %v4384 = vpop.permute.xlu0 %4383
    %4385 = vrot.lane.b32.xlu0 %v2437, 24
    %v4386 = vpop.permute.xlu0 %4385
    %4387 = vrot.lane.b32.xlu0 %v2438, 24
    %v4388 = vpop.permute.xlu0 %4387
    %4389 = vrot.lane.b32.xlu0 %v2439, 24
    %v4390 = vpop.permute.xlu0 %4389
    %4391 = vrot.lane.b32.xlu0 %v2440, 24
    %v4392 = vpop.permute.xlu0 %4391
    %4393 = vrot.lane.b32.xlu0 %v2441, 24
    %v4394 = vpop.permute.xlu0 %4393
    %4395 = vrot.lane.b32.xlu0 %v2442, 24
    %v4396 = vpop.permute.xlu0 %4395
    %4397 = vrot.lane.b32.xlu0 %v2443, 24
    %v4398 = vpop.permute.xlu0 %4397
    %4399 = vrot.lane.b32.xlu0 %v2444, 24
    %v4400 = vpop.permute.xlu0 %4399
    %4401 = vrot.lane.b32.xlu0 %v2445, 24
    %v4402 = vpop.permute.xlu0 %4401
    %4403 = vrot.lane.b32.xlu0 %v2446, 24
    %v4404 = vpop.permute.xlu0 %4403
    %4405 = vrot.lane.b32.xlu0 %v2447, 24
    %v4406 = vpop.permute.xlu0 %4405
    %4407 = vrot.lane.b32.xlu0 %v2448, 24
    %v4408 = vpop.permute.xlu0 %4407
    %4409 = vrot.lane.b32.xlu0 %v2449, 24
    %v4410 = vpop.permute.xlu0 %4409
    %4411 = vrot.lane.b32.xlu0 %v2450, 24
    %v4412 = vpop.permute.xlu0 %4411
    %4413 = vrot.lane.b32.xlu0 %v2451, 24
    %v4414 = vpop.permute.xlu0 %4413
    %4415 = vrot.lane.b32.xlu0 %v2452, 24
    %v4416 = vpop.permute.xlu0 %4415
    %4417 = vrot.lane.b32.xlu0 %v2453, 24
    %v4418 = vpop.permute.xlu0 %4417
    %4419 = vrot.lane.b32.xlu0 %v2454, 24
    %v4420 = vpop.permute.xlu0 %4419
    %4421 = vrot.lane.b32.xlu0 %v2455, 24
    %v4422 = vpop.permute.xlu0 %4421
    %4423 = vrot.lane.b32.xlu0 %v2456, 24
    %v4424 = vpop.permute.xlu0 %4423
    %4425 = vrot.lane.b32.xlu0 %v2457, 24
    %v4426 = vpop.permute.xlu0 %4425
    %4427 = vrot.lane.b32.xlu0 %v2458, 24
    %v4428 = vpop.permute.xlu0 %4427
    %4429 = vrot.lane.b32.xlu0 %v2459, 24
    %v4430 = vpop.permute.xlu0 %4429
    %4431 = vrot.lane.b32.xlu0 %v2460, 24
    %v4432 = vpop.permute.xlu0 %4431
    %4433 = vrot.lane.b32.xlu0 %v2461, 24
    %v4434 = vpop.permute.xlu0 %4433
    %4435 = vrot.lane.b32.xlu0 %v2462, 24
    %v4436 = vpop.permute.xlu0 %4435
    %4437 = vrot.lane.b32.xlu0 %v2463, 24
    %v4438 = vpop.permute.xlu0 %4437
    %4439 = vrot.lane.b32.xlu0 %v2464, 24
    %v4440 = vpop.permute.xlu0 %4439
    %4441 = vrot.lane.b32.xlu0 %v2465, 24
    %v4442 = vpop.permute.xlu0 %4441
    %4443 = vrot.lane.b32.xlu0 %v2466, 24
    %v4444 = vpop.permute.xlu0 %4443
    %4445 = vrot.lane.b32.xlu0 %v2467, 24
    %v4446 = vpop.permute.xlu0 %4445
    %4447 = vrot.lane.b32.xlu0 %v2468, 24
    %v4448 = vpop.permute.xlu0 %4447
    %4449 = vrot.lane.b32.xlu0 %v2469, 24
    %v4450 = vpop.permute.xlu0 %4449
    %4451 = vrot.lane.b32.xlu0 %v2470, 24
    %v4452 = vpop.permute.xlu0 %4451
    %4453 = vrot.lane.b32.xlu0 %v2471, 24
    %v4454 = vpop.permute.xlu0 %4453
    %4455 = vrot.lane.b32.xlu0 %v2472, 24
    %v4456 = vpop.permute.xlu0 %4455
    %4585 = vrot.lane.b32.xlu0 %v2729, 32
    %v4586 = vpop.permute.xlu0 %4585
    %4587 = vrot.lane.b32.xlu0 %v2730, 32
    %v4588 = vpop.permute.xlu0 %4587
    %4589 = vrot.lane.b32.xlu0 %v2731, 32
    %v4590 = vpop.permute.xlu0 %4589
    %4591 = vrot.lane.b32.xlu0 %v2732, 32
    %v4592 = vpop.permute.xlu0 %4591
    %4593 = vrot.lane.b32.xlu0 %v2733, 32
    %v4594 = vpop.permute.xlu0 %4593
    %4595 = vrot.lane.b32.xlu0 %v2734, 32
    %v4596 = vpop.permute.xlu0 %4595
    %4597 = vrot.lane.b32.xlu0 %v2735, 32
    %v4598 = vpop.permute.xlu0 %4597
    %4599 = vrot.lane.b32.xlu0 %v2736, 32
    %v4600 = vpop.permute.xlu0 %4599
    %4601 = vrot.lane.b32.xlu0 %v2737, 32
    %v4602 = vpop.permute.xlu0 %4601
    %4603 = vrot.lane.b32.xlu0 %v2738, 32
    %v4604 = vpop.permute.xlu0 %4603
    %4605 = vrot.lane.b32.xlu0 %v2739, 32
    %v4606 = vpop.permute.xlu0 %4605
    %4607 = vrot.lane.b32.xlu0 %v2740, 32
    %v4608 = vpop.permute.xlu0 %4607
    %4609 = vrot.lane.b32.xlu0 %v2741, 32
    %v4610 = vpop.permute.xlu0 %4609
    %4611 = vrot.lane.b32.xlu0 %v2742, 32
    %v4612 = vpop.permute.xlu0 %4611
    %4613 = vrot.lane.b32.xlu0 %v2743, 32
    %v4614 = vpop.permute.xlu0 %4613
    %4615 = vrot.lane.b32.xlu0 %v2744, 32
    %v4616 = vpop.permute.xlu0 %4615
    %4617 = vrot.lane.b32.xlu0 %v2745, 32
    %v4618 = vpop.permute.xlu0 %4617
    %4619 = vrot.lane.b32.xlu0 %v2746, 32
    %v4620 = vpop.permute.xlu0 %4619
    %4621 = vrot.lane.b32.xlu0 %v2747, 32
    %v4622 = vpop.permute.xlu0 %4621
    %4623 = vrot.lane.b32.xlu0 %v2748, 32
    %v4624 = vpop.permute.xlu0 %4623
    %4625 = vrot.lane.b32.xlu0 %v2749, 32
    %v4626 = vpop.permute.xlu0 %4625
    %4627 = vrot.lane.b32.xlu0 %v2750, 32
    %v4628 = vpop.permute.xlu0 %4627
    %4629 = vrot.lane.b32.xlu0 %v2751, 32
    %v4630 = vpop.permute.xlu0 %4629
    %4631 = vrot.lane.b32.xlu0 %v2752, 32
    %v4632 = vpop.permute.xlu0 %4631
    %4633 = vrot.lane.b32.xlu0 %v2753, 32
    %v4634 = vpop.permute.xlu0 %4633
    %4635 = vrot.lane.b32.xlu0 %v2754, 32
    %v4636 = vpop.permute.xlu0 %4635
    %4637 = vrot.lane.b32.xlu0 %v2755, 32
    %v4638 = vpop.permute.xlu0 %4637
    %4639 = vrot.lane.b32.xlu0 %v2756, 32
    %v4640 = vpop.permute.xlu0 %4639
    %4641 = vrot.lane.b32.xlu0 %v2757, 32
    %v4642 = vpop.permute.xlu0 %4641
    %4643 = vrot.lane.b32.xlu0 %v2758, 32
    %v4644 = vpop.permute.xlu0 %4643
    %4645 = vrot.lane.b32.xlu0 %v2759, 32
    %v4646 = vpop.permute.xlu0 %4645
    %4647 = vrot.lane.b32.xlu0 %v2760, 32
    %v4648 = vpop.permute.xlu0 %4647
    %4649 = vrot.lane.b32.xlu0 %v2761, 32
    %v4650 = vpop.permute.xlu0 %4649
    %4651 = vrot.lane.b32.xlu0 %v2762, 32
    %v4652 = vpop.permute.xlu0 %4651
    %4653 = vrot.lane.b32.xlu0 %v2763, 32
    %v4654 = vpop.permute.xlu0 %4653
    %4655 = vrot.lane.b32.xlu0 %v2764, 32
    %v4656 = vpop.permute.xlu0 %4655
    %4657 = vrot.lane.b32.xlu0 %v2765, 32
    %v4658 = vpop.permute.xlu0 %4657
    %4659 = vrot.lane.b32.xlu0 %v2766, 32
    %v4660 = vpop.permute.xlu0 %4659
    %4661 = vrot.lane.b32.xlu0 %v2767, 32
    %v4662 = vpop.permute.xlu0 %4661
    %4663 = vrot.lane.b32.xlu0 %v2768, 32
    %v4664 = vpop.permute.xlu0 %4663
    %4665 = vrot.lane.b32.xlu0 %v2769, 32
    %v4666 = vpop.permute.xlu0 %4665
    %4667 = vrot.lane.b32.xlu0 %v2770, 32
    %v4668 = vpop.permute.xlu0 %4667
    %4669 = vrot.lane.b32.xlu0 %v2771, 32
    %v4670 = vpop.permute.xlu0 %4669
    %4671 = vrot.lane.b32.xlu0 %v2772, 32
    %v4672 = vpop.permute.xlu0 %4671
    %4673 = vrot.lane.b32.xlu0 %v2773, 32
    %v4674 = vpop.permute.xlu0 %4673
    %4675 = vrot.lane.b32.xlu0 %v2774, 32
    %v4676 = vpop.permute.xlu0 %4675
    %4677 = vrot.lane.b32.xlu0 %v2775, 32
    %v4678 = vpop.permute.xlu0 %4677
    %4679 = vrot.lane.b32.xlu0 %v2776, 32
    %v4680 = vpop.permute.xlu0 %4679
    %4681 = vrot.lane.b32.xlu0 %v2777, 32
    %v4682 = vpop.permute.xlu0 %4681
    %4683 = vrot.lane.b32.xlu0 %v2778, 32
    %v4684 = vpop.permute.xlu0 %4683
    %4685 = vrot.lane.b32.xlu0 %v2779, 32
    %v4686 = vpop.permute.xlu0 %4685
    %4687 = vrot.lane.b32.xlu0 %v2780, 32
    %v4688 = vpop.permute.xlu0 %4687
    %4689 = vrot.lane.b32.xlu0 %v2781, 32
    %v4690 = vpop.permute.xlu0 %4689
    %4691 = vrot.lane.b32.xlu0 %v2782, 32
    %v4692 = vpop.permute.xlu0 %4691
    %4693 = vrot.lane.b32.xlu0 %v2783, 32
    %v4694 = vpop.permute.xlu0 %4693
    %4695 = vrot.lane.b32.xlu0 %v2784, 32
    %v4696 = vpop.permute.xlu0 %4695
    %4697 = vrot.lane.b32.xlu0 %v2785, 32
    %v4698 = vpop.permute.xlu0 %4697
    %4699 = vrot.lane.b32.xlu0 %v2786, 32
    %v4700 = vpop.permute.xlu0 %4699
    %4701 = vrot.lane.b32.xlu0 %v2787, 32
    %v4702 = vpop.permute.xlu0 %4701
    %4703 = vrot.lane.b32.xlu0 %v2788, 32
    %v4704 = vpop.permute.xlu0 %4703
    %4705 = vrot.lane.b32.xlu0 %v2789, 32
    %v4706 = vpop.permute.xlu0 %4705
    %4707 = vrot.lane.b32.xlu0 %v2790, 32
    %v4708 = vpop.permute.xlu0 %4707
    %4709 = vrot.lane.b32.xlu0 %v2791, 32
    %v4710 = vpop.permute.xlu0 %4709
    %4711 = vrot.lane.b32.xlu0 %v2792, 32
    %v4712 = vpop.permute.xlu0 %4711
    %4841 = vrot.lane.b32.xlu0 %v3049, 40
    %v4842 = vpop.permute.xlu0 %4841
    %4843 = vrot.lane.b32.xlu0 %v3050, 40
    %v4844 = vpop.permute.xlu0 %4843
    %4845 = vrot.lane.b32.xlu0 %v3051, 40
    %v4846 = vpop.permute.xlu0 %4845
    %4847 = vrot.lane.b32.xlu0 %v3052, 40
    %v4848 = vpop.permute.xlu0 %4847
    %4849 = vrot.lane.b32.xlu0 %v3053, 40
    %v4850 = vpop.permute.xlu0 %4849
    %4851 = vrot.lane.b32.xlu0 %v3054, 40
    %v4852 = vpop.permute.xlu0 %4851
    %4853 = vrot.lane.b32.xlu0 %v3055, 40
    %v4854 = vpop.permute.xlu0 %4853
    %4855 = vrot.lane.b32.xlu0 %v3056, 40
    %v4856 = vpop.permute.xlu0 %4855
    %4857 = vrot.lane.b32.xlu0 %v3057, 40
    %v4858 = vpop.permute.xlu0 %4857
    %4859 = vrot.lane.b32.xlu0 %v3058, 40
    %v4860 = vpop.permute.xlu0 %4859
    %4861 = vrot.lane.b32.xlu0 %v3059, 40
    %v4862 = vpop.permute.xlu0 %4861
    %4863 = vrot.lane.b32.xlu0 %v3060, 40
    %v4864 = vpop.permute.xlu0 %4863
    %4865 = vrot.lane.b32.xlu0 %v3061, 40
    %v4866 = vpop.permute.xlu0 %4865
    %4867 = vrot.lane.b32.xlu0 %v3062, 40
    %v4868 = vpop.permute.xlu0 %4867
    %4869 = vrot.lane.b32.xlu0 %v3063, 40
    %v4870 = vpop.permute.xlu0 %4869
    %4871 = vrot.lane.b32.xlu0 %v3064, 40
    %v4872 = vpop.permute.xlu0 %4871
    %4873 = vrot.lane.b32.xlu0 %v3065, 40
    %v4874 = vpop.permute.xlu0 %4873
    %4875 = vrot.lane.b32.xlu0 %v3066, 40
    %v4876 = vpop.permute.xlu0 %4875
    %4877 = vrot.lane.b32.xlu0 %v3067, 40
    %v4878 = vpop.permute.xlu0 %4877
    %4879 = vrot.lane.b32.xlu0 %v3068, 40
    %v4880 = vpop.permute.xlu0 %4879
    %4881 = vrot.lane.b32.xlu0 %v3069, 40
    %v4882 = vpop.permute.xlu0 %4881
    %4883 = vrot.lane.b32.xlu0 %v3070, 40
    %v4884 = vpop.permute.xlu0 %4883
    %4885 = vrot.lane.b32.xlu0 %v3071, 40
    %v4886 = vpop.permute.xlu0 %4885
    %4887 = vrot.lane.b32.xlu0 %v3072, 40
    %v4888 = vpop.permute.xlu0 %4887
    %4889 = vrot.lane.b32.xlu0 %v3073, 40
    %v4890 = vpop.permute.xlu0 %4889
    %4891 = vrot.lane.b32.xlu0 %v3074, 40
    %v4892 = vpop.permute.xlu0 %4891
    %4893 = vrot.lane.b32.xlu0 %v3075, 40
    %v4894 = vpop.permute.xlu0 %4893
    %4895 = vrot.lane.b32.xlu0 %v3076, 40
    %v4896 = vpop.permute.xlu0 %4895
    %4897 = vrot.lane.b32.xlu0 %v3077, 40
    %v4898 = vpop.permute.xlu0 %4897
    %4899 = vrot.lane.b32.xlu0 %v3078, 40
    %v4900 = vpop.permute.xlu0 %4899
    %4901 = vrot.lane.b32.xlu0 %v3079, 40
    %v4902 = vpop.permute.xlu0 %4901
    %4903 = vrot.lane.b32.xlu0 %v3080, 40
    %v4904 = vpop.permute.xlu0 %4903
    %4905 = vrot.lane.b32.xlu0 %v3081, 40
    %v4906 = vpop.permute.xlu0 %4905
    %4907 = vrot.lane.b32.xlu0 %v3082, 40
    %v4908 = vpop.permute.xlu0 %4907
    %4909 = vrot.lane.b32.xlu0 %v3083, 40
    %v4910 = vpop.permute.xlu0 %4909
    %4911 = vrot.lane.b32.xlu0 %v3084, 40
    %v4912 = vpop.permute.xlu0 %4911
    %4913 = vrot.lane.b32.xlu0 %v3085, 40
    %v4914 = vpop.permute.xlu0 %4913
    %4915 = vrot.lane.b32.xlu0 %v3086, 40
    %v4916 = vpop.permute.xlu0 %4915
    %4917 = vrot.lane.b32.xlu0 %v3087, 40
    %v4918 = vpop.permute.xlu0 %4917
    %4919 = vrot.lane.b32.xlu0 %v3088, 40
    %v4920 = vpop.permute.xlu0 %4919
    %4921 = vrot.lane.b32.xlu0 %v3089, 40
    %v4922 = vpop.permute.xlu0 %4921
    %4923 = vrot.lane.b32.xlu0 %v3090, 40
    %v4924 = vpop.permute.xlu0 %4923
    %4925 = vrot.lane.b32.xlu0 %v3091, 40
    %v4926 = vpop.permute.xlu0 %4925
    %4927 = vrot.lane.b32.xlu0 %v3092, 40
    %v4928 = vpop.permute.xlu0 %4927
    %4929 = vrot.lane.b32.xlu0 %v3093, 40
    %v4930 = vpop.permute.xlu0 %4929
    %4931 = vrot.lane.b32.xlu0 %v3094, 40
    %v4932 = vpop.permute.xlu0 %4931
    %4933 = vrot.lane.b32.xlu0 %v3095, 40
    %v4934 = vpop.permute.xlu0 %4933
    %4935 = vrot.lane.b32.xlu0 %v3096, 40
    %v4936 = vpop.permute.xlu0 %4935
    %4937 = vrot.lane.b32.xlu0 %v3097, 40
    %v4938 = vpop.permute.xlu0 %4937
    %4939 = vrot.lane.b32.xlu0 %v3098, 40
    %v4940 = vpop.permute.xlu0 %4939
    %4941 = vrot.lane.b32.xlu0 %v3099, 40
    %v4942 = vpop.permute.xlu0 %4941
    %4943 = vrot.lane.b32.xlu0 %v3100, 40
    %v4944 = vpop.permute.xlu0 %4943
    %4945 = vrot.lane.b32.xlu0 %v3101, 40
    %v4946 = vpop.permute.xlu0 %4945
    %4947 = vrot.lane.b32.xlu0 %v3102, 40
    %v4948 = vpop.permute.xlu0 %4947
    %4949 = vrot.lane.b32.xlu0 %v3103, 40
    %v4950 = vpop.permute.xlu0 %4949
    %4951 = vrot.lane.b32.xlu0 %v3104, 40
    %v4952 = vpop.permute.xlu0 %4951
    %4953 = vrot.lane.b32.xlu0 %v3105, 40
    %v4954 = vpop.permute.xlu0 %4953
    %4955 = vrot.lane.b32.xlu0 %v3106, 40
    %v4956 = vpop.permute.xlu0 %4955
    %4957 = vrot.lane.b32.xlu0 %v3107, 40
    %v4958 = vpop.permute.xlu0 %4957
    %4959 = vrot.lane.b32.xlu0 %v3108, 40
    %v4960 = vpop.permute.xlu0 %4959
    %4961 = vrot.lane.b32.xlu0 %v3109, 40
    %v4962 = vpop.permute.xlu0 %4961
    %4963 = vrot.lane.b32.xlu0 %v3110, 40
    %v4964 = vpop.permute.xlu0 %4963
    %4965 = vrot.lane.b32.xlu0 %v3111, 40
    %v4966 = vpop.permute.xlu0 %4965
    %4967 = vrot.lane.b32.xlu0 %v3112, 40
    %v4968 = vpop.permute.xlu0 %4967
    %5097 = vrot.lane.b32.xlu0 %v3369, 48
    %v5098 = vpop.permute.xlu0 %5097
    %5099 = vrot.lane.b32.xlu0 %v3370, 48
    %v5100 = vpop.permute.xlu0 %5099
    %5101 = vrot.lane.b32.xlu0 %v3371, 48
    %v5102 = vpop.permute.xlu0 %5101
    %5103 = vrot.lane.b32.xlu0 %v3372, 48
    %v5104 = vpop.permute.xlu0 %5103
    %5105 = vrot.lane.b32.xlu0 %v3373, 48
    %v5106 = vpop.permute.xlu0 %5105
    %5107 = vrot.lane.b32.xlu0 %v3374, 48
    %v5108 = vpop.permute.xlu0 %5107
    %5109 = vrot.lane.b32.xlu0 %v3375, 48
    %v5110 = vpop.permute.xlu0 %5109
    %5111 = vrot.lane.b32.xlu0 %v3376, 48
    %v5112 = vpop.permute.xlu0 %5111
    %5113 = vrot.lane.b32.xlu0 %v3377, 48
    %v5114 = vpop.permute.xlu0 %5113
    %5115 = vrot.lane.b32.xlu0 %v3378, 48
    %v5116 = vpop.permute.xlu0 %5115
    %5117 = vrot.lane.b32.xlu0 %v3379, 48
    %v5118 = vpop.permute.xlu0 %5117
    %5119 = vrot.lane.b32.xlu0 %v3380, 48
    %v5120 = vpop.permute.xlu0 %5119
    %5121 = vrot.lane.b32.xlu0 %v3381, 48
    %v5122 = vpop.permute.xlu0 %5121
    %5123 = vrot.lane.b32.xlu0 %v3382, 48
    %v5124 = vpop.permute.xlu0 %5123
    %5125 = vrot.lane.b32.xlu0 %v3383, 48
    %v5126 = vpop.permute.xlu0 %5125
    %5127 = vrot.lane.b32.xlu0 %v3384, 48
    %v5128 = vpop.permute.xlu0 %5127
    %5129 = vrot.lane.b32.xlu0 %v3385, 48
    %v5130 = vpop.permute.xlu0 %5129
    %5131 = vrot.lane.b32.xlu0 %v3386, 48
    %v5132 = vpop.permute.xlu0 %5131
    %5133 = vrot.lane.b32.xlu0 %v3387, 48
    %v5134 = vpop.permute.xlu0 %5133
    %5135 = vrot.lane.b32.xlu0 %v3388, 48
    %v5136 = vpop.permute.xlu0 %5135
    %5137 = vrot.lane.b32.xlu0 %v3389, 48
    %v5138 = vpop.permute.xlu0 %5137
    %5139 = vrot.lane.b32.xlu0 %v3390, 48
    %v5140 = vpop.permute.xlu0 %5139
    %5141 = vrot.lane.b32.xlu0 %v3391, 48
    %v5142 = vpop.permute.xlu0 %5141
    %5143 = vrot.lane.b32.xlu0 %v3392, 48
    %v5144 = vpop.permute.xlu0 %5143
    %5145 = vrot.lane.b32.xlu0 %v3393, 48
    %v5146 = vpop.permute.xlu0 %5145
    %5147 = vrot.lane.b32.xlu0 %v3394, 48
    %v5148 = vpop.permute.xlu0 %5147
    %5149 = vrot.lane.b32.xlu0 %v3395, 48
    %v5150 = vpop.permute.xlu0 %5149
    %5151 = vrot.lane.b32.xlu0 %v3396, 48
    %v5152 = vpop.permute.xlu0 %5151
    %5153 = vrot.lane.b32.xlu0 %v3397, 48
    %v5154 = vpop.permute.xlu0 %5153
    %5155 = vrot.lane.b32.xlu0 %v3398, 48
    %v5156 = vpop.permute.xlu0 %5155
    %5157 = vrot.lane.b32.xlu0 %v3399, 48
    %v5158 = vpop.permute.xlu0 %5157
    %5159 = vrot.lane.b32.xlu0 %v3400, 48
    %v5160 = vpop.permute.xlu0 %5159
    %5161 = vrot.lane.b32.xlu0 %v3401, 48
    %v5162 = vpop.permute.xlu0 %5161
    %5163 = vrot.lane.b32.xlu0 %v3402, 48
    %v5164 = vpop.permute.xlu0 %5163
    %5165 = vrot.lane.b32.xlu0 %v3403, 48
    %v5166 = vpop.permute.xlu0 %5165
    %5167 = vrot.lane.b32.xlu0 %v3404, 48
    %v5168 = vpop.permute.xlu0 %5167
    %5169 = vrot.lane.b32.xlu0 %v3405, 48
    %v5170 = vpop.permute.xlu0 %5169
    %5171 = vrot.lane.b32.xlu0 %v3406, 48
    %v5172 = vpop.permute.xlu0 %5171
    %5173 = vrot.lane.b32.xlu0 %v3407, 48
    %v5174 = vpop.permute.xlu0 %5173
    %5175 = vrot.lane.b32.xlu0 %v3408, 48
    %v5176 = vpop.permute.xlu0 %5175
    %5177 = vrot.lane.b32.xlu0 %v3409, 48
    %v5178 = vpop.permute.xlu0 %5177
    %5179 = vrot.lane.b32.xlu0 %v3410, 48
    %v5180 = vpop.permute.xlu0 %5179
    %5181 = vrot.lane.b32.xlu0 %v3411, 48
    %v5182 = vpop.permute.xlu0 %5181
    %5183 = vrot.lane.b32.xlu0 %v3412, 48
    %v5184 = vpop.permute.xlu0 %5183
    %5185 = vrot.lane.b32.xlu0 %v3413, 48
    %v5186 = vpop.permute.xlu0 %5185
    %5187 = vrot.lane.b32.xlu0 %v3414, 48
    %v5188 = vpop.permute.xlu0 %5187
    %5189 = vrot.lane.b32.xlu0 %v3415, 48
    %v5190 = vpop.permute.xlu0 %5189
    %5191 = vrot.lane.b32.xlu0 %v3416, 48
    %v5192 = vpop.permute.xlu0 %5191
    %5193 = vrot.lane.b32.xlu0 %v3417, 48
    %v5194 = vpop.permute.xlu0 %5193
    %5195 = vrot.lane.b32.xlu0 %v3418, 48
    %v5196 = vpop.permute.xlu0 %5195
    %5197 = vrot.lane.b32.xlu0 %v3419, 48
    %v5198 = vpop.permute.xlu0 %5197
    %5199 = vrot.lane.b32.xlu0 %v3420, 48
    %v5200 = vpop.permute.xlu0 %5199
    %5201 = vrot.lane.b32.xlu0 %v3421, 48
    %v5202 = vpop.permute.xlu0 %5201
    %5203 = vrot.lane.b32.xlu0 %v3422, 48
    %v5204 = vpop.permute.xlu0 %5203
    %5205 = vrot.lane.b32.xlu0 %v3423, 48
    %v5206 = vpop.permute.xlu0 %5205
    %5207 = vrot.lane.b32.xlu0 %v3424, 48
    %v5208 = vpop.permute.xlu0 %5207
    %5209 = vrot.lane.b32.xlu0 %v3425, 48
    %v5210 = vpop.permute.xlu0 %5209
    %5211 = vrot.lane.b32.xlu0 %v3426, 48
    %v5212 = vpop.permute.xlu0 %5211
    %5213 = vrot.lane.b32.xlu0 %v3427, 48
    %v5214 = vpop.permute.xlu0 %5213
    %5215 = vrot.lane.b32.xlu0 %v3428, 48
    %v5216 = vpop.permute.xlu0 %5215
    %5217 = vrot.lane.b32.xlu0 %v3429, 48
    %v5218 = vpop.permute.xlu0 %5217
    %5219 = vrot.lane.b32.xlu0 %v3430, 48
    %v5220 = vpop.permute.xlu0 %5219
    %5221 = vrot.lane.b32.xlu0 %v3431, 48
    %v5222 = vpop.permute.xlu0 %5221
    %5223 = vrot.lane.b32.xlu0 %v3432, 48
    %v5224 = vpop.permute.xlu0 %5223
    %5353 = vrot.lane.b32.xlu0 %v3689, 56
    %v5354 = vpop.permute.xlu0 %5353
    %5355 = vrot.lane.b32.xlu0 %v3690, 56
    %v5356 = vpop.permute.xlu0 %5355
    %5357 = vrot.lane.b32.xlu0 %v3691, 56
    %v5358 = vpop.permute.xlu0 %5357
    %5359 = vrot.lane.b32.xlu0 %v3692, 56
    %v5360 = vpop.permute.xlu0 %5359
    %5361 = vrot.lane.b32.xlu0 %v3693, 56
    %v5362 = vpop.permute.xlu0 %5361
    %5363 = vrot.lane.b32.xlu0 %v3694, 56
    %v5364 = vpop.permute.xlu0 %5363
    %5365 = vrot.lane.b32.xlu0 %v3695, 56
    %v5366 = vpop.permute.xlu0 %5365
    %5367 = vrot.lane.b32.xlu0 %v3696, 56
    %v5368 = vpop.permute.xlu0 %5367
    %5369 = vrot.lane.b32.xlu0 %v3697, 56
    %v5370 = vpop.permute.xlu0 %5369
    %5371 = vrot.lane.b32.xlu0 %v3698, 56
    %v5372 = vpop.permute.xlu0 %5371
    %5373 = vrot.lane.b32.xlu0 %v3699, 56
    %v5374 = vpop.permute.xlu0 %5373
    %5375 = vrot.lane.b32.xlu0 %v3700, 56
    %v5376 = vpop.permute.xlu0 %5375
    %5377 = vrot.lane.b32.xlu0 %v3701, 56
    %v5378 = vpop.permute.xlu0 %5377
    %5379 = vrot.lane.b32.xlu0 %v3702, 56
    %v5380 = vpop.permute.xlu0 %5379
    %5381 = vrot.lane.b32.xlu0 %v3703, 56
    %v5382 = vpop.permute.xlu0 %5381
    %5383 = vrot.lane.b32.xlu0 %v3704, 56
    %v5384 = vpop.permute.xlu0 %5383
    %5385 = vrot.lane.b32.xlu0 %v3705, 56
    %v5386 = vpop.permute.xlu0 %5385
    %5387 = vrot.lane.b32.xlu0 %v3706, 56
    %v5388 = vpop.permute.xlu0 %5387
    %5389 = vrot.lane.b32.xlu0 %v3707, 56
    %v5390 = vpop.permute.xlu0 %5389
    %5391 = vrot.lane.b32.xlu0 %v3708, 56
    %v5392 = vpop.permute.xlu0 %5391
    %5393 = vrot.lane.b32.xlu0 %v3709, 56
    %v5394 = vpop.permute.xlu0 %5393
    %5395 = vrot.lane.b32.xlu0 %v3710, 56
    %v5396 = vpop.permute.xlu0 %5395
    %5397 = vrot.lane.b32.xlu0 %v3711, 56
    %v5398 = vpop.permute.xlu0 %5397
    %5399 = vrot.lane.b32.xlu0 %v3712, 56
    %v5400 = vpop.permute.xlu0 %5399
    %5401 = vrot.lane.b32.xlu0 %v3713, 56
    %v5402 = vpop.permute.xlu0 %5401
    %5403 = vrot.lane.b32.xlu0 %v3714, 56
    %v5404 = vpop.permute.xlu0 %5403
    %5405 = vrot.lane.b32.xlu0 %v3715, 56
    %v5406 = vpop.permute.xlu0 %5405
    %5407 = vrot.lane.b32.xlu0 %v3716, 56
    %v5408 = vpop.permute.xlu0 %5407
    %5409 = vrot.lane.b32.xlu0 %v3717, 56
    %v5410 = vpop.permute.xlu0 %5409
    %5411 = vrot.lane.b32.xlu0 %v3718, 56
    %v5412 = vpop.permute.xlu0 %5411
    %5413 = vrot.lane.b32.xlu0 %v3719, 56
    %v5414 = vpop.permute.xlu0 %5413
    %5415 = vrot.lane.b32.xlu0 %v3720, 56
    %v5416 = vpop.permute.xlu0 %5415
    %5417 = vrot.lane.b32.xlu0 %v3721, 56
    %v5418 = vpop.permute.xlu0 %5417
    %5419 = vrot.lane.b32.xlu0 %v3722, 56
    %v5420 = vpop.permute.xlu0 %5419
    %5421 = vrot.lane.b32.xlu0 %v3723, 56
    %v5422 = vpop.permute.xlu0 %5421
    %5423 = vrot.lane.b32.xlu0 %v3724, 56
    %v5424 = vpop.permute.xlu0 %5423
    %5425 = vrot.lane.b32.xlu0 %v3725, 56
    %v5426 = vpop.permute.xlu0 %5425
    %5427 = vrot.lane.b32.xlu0 %v3726, 56
    %v5428 = vpop.permute.xlu0 %5427
    %5429 = vrot.lane.b32.xlu0 %v3727, 56
    %v5430 = vpop.permute.xlu0 %5429
    %5431 = vrot.lane.b32.xlu0 %v3728, 56
    %v5432 = vpop.permute.xlu0 %5431
    %5433 = vrot.lane.b32.xlu0 %v3729, 56
    %v5434 = vpop.permute.xlu0 %5433
    %5435 = vrot.lane.b32.xlu0 %v3730, 56
    %v5436 = vpop.permute.xlu0 %5435
    %5437 = vrot.lane.b32.xlu0 %v3731, 56
    %v5438 = vpop.permute.xlu0 %5437
    %5439 = vrot.lane.b32.xlu0 %v3732, 56
    %v5440 = vpop.permute.xlu0 %5439
    %5441 = vrot.lane.b32.xlu0 %v3733, 56
    %v5442 = vpop.permute.xlu0 %5441
    %5443 = vrot.lane.b32.xlu0 %v3734, 56
    %v5444 = vpop.permute.xlu0 %5443
    %5445 = vrot.lane.b32.xlu0 %v3735, 56
    %v5446 = vpop.permute.xlu0 %5445
    %5447 = vrot.lane.b32.xlu0 %v3736, 56
    %v5448 = vpop.permute.xlu0 %5447
    %5449 = vrot.lane.b32.xlu0 %v3737, 56
    %v5450 = vpop.permute.xlu0 %5449
    %5451 = vrot.lane.b32.xlu0 %v3738, 56
    %v5452 = vpop.permute.xlu0 %5451
    %5453 = vrot.lane.b32.xlu0 %v3739, 56
    %v5454 = vpop.permute.xlu0 %5453
    %5455 = vrot.lane.b32.xlu0 %v3740, 56
    %v5456 = vpop.permute.xlu0 %5455
    %5457 = vrot.lane.b32.xlu0 %v3741, 56
    %v5458 = vpop.permute.xlu0 %5457
    %5459 = vrot.lane.b32.xlu0 %v3742, 56
    %v5460 = vpop.permute.xlu0 %5459
    %5461 = vrot.lane.b32.xlu0 %v3743, 56
    %v5462 = vpop.permute.xlu0 %5461
    %5463 = vrot.lane.b32.xlu0 %v3744, 56
    %v5464 = vpop.permute.xlu0 %5463
    %5465 = vrot.lane.b32.xlu0 %v3745, 56
    %v5466 = vpop.permute.xlu0 %5465
    %5467 = vrot.lane.b32.xlu0 %v3746, 56
    %v5468 = vpop.permute.xlu0 %5467
    %5469 = vrot.lane.b32.xlu0 %v3747, 56
    %v5470 = vpop.permute.xlu0 %5469
    %5471 = vrot.lane.b32.xlu0 %v3748, 56
    %v5472 = vpop.permute.xlu0 %5471
    %5473 = vrot.lane.b32.xlu0 %v3749, 56
    %v5474 = vpop.permute.xlu0 %5473
    %5475 = vrot.lane.b32.xlu0 %v3750, 56
    %v5476 = vpop.permute.xlu0 %5475
    %5477 = vrot.lane.b32.xlu0 %v3751, 56
    %v5478 = vpop.permute.xlu0 %5477
    %5479 = vrot.lane.b32.xlu0 %v3752, 56
    %v5480 = vpop.permute.xlu0 %5479
    %5545 = vrot.lane.b32.xlu0 %v747, 64
    %v5546 = vpop.permute.xlu0 %5545
    %5547 = vrot.lane.b32.xlu0 %v752, 64
    %v5548 = vpop.permute.xlu0 %5547
    %5549 = vrot.lane.b32.xlu0 %v757, 64
    %v5550 = vpop.permute.xlu0 %5549
    %5551 = vrot.lane.b32.xlu0 %v762, 64
    %v5552 = vpop.permute.xlu0 %5551
    %5553 = vrot.lane.b32.xlu0 %v767, 64
    %v5554 = vpop.permute.xlu0 %5553
    %5555 = vrot.lane.b32.xlu0 %v772, 64
    %v5556 = vpop.permute.xlu0 %5555
    %5557 = vrot.lane.b32.xlu0 %v777, 64
    %v5558 = vpop.permute.xlu0 %5557
    %5559 = vrot.lane.b32.xlu0 %v782, 64
    %v5560 = vpop.permute.xlu0 %5559
    %5561 = vrot.lane.b32.xlu0 %v787, 64
    %v5562 = vpop.permute.xlu0 %5561
    %5563 = vrot.lane.b32.xlu0 %v792, 64
    %v5564 = vpop.permute.xlu0 %5563
    %5565 = vrot.lane.b32.xlu0 %v797, 64
    %v5566 = vpop.permute.xlu0 %5565
    %5567 = vrot.lane.b32.xlu0 %v802, 64
    %v5568 = vpop.permute.xlu0 %5567
    %5569 = vrot.lane.b32.xlu0 %v807, 64
    %v5570 = vpop.permute.xlu0 %5569
    %5571 = vrot.lane.b32.xlu0 %v812, 64
    %v5572 = vpop.permute.xlu0 %5571
    %5573 = vrot.lane.b32.xlu0 %v817, 64
    %v5574 = vpop.permute.xlu0 %5573
    %5575 = vrot.lane.b32.xlu0 %v822, 64
    %v5576 = vpop.permute.xlu0 %5575
    %5577 = vrot.lane.b32.xlu0 %v827, 64
    %v5578 = vpop.permute.xlu0 %5577
    %5579 = vrot.lane.b32.xlu0 %v832, 64
    %v5580 = vpop.permute.xlu0 %5579
    %5581 = vrot.lane.b32.xlu0 %v837, 64
    %v5582 = vpop.permute.xlu0 %5581
    %5583 = vrot.lane.b32.xlu0 %v842, 64
    %v5584 = vpop.permute.xlu0 %5583
    %5585 = vrot.lane.b32.xlu0 %v847, 64
    %v5586 = vpop.permute.xlu0 %5585
    %5587 = vrot.lane.b32.xlu0 %v852, 64
    %v5588 = vpop.permute.xlu0 %5587
    %5589 = vrot.lane.b32.xlu0 %v857, 64
    %v5590 = vpop.permute.xlu0 %5589
    %5591 = vrot.lane.b32.xlu0 %v862, 64
    %v5592 = vpop.permute.xlu0 %5591
    %5593 = vrot.lane.b32.xlu0 %v867, 64
    %v5594 = vpop.permute.xlu0 %5593
    %5595 = vrot.lane.b32.xlu0 %v872, 64
    %v5596 = vpop.permute.xlu0 %5595
    %5597 = vrot.lane.b32.xlu0 %v877, 64
    %v5598 = vpop.permute.xlu0 %5597
    %5599 = vrot.lane.b32.xlu0 %v882, 64
    %v5600 = vpop.permute.xlu0 %5599
    %5601 = vrot.lane.b32.xlu0 %v887, 64
    %v5602 = vpop.permute.xlu0 %5601
    %5603 = vrot.lane.b32.xlu0 %v892, 64
    %v5604 = vpop.permute.xlu0 %5603
    %5605 = vrot.lane.b32.xlu0 %v897, 64
    %v5606 = vpop.permute.xlu0 %5605
    %5607 = vrot.lane.b32.xlu0 %v902, 64
    %v5608 = vpop.permute.xlu0 %5607
    %5609 = vrot.lane.b32.xlu0 %v907, 64
    %v5610 = vpop.permute.xlu0 %5609
    %5611 = vrot.lane.b32.xlu0 %v912, 64
    %v5612 = vpop.permute.xlu0 %5611
    %5613 = vrot.lane.b32.xlu0 %v917, 64
    %v5614 = vpop.permute.xlu0 %5613
    %5615 = vrot.lane.b32.xlu0 %v922, 64
    %v5616 = vpop.permute.xlu0 %5615
    %5617 = vrot.lane.b32.xlu0 %v927, 64
    %v5618 = vpop.permute.xlu0 %5617
    %5619 = vrot.lane.b32.xlu0 %v932, 64
    %v5620 = vpop.permute.xlu0 %5619
    %5621 = vrot.lane.b32.xlu0 %v937, 64
    %v5622 = vpop.permute.xlu0 %5621
    %5623 = vrot.lane.b32.xlu0 %v942, 64
    %v5624 = vpop.permute.xlu0 %5623
    %5625 = vrot.lane.b32.xlu0 %v947, 64
    %v5626 = vpop.permute.xlu0 %5625
    %5627 = vrot.lane.b32.xlu0 %v952, 64
    %v5628 = vpop.permute.xlu0 %5627
    %5629 = vrot.lane.b32.xlu0 %v957, 64
    %v5630 = vpop.permute.xlu0 %5629
    %5631 = vrot.lane.b32.xlu0 %v962, 64
    %v5632 = vpop.permute.xlu0 %5631
    %5633 = vrot.lane.b32.xlu0 %v967, 64
    %v5634 = vpop.permute.xlu0 %5633
    %5635 = vrot.lane.b32.xlu0 %v972, 64
    %v5636 = vpop.permute.xlu0 %5635
    %5637 = vrot.lane.b32.xlu0 %v977, 64
    %v5638 = vpop.permute.xlu0 %5637
    %5639 = vrot.lane.b32.xlu0 %v982, 64
    %v5640 = vpop.permute.xlu0 %5639
    %5641 = vrot.lane.b32.xlu0 %v987, 64
    %v5642 = vpop.permute.xlu0 %5641
    %5643 = vrot.lane.b32.xlu0 %v992, 64
    %v5644 = vpop.permute.xlu0 %5643
    %5645 = vrot.lane.b32.xlu0 %v997, 64
    %v5646 = vpop.permute.xlu0 %5645
    %5647 = vrot.lane.b32.xlu0 %v1002, 64
    %v5648 = vpop.permute.xlu0 %5647
    %5649 = vrot.lane.b32.xlu0 %v1007, 64
    %v5650 = vpop.permute.xlu0 %5649
    %5651 = vrot.lane.b32.xlu0 %v1012, 64
    %v5652 = vpop.permute.xlu0 %5651
    %5653 = vrot.lane.b32.xlu0 %v1017, 64
    %v5654 = vpop.permute.xlu0 %5653
    %5655 = vrot.lane.b32.xlu0 %v1022, 64
    %v5656 = vpop.permute.xlu0 %5655
    %5657 = vrot.lane.b32.xlu0 %v1027, 64
    %v5658 = vpop.permute.xlu0 %5657
    %5659 = vrot.lane.b32.xlu0 %v1032, 64
    %v5660 = vpop.permute.xlu0 %5659
    %5661 = vrot.lane.b32.xlu0 %v1037, 64
    %v5662 = vpop.permute.xlu0 %5661
    %5663 = vrot.lane.b32.xlu0 %v1042, 64
    %v5664 = vpop.permute.xlu0 %5663
    %5665 = vrot.lane.b32.xlu0 %v1047, 64
    %v5666 = vpop.permute.xlu0 %5665
    %5667 = vrot.lane.b32.xlu0 %v1052, 64
    %v5668 = vpop.permute.xlu0 %5667
    %5669 = vrot.lane.b32.xlu0 %v1057, 64
    %v5670 = vpop.permute.xlu0 %5669
    %5671 = vrot.lane.b32.xlu0 %v1062, 64
    %v5672 = vpop.permute.xlu0 %5671
    %vm5737 = vcmask 64512
    %v5738 = vsel %vm5737, %v1449, %v3818
    %v5739 = vsel %vm5737, %v1450, %v3820
    %v5740 = vsel %vm5737, %v1451, %v3822
    %v5741 = vsel %vm5737, %v1452, %v3824
    %v5742 = vsel %vm5737, %v1453, %v3826
    %v5743 = vsel %vm5737, %v1454, %v3828
    %v5744 = vsel %vm5737, %v1455, %v3830
    %v5745 = vsel %vm5737, %v1456, %v3832
    %v5746 = vsel %vm5737, %v1457, %v3834
    %v5747 = vsel %vm5737, %v1458, %v3836
    %v5748 = vsel %vm5737, %v1459, %v3838
    %v5749 = vsel %vm5737, %v1460, %v3840
    %v5750 = vsel %vm5737, %v1461, %v3842
    %v5751 = vsel %vm5737, %v1462, %v3844
    %v5752 = vsel %vm5737, %v1463, %v3846
    %v5753 = vsel %vm5737, %v1464, %v3848
    %v5754 = vsel %vm5737, %v1465, %v3850
    %v5755 = vsel %vm5737, %v1466, %v3852
    %v5756 = vsel %vm5737, %v1467, %v3854
    %v5757 = vsel %vm5737, %v1468, %v3856
    %v5758 = vsel %vm5737, %v1469, %v3858
    %v5759 = vsel %vm5737, %v1470, %v3860
    %v5760 = vsel %vm5737, %v1471, %v3862
    %v5761 = vsel %vm5737, %v1472, %v3864
    %v5762 = vsel %vm5737, %v1473, %v3866
    %v5763 = vsel %vm5737, %v1474, %v3868
    %v5764 = vsel %vm5737, %v1475, %v3870
    %v5765 = vsel %vm5737, %v1476, %v3872
    %v5766 = vsel %vm5737, %v1477, %v3874
    %v5767 = vsel %vm5737, %v1478, %v3876
    %v5768 = vsel %vm5737, %v1479, %v3878
    %v5769 = vsel %vm5737, %v1480, %v3880
    %v5770 = vsel %vm5737, %v1481, %v3882
    %v5771 = vsel %vm5737, %v1482, %v3884
    %v5772 = vsel %vm5737, %v1483, %v3886
    %v5773 = vsel %vm5737, %v1484, %v3888
    %v5774 = vsel %vm5737, %v1485, %v3890
    %v5775 = vsel %vm5737, %v1486, %v3892
    %v5776 = vsel %vm5737, %v1487, %v3894
    %v5777 = vsel %vm5737, %v1488, %v3896
    %v5778 = vsel %vm5737, %v1489, %v3898
    %v5779 = vsel %vm5737, %v1490, %v3900
    %v5780 = vsel %vm5737, %v1491, %v3902
    %v5781 = vsel %vm5737, %v1492, %v3904
    %v5782 = vsel %vm5737, %v1493, %v3906
    %v5783 = vsel %vm5737, %v1494, %v3908
    %v5784 = vsel %vm5737, %v1495, %v3910
    %v5785 = vsel %vm5737, %v1496, %v3912
    %v5786 = vsel %vm5737, %v1497, %v3914
    %v5787 = vsel %vm5737, %v1498, %v3916
    %v5788 = vsel %vm5737, %v1499, %v3918
    %v5789 = vsel %vm5737, %v1500, %v3920
    %v5790 = vsel %vm5737, %v1501, %v3922
    %v5791 = vsel %vm5737, %v1502, %v3924
    %v5792 = vsel %vm5737, %v1503, %v3926
    %v5793 = vsel %vm5737, %v1504, %v3928
    %v5794 = vsel %vm5737, %v1505, %v3930
    %v5795 = vsel %vm5737, %v1506, %v3932
    %v5796 = vsel %vm5737, %v1507, %v3934
    %v5797 = vsel %vm5737, %v1508, %v3936
    %v5798 = vsel %vm5737, %v1509, %v3938
    %v5799 = vsel %vm5737, %v1510, %v3940
    %v5800 = vsel %vm5737, %v1511, %v3942
    %v5801 = vsel %vm5737, %v1512, %v3944
    %vm5802 = vcmask 130048
    %v5803 = vsel %vm5802, %v5738, %v4074
    %v5804 = vsel %vm5802, %v5739, %v4076
    %v5805 = vsel %vm5802, %v5740, %v4078
    %v5806 = vsel %vm5802, %v5741, %v4080
    %v5807 = vsel %vm5802, %v5742, %v4082
    %v5808 = vsel %vm5802, %v5743, %v4084
    %v5809 = vsel %vm5802, %v5744, %v4086
    %v5810 = vsel %vm5802, %v5745, %v4088
    %v5811 = vsel %vm5802, %v5746, %v4090
    %v5812 = vsel %vm5802, %v5747, %v4092
    %v5813 = vsel %vm5802, %v5748, %v4094
    %v5814 = vsel %vm5802, %v5749, %v4096
    %v5815 = vsel %vm5802, %v5750, %v4098
    %v5816 = vsel %vm5802, %v5751, %v4100
    %v5817 = vsel %vm5802, %v5752, %v4102
    %v5818 = vsel %vm5802, %v5753, %v4104
    %v5819 = vsel %vm5802, %v5754, %v4106
    %v5820 = vsel %vm5802, %v5755, %v4108
    %v5821 = vsel %vm5802, %v5756, %v4110
    %v5822 = vsel %vm5802, %v5757, %v4112
    %v5823 = vsel %vm5802, %v5758, %v4114
    %v5824 = vsel %vm5802, %v5759, %v4116
    %v5825 = vsel %vm5802, %v5760, %v4118
    %v5826 = vsel %vm5802, %v5761, %v4120
    %v5827 = vsel %vm5802, %v5762, %v4122
    %v5828 = vsel %vm5802, %v5763, %v4124
    %v5829 = vsel %vm5802, %v5764, %v4126
    %v5830 = vsel %vm5802, %v5765, %v4128
    %v5831 = vsel %vm5802, %v5766, %v4130
    %v5832 = vsel %vm5802, %v5767, %v4132
    %v5833 = vsel %vm5802, %v5768, %v4134
    %v5834 = vsel %vm5802, %v5769, %v4136
    %v5835 = vsel %vm5802, %v5770, %v4138
    %v5836 = vsel %vm5802, %v5771, %v4140
    %v5837 = vsel %vm5802, %v5772, %v4142
    %v5838 = vsel %vm5802, %v5773, %v4144
    %v5839 = vsel %vm5802, %v5774, %v4146
    %v5840 = vsel %vm5802, %v5775, %v4148
    %v5841 = vsel %vm5802, %v5776, %v4150
    %v5842 = vsel %vm5802, %v5777, %v4152
    %v5843 = vsel %vm5802, %v5778, %v4154
    %v5844 = vsel %vm5802, %v5779, %v4156
    %v5845 = vsel %vm5802, %v5780, %v4158
    %v5846 = vsel %vm5802, %v5781, %v4160
    %v5847 = vsel %vm5802, %v5782, %v4162
    %v5848 = vsel %vm5802, %v5783, %v4164
    %v5849 = vsel %vm5802, %v5784, %v4166
    %v5850 = vsel %vm5802, %v5785, %v4168
    %v5851 = vsel %vm5802, %v5786, %v4170
    %v5852 = vsel %vm5802, %v5787, %v4172
    %v5853 = vsel %vm5802, %v5788, %v4174
    %v5854 = vsel %vm5802, %v5789, %v4176
    %v5855 = vsel %vm5802, %v5790, %v4178
    %v5856 = vsel %vm5802, %v5791, %v4180
    %v5857 = vsel %vm5802, %v5792, %v4182
    %v5858 = vsel %vm5802, %v5793, %v4184
    %v5859 = vsel %vm5802, %v5794, %v4186
    %v5860 = vsel %vm5802, %v5795, %v4188
    %v5861 = vsel %vm5802, %v5796, %v4190
    %v5862 = vsel %vm5802, %v5797, %v4192
    %v5863 = vsel %vm5802, %v5798, %v4194
    %v5864 = vsel %vm5802, %v5799, %v4196
    %v5865 = vsel %vm5802, %v5800, %v4198
    %v5866 = vsel %vm5802, %v5801, %v4200
    %v5867 = vsel %vm487, %v5803, %v4330
    %v5868 = vsel %vm487, %v5804, %v4332
    %v5869 = vsel %vm487, %v5805, %v4334
    %v5870 = vsel %vm487, %v5806, %v4336
    %v5871 = vsel %vm487, %v5807, %v4338
    %v5872 = vsel %vm487, %v5808, %v4340
    %v5873 = vsel %vm487, %v5809, %v4342
    %v5874 = vsel %vm487, %v5810, %v4344
    %v5875 = vsel %vm487, %v5811, %v4346
    %v5876 = vsel %vm487, %v5812, %v4348
    %v5877 = vsel %vm487, %v5813, %v4350
    %v5878 = vsel %vm487, %v5814, %v4352
    %v5879 = vsel %vm487, %v5815, %v4354
    %v5880 = vsel %vm487, %v5816, %v4356
    %v5881 = vsel %vm487, %v5817, %v4358
    %v5882 = vsel %vm487, %v5818, %v4360
    %v5883 = vsel %vm487, %v5819, %v4362
    %v5884 = vsel %vm487, %v5820, %v4364
    %v5885 = vsel %vm487, %v5821, %v4366
    %v5886 = vsel %vm487, %v5822, %v4368
    %v5887 = vsel %vm487, %v5823, %v4370
    %v5888 = vsel %vm487, %v5824, %v4372
    %v5889 = vsel %vm487, %v5825, %v4374
    %v5890 = vsel %vm487, %v5826, %v4376
    %v5891 = vsel %vm487, %v5827, %v4378
    %v5892 = vsel %vm487, %v5828, %v4380
    %v5893 = vsel %vm487, %v5829, %v4382
    %v5894 = vsel %vm487, %v5830, %v4384
    %v5895 = vsel %vm487, %v5831, %v4386
    %v5896 = vsel %vm487, %v5832, %v4388
    %v5897 = vsel %vm487, %v5833, %v4390
    %v5898 = vsel %vm487, %v5834, %v4392
    %v5899 = vsel %vm487, %v5835, %v4394
    %v5900 = vsel %vm487, %v5836, %v4396
    %v5901 = vsel %vm487, %v5837, %v4398
    %v5902 = vsel %vm487, %v5838, %v4400
    %v5903 = vsel %vm487, %v5839, %v4402
    %v5904 = vsel %vm487, %v5840, %v4404
    %v5905 = vsel %vm487, %v5841, %v4406
    %v5906 = vsel %vm487, %v5842, %v4408
    %v5907 = vsel %vm487, %v5843, %v4410
    %v5908 = vsel %vm487, %v5844, %v4412
    %v5909 = vsel %vm487, %v5845, %v4414
    %v5910 = vsel %vm487, %v5846, %v4416
    %v5911 = vsel %vm487, %v5847, %v4418
    %v5912 = vsel %vm487, %v5848, %v4420
    %v5913 = vsel %vm487, %v5849, %v4422
    %v5914 = vsel %vm487, %v5850, %v4424
    %v5915 = vsel %vm487, %v5851, %v4426
    %v5916 = vsel %vm487, %v5852, %v4428
    %v5917 = vsel %vm487, %v5853, %v4430
    %v5918 = vsel %vm487, %v5854, %v4432
    %v5919 = vsel %vm487, %v5855, %v4434
    %v5920 = vsel %vm487, %v5856, %v4436
    %v5921 = vsel %vm487, %v5857, %v4438
    %v5922 = vsel %vm487, %v5858, %v4440
    %v5923 = vsel %vm487, %v5859, %v4442
    %v5924 = vsel %vm487, %v5860, %v4444
    %v5925 = vsel %vm487, %v5861, %v4446
    %v5926 = vsel %vm487, %v5862, %v4448
    %v5927 = vsel %vm487, %v5863, %v4450
    %v5928 = vsel %vm487, %v5864, %v4452
    %v5929 = vsel %vm487, %v5865, %v4454
    %v5930 = vsel %vm487, %v5866, %v4456
    %vm5931 = vcmask 261120
    %v5932 = vsel %vm5931, %v5867, %v4586
    %v5933 = vsel %vm5931, %v5868, %v4588
    %v5934 = vsel %vm5931, %v5869, %v4590
    %v5935 = vsel %vm5931, %v5870, %v4592
    %v5936 = vsel %vm5931, %v5871, %v4594
    %v5937 = vsel %vm5931, %v5872, %v4596
    %v5938 = vsel %vm5931, %v5873, %v4598
    %v5939 = vsel %vm5931, %v5874, %v4600
    %v5940 = vsel %vm5931, %v5875, %v4602
    %v5941 = vsel %vm5931, %v5876, %v4604
    %v5942 = vsel %vm5931, %v5877, %v4606
    %v5943 = vsel %vm5931, %v5878, %v4608
    %v5944 = vsel %vm5931, %v5879, %v4610
    %v5945 = vsel %vm5931, %v5880, %v4612
    %v5946 = vsel %vm5931, %v5881, %v4614
    %v5947 = vsel %vm5931, %v5882, %v4616
    %v5948 = vsel %vm5931, %v5883, %v4618
    %v5949 = vsel %vm5931, %v5884, %v4620
    %v5950 = vsel %vm5931, %v5885, %v4622
    %v5951 = vsel %vm5931, %v5886, %v4624
    %v5952 = vsel %vm5931, %v5887, %v4626
    %v5953 = vsel %vm5931, %v5888, %v4628
    %v5954 = vsel %vm5931, %v5889, %v4630
    %v5955 = vsel %vm5931, %v5890, %v4632
    %v5956 = vsel %vm5931, %v5891, %v4634
    %v5957 = vsel %vm5931, %v5892, %v4636
    %v5958 = vsel %vm5931, %v5893, %v4638
    %v5959 = vsel %vm5931, %v5894, %v4640
    %v5960 = vsel %vm5931, %v5895, %v4642
    %v5961 = vsel %vm5931, %v5896, %v4644
    %v5962 = vsel %vm5931, %v5897, %v4646
    %v5963 = vsel %vm5931, %v5898, %v4648
    %v5964 = vsel %vm5931, %v5899, %v4650
    %v5965 = vsel %vm5931, %v5900, %v4652
    %v5966 = vsel %vm5931, %v5901, %v4654
    %v5967 = vsel %vm5931, %v5902, %v4656
    %v5968 = vsel %vm5931, %v5903, %v4658
    %v5969 = vsel %vm5931, %v5904, %v4660
    %v5970 = vsel %vm5931, %v5905, %v4662
    %v5971 = vsel %vm5931, %v5906, %v4664
    %v5972 = vsel %vm5931, %v5907, %v4666
    %v5973 = vsel %vm5931, %v5908, %v4668
    %v5974 = vsel %vm5931, %v5909, %v4670
    %v5975 = vsel %vm5931, %v5910, %v4672
    %v5976 = vsel %vm5931, %v5911, %v4674
    %v5977 = vsel %vm5931, %v5912, %v4676
    %v5978 = vsel %vm5931, %v5913, %v4678
    %v5979 = vsel %vm5931, %v5914, %v4680
    %v5980 = vsel %vm5931, %v5915, %v4682
    %v5981 = vsel %vm5931, %v5916, %v4684
    %v5982 = vsel %vm5931, %v5917, %v4686
    %v5983 = vsel %vm5931, %v5918, %v4688
    %v5984 = vsel %vm5931, %v5919, %v4690
    %v5985 = vsel %vm5931, %v5920, %v4692
    %v5986 = vsel %vm5931, %v5921, %v4694
    %v5987 = vsel %vm5931, %v5922, %v4696
    %v5988 = vsel %vm5931, %v5923, %v4698
    %v5989 = vsel %vm5931, %v5924, %v4700
    %v5990 = vsel %vm5931, %v5925, %v4702
    %v5991 = vsel %vm5931, %v5926, %v4704
    %v5992 = vsel %vm5931, %v5927, %v4706
    %v5993 = vsel %vm5931, %v5928, %v4708
    %v5994 = vsel %vm5931, %v5929, %v4710
    %v5995 = vsel %vm5931, %v5930, %v4712
    %vm5996 = vcmask 326656
    %v5997 = vsel %vm5996, %v5932, %v4842
    %v5998 = vsel %vm5996, %v5933, %v4844
    %v5999 = vsel %vm5996, %v5934, %v4846
    %v6000 = vsel %vm5996, %v5935, %v4848
    %v6001 = vsel %vm5996, %v5936, %v4850
    %v6002 = vsel %vm5996, %v5937, %v4852
    %v6003 = vsel %vm5996, %v5938, %v4854
    %v6004 = vsel %vm5996, %v5939, %v4856
    %v6005 = vsel %vm5996, %v5940, %v4858
    %v6006 = vsel %vm5996, %v5941, %v4860
    %v6007 = vsel %vm5996, %v5942, %v4862
    %v6008 = vsel %vm5996, %v5943, %v4864
    %v6009 = vsel %vm5996, %v5944, %v4866
    %v6010 = vsel %vm5996, %v5945, %v4868
    %v6011 = vsel %vm5996, %v5946, %v4870
    %v6012 = vsel %vm5996, %v5947, %v4872
    %v6013 = vsel %vm5996, %v5948, %v4874
    %v6014 = vsel %vm5996, %v5949, %v4876
    %v6015 = vsel %vm5996, %v5950, %v4878
    %v6016 = vsel %vm5996, %v5951, %v4880
    %v6017 = vsel %vm5996, %v5952, %v4882
    %v6018 = vsel %vm5996, %v5953, %v4884
    %v6019 = vsel %vm5996, %v5954, %v4886
    %v6020 = vsel %vm5996, %v5955, %v4888
    %v6021 = vsel %vm5996, %v5956, %v4890
    %v6022 = vsel %vm5996, %v5957, %v4892
    %v6023 = vsel %vm5996, %v5958, %v4894
    %v6024 = vsel %vm5996, %v5959, %v4896
    %v6025 = vsel %vm5996, %v5960, %v4898
    %v6026 = vsel %vm5996, %v5961, %v4900
    %v6027 = vsel %vm5996, %v5962, %v4902
    %v6028 = vsel %vm5996, %v5963, %v4904
    %v6029 = vsel %vm5996, %v5964, %v4906
    %v6030 = vsel %vm5996, %v5965, %v4908
    %v6031 = vsel %vm5996, %v5966, %v4910
    %v6032 = vsel %vm5996, %v5967, %v4912
    %v6033 = vsel %vm5996, %v5968, %v4914
    %v6034 = vsel %vm5996, %v5969, %v4916
    %v6035 = vsel %vm5996, %v5970, %v4918
    %v6036 = vsel %vm5996, %v5971, %v4920
    %v6037 = vsel %vm5996, %v5972, %v4922
    %v6038 = vsel %vm5996, %v5973, %v4924
    %v6039 = vsel %vm5996, %v5974, %v4926
    %v6040 = vsel %vm5996, %v5975, %v4928
    %v6041 = vsel %vm5996, %v5976, %v4930
    %v6042 = vsel %vm5996, %v5977, %v4932
    %v6043 = vsel %vm5996, %v5978, %v4934
    %v6044 = vsel %vm5996, %v5979, %v4936
    %v6045 = vsel %vm5996, %v5980, %v4938
    %v6046 = vsel %vm5996, %v5981, %v4940
    %v6047 = vsel %vm5996, %v5982, %v4942
    %v6048 = vsel %vm5996, %v5983, %v4944
    %v6049 = vsel %vm5996, %v5984, %v4946
    %v6050 = vsel %vm5996, %v5985, %v4948
    %v6051 = vsel %vm5996, %v5986, %v4950
    %v6052 = vsel %vm5996, %v5987, %v4952
    %v6053 = vsel %vm5996, %v5988, %v4954
    %v6054 = vsel %vm5996, %v5989, %v4956
    %v6055 = vsel %vm5996, %v5990, %v4958
    %v6056 = vsel %vm5996, %v5991, %v4960
    %v6057 = vsel %vm5996, %v5992, %v4962
    %v6058 = vsel %vm5996, %v5993, %v4964
    %v6059 = vsel %vm5996, %v5994, %v4966
    %v6060 = vsel %vm5996, %v5995, %v4968
    %vm6061 = vcmask 392192
    %v6062 = vsel %vm6061, %v5997, %v5098
    %v6063 = vsel %vm6061, %v5998, %v5100
    %v6064 = vsel %vm6061, %v5999, %v5102
    %v6065 = vsel %vm6061, %v6000, %v5104
    %v6066 = vsel %vm6061, %v6001, %v5106
    %v6067 = vsel %vm6061, %v6002, %v5108
    %v6068 = vsel %vm6061, %v6003, %v5110
    %v6069 = vsel %vm6061, %v6004, %v5112
    %v6070 = vsel %vm6061, %v6005, %v5114
    %v6071 = vsel %vm6061, %v6006, %v5116
    %v6072 = vsel %vm6061, %v6007, %v5118
    %v6073 = vsel %vm6061, %v6008, %v5120
    %v6074 = vsel %vm6061, %v6009, %v5122
    %v6075 = vsel %vm6061, %v6010, %v5124
    %v6076 = vsel %vm6061, %v6011, %v5126
    %v6077 = vsel %vm6061, %v6012, %v5128
    %v6078 = vsel %vm6061, %v6013, %v5130
    %v6079 = vsel %vm6061, %v6014, %v5132
    %v6080 = vsel %vm6061, %v6015, %v5134
    %v6081 = vsel %vm6061, %v6016, %v5136
    %v6082 = vsel %vm6061, %v6017, %v5138
    %v6083 = vsel %vm6061, %v6018, %v5140
    %v6084 = vsel %vm6061, %v6019, %v5142
    %v6085 = vsel %vm6061, %v6020, %v5144
    %v6086 = vsel %vm6061, %v6021, %v5146
    %v6087 = vsel %vm6061, %v6022, %v5148
    %v6088 = vsel %vm6061, %v6023, %v5150
    %v6089 = vsel %vm6061, %v6024, %v5152
    %v6090 = vsel %vm6061, %v6025, %v5154
    %v6091 = vsel %vm6061, %v6026, %v5156
    %v6092 = vsel %vm6061, %v6027, %v5158
    %v6093 = vsel %vm6061, %v6028, %v5160
    %v6094 = vsel %vm6061, %v6029, %v5162
    %v6095 = vsel %vm6061, %v6030, %v5164
    %v6096 = vsel %vm6061, %v6031, %v5166
    %v6097 = vsel %vm6061, %v6032, %v5168
    %v6098 = vsel %vm6061, %v6033, %v5170
    %v6099 = vsel %vm6061, %v6034, %v5172
    %v6100 = vsel %vm6061, %v6035, %v5174
    %v6101 = vsel %vm6061, %v6036, %v5176
    %v6102 = vsel %vm6061, %v6037, %v5178
    %v6103 = vsel %vm6061, %v6038, %v5180
    %v6104 = vsel %vm6061, %v6039, %v5182
    %v6105 = vsel %vm6061, %v6040, %v5184
    %v6106 = vsel %vm6061, %v6041, %v5186
    %v6107 = vsel %vm6061, %v6042, %v5188
    %v6108 = vsel %vm6061, %v6043, %v5190
    %v6109 = vsel %vm6061, %v6044, %v5192
    %v6110 = vsel %vm6061, %v6045, %v5194
    %v6111 = vsel %vm6061, %v6046, %v5196
    %v6112 = vsel %vm6061, %v6047, %v5198
    %v6113 = vsel %vm6061, %v6048, %v5200
    %v6114 = vsel %vm6061, %v6049, %v5202
    %v6115 = vsel %vm6061, %v6050, %v5204
    %v6116 = vsel %vm6061, %v6051, %v5206
    %v6117 = vsel %vm6061, %v6052, %v5208
    %v6118 = vsel %vm6061, %v6053, %v5210
    %v6119 = vsel %vm6061, %v6054, %v5212
    %v6120 = vsel %vm6061, %v6055, %v5214
    %v6121 = vsel %vm6061, %v6056, %v5216
    %v6122 = vsel %vm6061, %v6057, %v5218
    %v6123 = vsel %vm6061, %v6058, %v5220
    %v6124 = vsel %vm6061, %v6059, %v5222
    %v6125 = vsel %vm6061, %v6060, %v5224
    %vm6126 = vcmask 457728
    %v6127 = vsel %vm6126, %v6062, %v5354
    %v6128 = vsel %vm6126, %v6063, %v5356
    %v6129 = vsel %vm6126, %v6064, %v5358
    %v6130 = vsel %vm6126, %v6065, %v5360
    %v6131 = vsel %vm6126, %v6066, %v5362
    %v6132 = vsel %vm6126, %v6067, %v5364
    %v6133 = vsel %vm6126, %v6068, %v5366
    %v6134 = vsel %vm6126, %v6069, %v5368
    %v6135 = vsel %vm6126, %v6070, %v5370
    %v6136 = vsel %vm6126, %v6071, %v5372
    %v6137 = vsel %vm6126, %v6072, %v5374
    %v6138 = vsel %vm6126, %v6073, %v5376
    %v6139 = vsel %vm6126, %v6074, %v5378
    %v6140 = vsel %vm6126, %v6075, %v5380
    %v6141 = vsel %vm6126, %v6076, %v5382
    %v6142 = vsel %vm6126, %v6077, %v5384
    %v6143 = vsel %vm6126, %v6078, %v5386
    %v6144 = vsel %vm6126, %v6079, %v5388
    %v6145 = vsel %vm6126, %v6080, %v5390
    %v6146 = vsel %vm6126, %v6081, %v5392
    %v6147 = vsel %vm6126, %v6082, %v5394
    %v6148 = vsel %vm6126, %v6083, %v5396
    %v6149 = vsel %vm6126, %v6084, %v5398
    %v6150 = vsel %vm6126, %v6085, %v5400
    %v6151 = vsel %vm6126, %v6086, %v5402
    %v6152 = vsel %vm6126, %v6087, %v5404
    %v6153 = vsel %vm6126, %v6088, %v5406
    %v6154 = vsel %vm6126, %v6089, %v5408
    %v6155 = vsel %vm6126, %v6090, %v5410
    %v6156 = vsel %vm6126, %v6091, %v5412
    %v6157 = vsel %vm6126, %v6092, %v5414
    %v6158 = vsel %vm6126, %v6093, %v5416
    %v6159 = vsel %vm6126, %v6094, %v5418
    %v6160 = vsel %vm6126, %v6095, %v5420
    %v6161 = vsel %vm6126, %v6096, %v5422
    %v6162 = vsel %vm6126, %v6097, %v5424
    %v6163 = vsel %vm6126, %v6098, %v5426
    %v6164 = vsel %vm6126, %v6099, %v5428
    %v6165 = vsel %vm6126, %v6100, %v5430
    %v6166 = vsel %vm6126, %v6101, %v5432
    %v6167 = vsel %vm6126, %v6102, %v5434
    %v6168 = vsel %vm6126, %v6103, %v5436
    %v6169 = vsel %vm6126, %v6104, %v5438
    %v6170 = vsel %vm6126, %v6105, %v5440
    %v6171 = vsel %vm6126, %v6106, %v5442
    %v6172 = vsel %vm6126, %v6107, %v5444
    %v6173 = vsel %vm6126, %v6108, %v5446
    %v6174 = vsel %vm6126, %v6109, %v5448
    %v6175 = vsel %vm6126, %v6110, %v5450
    %v6176 = vsel %vm6126, %v6111, %v5452
    %v6177 = vsel %vm6126, %v6112, %v5454
    %v6178 = vsel %vm6126, %v6113, %v5456
    %v6179 = vsel %vm6126, %v6114, %v5458
    %v6180 = vsel %vm6126, %v6115, %v5460
    %v6181 = vsel %vm6126, %v6116, %v5462
    %v6182 = vsel %vm6126, %v6117, %v5464
    %v6183 = vsel %vm6126, %v6118, %v5466
    %v6184 = vsel %vm6126, %v6119, %v5468
    %v6185 = vsel %vm6126, %v6120, %v5470
    %v6186 = vsel %vm6126, %v6121, %v5472
    %v6187 = vsel %vm6126, %v6122, %v5474
    %v6188 = vsel %vm6126, %v6123, %v5476
    %v6189 = vsel %vm6126, %v6124, %v5478
    %v6190 = vsel %vm6126, %v6125, %v5480
    %vm6191 = vcmask 523264
    %v6192 = vsel %vm6191, %v6127, %v5546
    %v6193 = vsel %vm6191, %v6128, %v5548
    %v6194 = vsel %vm6191, %v6129, %v5550
    %v6195 = vsel %vm6191, %v6130, %v5552
    %v6196 = vsel %vm6191, %v6131, %v5554
    %v6197 = vsel %vm6191, %v6132, %v5556
    %v6198 = vsel %vm6191, %v6133, %v5558
    %v6199 = vsel %vm6191, %v6134, %v5560
    %v6200 = vsel %vm6191, %v6135, %v5562
    %v6201 = vsel %vm6191, %v6136, %v5564
    %v6202 = vsel %vm6191, %v6137, %v5566
    %v6203 = vsel %vm6191, %v6138, %v5568
    %v6204 = vsel %vm6191, %v6139, %v5570
    %v6205 = vsel %vm6191, %v6140, %v5572
    %v6206 = vsel %vm6191, %v6141, %v5574
    %v6207 = vsel %vm6191, %v6142, %v5576
    %v6208 = vsel %vm6191, %v6143, %v5578
    %v6209 = vsel %vm6191, %v6144, %v5580
    %v6210 = vsel %vm6191, %v6145, %v5582
    %v6211 = vsel %vm6191, %v6146, %v5584
    %v6212 = vsel %vm6191, %v6147, %v5586
    %v6213 = vsel %vm6191, %v6148, %v5588
    %v6214 = vsel %vm6191, %v6149, %v5590
    %v6215 = vsel %vm6191, %v6150, %v5592
    %v6216 = vsel %vm6191, %v6151, %v5594
    %v6217 = vsel %vm6191, %v6152, %v5596
    %v6218 = vsel %vm6191, %v6153, %v5598
    %v6219 = vsel %vm6191, %v6154, %v5600
    %v6220 = vsel %vm6191, %v6155, %v5602
    %v6221 = vsel %vm6191, %v6156, %v5604
    %v6222 = vsel %vm6191, %v6157, %v5606
    %v6223 = vsel %vm6191, %v6158, %v5608
    %v6224 = vsel %vm6191, %v6159, %v5610
    %v6225 = vsel %vm6191, %v6160, %v5612
    %v6226 = vsel %vm6191, %v6161, %v5614
    %v6227 = vsel %vm6191, %v6162, %v5616
    %v6228 = vsel %vm6191, %v6163, %v5618
    %v6229 = vsel %vm6191, %v6164, %v5620
    %v6230 = vsel %vm6191, %v6165, %v5622
    %v6231 = vsel %vm6191, %v6166, %v5624
    %v6232 = vsel %vm6191, %v6167, %v5626
    %v6233 = vsel %vm6191, %v6168, %v5628
    %v6234 = vsel %vm6191, %v6169, %v5630
    %v6235 = vsel %vm6191, %v6170, %v5632
    %v6236 = vsel %vm6191, %v6171, %v5634
    %v6237 = vsel %vm6191, %v6172, %v5636
    %v6238 = vsel %vm6191, %v6173, %v5638
    %v6239 = vsel %vm6191, %v6174, %v5640
    %v6240 = vsel %vm6191, %v6175, %v5642
    %v6241 = vsel %vm6191, %v6176, %v5644
    %v6242 = vsel %vm6191, %v6177, %v5646
    %v6243 = vsel %vm6191, %v6178, %v5648
    %v6244 = vsel %vm6191, %v6179, %v5650
    %v6245 = vsel %vm6191, %v6180, %v5652
    %v6246 = vsel %vm6191, %v6181, %v5654
    %v6247 = vsel %vm6191, %v6182, %v5656
    %v6248 = vsel %vm6191, %v6183, %v5658
    %v6249 = vsel %vm6191, %v6184, %v5660
    %v6250 = vsel %vm6191, %v6185, %v5662
    %v6251 = vsel %vm6191, %v6186, %v5664
    %v6252 = vsel %vm6191, %v6187, %v5666
    %v6253 = vsel %vm6191, %v6188, %v5668
    %v6254 = vsel %vm6191, %v6189, %v5670
    %v6255 = vsel %vm6191, %v6190, %v5672
    %v6256 = vld [vmem:[%s5] sm:$0xff]
    %v6257 = vld [vmem:[%s5 + $0x8] sm:$0xff]
    %v6258 = vld [vmem:[%s5 + $0x10] sm:$0xff]
    %v6259 = vld [vmem:[%s5 + $0x18] sm:$0xff]
    %v6260 = vld [vmem:[%s5 + $0x20] sm:$0xff]
    %v6261 = vld [vmem:[%s5 + $0x28] sm:$0xff]
    %v6262 = vld [vmem:[%s5 + $0x30] sm:$0xff]
    %v6263 = vld [vmem:[%s5 + $0x38] sm:$0xff]
    %v6264 = vld [vmem:[%s5 + $0x40] sm:$0xff]
    %vm6265 = vcmask 588800
    %v6267 = vsel %vm6265, %v6192, 0
    %v6270 = vsel %vm6265, %v6193, 0
    %v6273 = vsel %vm6265, %v6194, 0
    %v6276 = vsel %vm6265, %v6195, 0
    %v6279 = vsel %vm6265, %v6196, 0
    %v6282 = vsel %vm6265, %v6197, 0
    %v6285 = vsel %vm6265, %v6198, 0
    %v6288 = vsel %vm6265, %v6199, 0
    %v6291 = vsel %vm6265, %v6200, 0
    %v6294 = vsel %vm6265, %v6201, 0
    %v6297 = vsel %vm6265, %v6202, 0
    %v6300 = vsel %vm6265, %v6203, 0
    %v6303 = vsel %vm6265, %v6204, 0
    %v6306 = vsel %vm6265, %v6205, 0
    %v6309 = vsel %vm6265, %v6206, 0
    %v6312 = vsel %vm6265, %v6207, 0
    %v6315 = vsel %vm6265, %v6208, 0
    %v6318 = vsel %vm6265, %v6209, 0
    %v6321 = vsel %vm6265, %v6210, 0
    %v6324 = vsel %vm6265, %v6211, 0
    %v6327 = vsel %vm6265, %v6212, 0
    %v6330 = vsel %vm6265, %v6213, 0
    %v6333 = vsel %vm6265, %v6214, 0
    %v6336 = vsel %vm6265, %v6215, 0
    %v6339 = vsel %vm6265, %v6216, 0
    %v6342 = vsel %vm6265, %v6217, 0
    %v6345 = vsel %vm6265, %v6218, 0
    %v6348 = vsel %vm6265, %v6219, 0
    %v6351 = vsel %vm6265, %v6220, 0
    %v6354 = vsel %vm6265, %v6221, 0
    %v6357 = vsel %vm6265, %v6222, 0
    %v6360 = vsel %vm6265, %v6223, 0
    %v6363 = vsel %vm6265, %v6224, 0
    %v6366 = vsel %vm6265, %v6225, 0
    %v6369 = vsel %vm6265, %v6226, 0
    %v6372 = vsel %vm6265, %v6227, 0
    %v6375 = vsel %vm6265, %v6228, 0
    %v6378 = vsel %vm6265, %v6229, 0
    %v6381 = vsel %vm6265, %v6230, 0
    %v6384 = vsel %vm6265, %v6231, 0
    %v6387 = vsel %vm6265, %v6232, 0
    %v6390 = vsel %vm6265, %v6233, 0
    %v6393 = vsel %vm6265, %v6234, 0
    %v6396 = vsel %vm6265, %v6235, 0
    %v6399 = vsel %vm6265, %v6236, 0
    %v6402 = vsel %vm6265, %v6237, 0
    %v6405 = vsel %vm6265, %v6238, 0
    %v6408 = vsel %vm6265, %v6239, 0
    %v6411 = vsel %vm6265, %v6240, 0
    %v6414 = vsel %vm6265, %v6241, 0
    %v6417 = vsel %vm6265, %v6242, 0
    %v6420 = vsel %vm6265, %v6243, 0
    %v6423 = vsel %vm6265, %v6244, 0
    %v6426 = vsel %vm6265, %v6245, 0
    %v6429 = vsel %vm6265, %v6246, 0
    %v6432 = vsel %vm6265, %v6247, 0
    %v6435 = vsel %vm6265, %v6248, 0
    %v6438 = vsel %vm6265, %v6249, 0
    %v6441 = vsel %vm6265, %v6250, 0
    %v6444 = vsel %vm6265, %v6251, 0
    %v6447 = vsel %vm6265, %v6252, 0
    %v6450 = vsel %vm6265, %v6253, 0
    %v6453 = vsel %vm6265, %v6254, 0
    %v6456 = vsel %vm6265, %v6255, 0
    %6458 = vmatprep.subr.mxu0 0.0
    %6459 = vmatpush1.msra.mxu0 0.0
    %6460 = vmatprep.subr.mxu0 0.0
    %6461 = vmatpush1.msra.mxu0 0.0
    %6462 = vmatprep.subr.mxu0 0.0
    %6463 = vmatpush1.msra.mxu0 0.0
    %6464 = vmatprep.subr.mxu0 0.0
    %6465 = vmatpush1.msra.mxu0 0.0
    %6466 = vmatprep.subr.mxu0 0.0
    %6467 = vmatpush1.msra.mxu0 0.0
    %6468 = vmatprep.subr.mxu0 0.0
    %6469 = vmatpush1.msra.mxu0 0.0
    %6470 = vmatprep.subr.mxu0 0.0
    %6471 = vmatpush1.msra.mxu0 0.0
    %6472 = vmatprep.subr.mxu0 0.0
    %6473 = vmatpush1.msra.mxu0 %v6264
    %6474 = vmatprep.subr.mxu0 0.0
    %6475 = vmatpush1.msra.mxu0 %v6263
    %6476 = vmatprep.subr.mxu0 0.0
    %6477 = vmatpush1.msra.mxu0 %v6262
    %6478 = vmatprep.subr.mxu0 0.0
    %6479 = vmatpush1.msra.mxu0 %v6261
    %6480 = vmatprep.subr.mxu0 0.0
    %6481 = vmatpush1.msra.mxu0 %v6260
    %6482 = vmatprep.subr.mxu0 0.0
    %6483 = vmatpush1.msra.mxu0 %v6259
    %6484 = vmatprep.subr.mxu0 0.0
    %6485 = vmatpush1.msra.mxu0 %v6258
    %6486 = vmatprep.subr.mxu0 0.0
    %6487 = vmatpush1.msra.mxu0 %v6257
    %6488 = vmatprep.subr.mxu0 0.0
    %6489 = vmatpush1.msra.mxu0 %v6256
    %6490 = vmatprep.subr.mxu0 0.0
    %6491 = vmatpush2.msra.mxu0 0.0
    %6492 = vmatprep.subr.mxu0 0.0
    %6493 = vmatpush2.msra.mxu0 0.0
    %6494 = vmatprep.subr.mxu0 0.0
    %6495 = vmatpush2.msra.mxu0 0.0
    %6496 = vmatprep.subr.mxu0 0.0
    %6497 = vmatpush2.msra.mxu0 0.0
    %6498 = vmatprep.subr.mxu0 0.0
    %6499 = vmatpush2.msra.mxu0 0.0
    %6500 = vmatprep.subr.mxu0 0.0
    %6501 = vmatpush2.msra.mxu0 0.0
    %6502 = vmatprep.subr.mxu0 0.0
    %6503 = vmatpush2.msra.mxu0 0.0
    %6504 = vmatprep.subr.mxu0 0.0
    %6505 = vmatpush2.msra.mxu0 0.0
    %6506 = vmatprep.subr.mxu0 0.0
    %6507 = vmatpush2.msra.mxu0 0.0
    %6508 = vmatprep.subr.mxu0 0.0
    %6509 = vmatpush2.msra.mxu0 0.0
    %6510 = vmatprep.subr.mxu0 0.0
    %6511 = vmatpush2.msra.mxu0 0.0
    %6512 = vmatprep.subr.mxu0 0.0
    %6513 = vmatpush2.msra.mxu0 0.0
    %6514 = vmatprep.subr.mxu0 0.0
    %6515 = vmatpush2.msra.mxu0 0.0
    %6516 = vmatprep.subr.mxu0 0.0
    %6517 = vmatpush2.msra.mxu0 0.0
    %6518 = vmatprep.subr.mxu0 0.0
    %6519 = vmatpush2.msra.mxu0 0.0
    %6520 = vmatprep.subr.mxu0 0.0
    %6521 = vmatpush2.msra.mxu0 0.0
    %6522 = vmatprep.mubr.f32.mxu0 0.0
    %6523 = vmatmul.mubr.f32.gmra.mxu0 %v6267
    %v6524 = vpop.f32.mrf.mxu0
    %v6525 = vadd.f32 0.0, %v6524
    %v6526 = vpop.f32.mrf.mxu0
    %6527 = vmatprep.mubr.f32.mxu0 0.0
    %6528 = vmatmul.mubr.f32.gmra.mxu0 %v6270
    %v6529 = vpop.f32.mrf.mxu0
    %v6530 = vadd.f32 0.0, %v6529
    %v6531 = vpop.f32.mrf.mxu0
    %6532 = vmatprep.mubr.f32.mxu0 0.0
    %6533 = vmatmul.mubr.f32.gmra.mxu0 %v6273
    %v6534 = vpop.f32.mrf.mxu0
    %v6535 = vadd.f32 0.0, %v6534
    %v6536 = vpop.f32.mrf.mxu0
    %6537 = vmatprep.mubr.f32.mxu0 0.0
    %6538 = vmatmul.mubr.f32.gmra.mxu0 %v6276
    %v6539 = vpop.f32.mrf.mxu0
    %v6540 = vadd.f32 0.0, %v6539
    %v6541 = vpop.f32.mrf.mxu0
    %6542 = vmatprep.mubr.f32.mxu0 0.0
    %6543 = vmatmul.mubr.f32.gmra.mxu0 %v6279
    %v6544 = vpop.f32.mrf.mxu0
    %v6545 = vadd.f32 0.0, %v6544
    %v6546 = vpop.f32.mrf.mxu0
    %6547 = vmatprep.mubr.f32.mxu0 0.0
    %6548 = vmatmul.mubr.f32.gmra.mxu0 %v6282
    %v6549 = vpop.f32.mrf.mxu0
    %v6550 = vadd.f32 0.0, %v6549
    %v6551 = vpop.f32.mrf.mxu0
    %6552 = vmatprep.mubr.f32.mxu0 0.0
    %6553 = vmatmul.mubr.f32.gmra.mxu0 %v6285
    %v6554 = vpop.f32.mrf.mxu0
    %v6555 = vadd.f32 0.0, %v6554
    %v6556 = vpop.f32.mrf.mxu0
    %6557 = vmatprep.mubr.f32.mxu0 0.0
    %6558 = vmatmul.mubr.f32.gmra.mxu0 %v6288
    %v6559 = vpop.f32.mrf.mxu0
    %v6560 = vadd.f32 0.0, %v6559
    %v6561 = vpop.f32.mrf.mxu0
    %6562 = vmatprep.mubr.f32.mxu0 0.0
    %6563 = vmatmul.mubr.f32.gmra.mxu0 %v6291
    %v6564 = vpop.f32.mrf.mxu0
    %v6565 = vadd.f32 0.0, %v6564
    %v6566 = vpop.f32.mrf.mxu0
    %6567 = vmatprep.mubr.f32.mxu0 0.0
    %6568 = vmatmul.mubr.f32.gmra.mxu0 %v6294
    %v6569 = vpop.f32.mrf.mxu0
    %v6570 = vadd.f32 0.0, %v6569
    %v6571 = vpop.f32.mrf.mxu0
    %6572 = vmatprep.mubr.f32.mxu0 0.0
    %6573 = vmatmul.mubr.f32.gmra.mxu0 %v6297
    %v6574 = vpop.f32.mrf.mxu0
    %v6575 = vadd.f32 0.0, %v6574
    %v6576 = vpop.f32.mrf.mxu0
    %6577 = vmatprep.mubr.f32.mxu0 0.0
    %6578 = vmatmul.mubr.f32.gmra.mxu0 %v6300
    %v6579 = vpop.f32.mrf.mxu0
    %v6580 = vadd.f32 0.0, %v6579
    %v6581 = vpop.f32.mrf.mxu0
    %6582 = vmatprep.mubr.f32.mxu0 0.0
    %6583 = vmatmul.mubr.f32.gmra.mxu0 %v6303
    %v6584 = vpop.f32.mrf.mxu0
    %v6585 = vadd.f32 0.0, %v6584
    %v6586 = vpop.f32.mrf.mxu0
    %6587 = vmatprep.mubr.f32.mxu0 0.0
    %6588 = vmatmul.mubr.f32.gmra.mxu0 %v6306
    %v6589 = vpop.f32.mrf.mxu0
    %v6590 = vadd.f32 0.0, %v6589
    %v6591 = vpop.f32.mrf.mxu0
    %6592 = vmatprep.mubr.f32.mxu0 0.0
    %6593 = vmatmul.mubr.f32.gmra.mxu0 %v6309
    %v6594 = vpop.f32.mrf.mxu0
    %v6595 = vadd.f32 0.0, %v6594
    %v6596 = vpop.f32.mrf.mxu0
    %6597 = vmatprep.mubr.f32.mxu0 0.0
    %6598 = vmatmul.mubr.f32.gmra.mxu0 %v6312
    %v6599 = vpop.f32.mrf.mxu0
    %v6600 = vadd.f32 0.0, %v6599
    %v6601 = vpop.f32.mrf.mxu0
    %6602 = vmatprep.mubr.f32.mxu0 0.0
    %6603 = vmatmul.mubr.f32.gmra.mxu0 %v6315
    %v6604 = vpop.f32.mrf.mxu0
    %v6605 = vadd.f32 0.0, %v6604
    %v6606 = vpop.f32.mrf.mxu0
    %6607 = vmatprep.mubr.f32.mxu0 0.0
    %6608 = vmatmul.mubr.f32.gmra.mxu0 %v6318
    %v6609 = vpop.f32.mrf.mxu0
    %v6610 = vadd.f32 0.0, %v6609
    %v6611 = vpop.f32.mrf.mxu0
    %6612 = vmatprep.mubr.f32.mxu0 0.0
    %6613 = vmatmul.mubr.f32.gmra.mxu0 %v6321
    %v6614 = vpop.f32.mrf.mxu0
    %v6615 = vadd.f32 0.0, %v6614
    %v6616 = vpop.f32.mrf.mxu0
    %6617 = vmatprep.mubr.f32.mxu0 0.0
    %6618 = vmatmul.mubr.f32.gmra.mxu0 %v6324
    %v6619 = vpop.f32.mrf.mxu0
    %v6620 = vadd.f32 0.0, %v6619
    %v6621 = vpop.f32.mrf.mxu0
    %6622 = vmatprep.mubr.f32.mxu0 0.0
    %6623 = vmatmul.mubr.f32.gmra.mxu0 %v6327
    %v6624 = vpop.f32.mrf.mxu0
    %v6625 = vadd.f32 0.0, %v6624
    %v6626 = vpop.f32.mrf.mxu0
    %6627 = vmatprep.mubr.f32.mxu0 0.0
    %6628 = vmatmul.mubr.f32.gmra.mxu0 %v6330
    %v6629 = vpop.f32.mrf.mxu0
    %v6630 = vadd.f32 0.0, %v6629
    %v6631 = vpop.f32.mrf.mxu0
    %6632 = vmatprep.mubr.f32.mxu0 0.0
    %6633 = vmatmul.mubr.f32.gmra.mxu0 %v6333
    %v6634 = vpop.f32.mrf.mxu0
    %v6635 = vadd.f32 0.0, %v6634
    %v6636 = vpop.f32.mrf.mxu0
    %6637 = vmatprep.mubr.f32.mxu0 0.0
    %6638 = vmatmul.mubr.f32.gmra.mxu0 %v6336
    %v6639 = vpop.f32.mrf.mxu0
    %v6640 = vadd.f32 0.0, %v6639
    %v6641 = vpop.f32.mrf.mxu0
    %6642 = vmatprep.mubr.f32.mxu0 0.0
    %6643 = vmatmul.mubr.f32.gmra.mxu0 %v6339
    %v6644 = vpop.f32.mrf.mxu0
    %v6645 = vadd.f32 0.0, %v6644
    %v6646 = vpop.f32.mrf.mxu0
    %6647 = vmatprep.mubr.f32.mxu0 0.0
    %6648 = vmatmul.mubr.f32.gmra.mxu0 %v6342
    %v6649 = vpop.f32.mrf.mxu0
    %v6650 = vadd.f32 0.0, %v6649
    %v6651 = vpop.f32.mrf.mxu0
    %6652 = vmatprep.mubr.f32.mxu0 0.0
    %6653 = vmatmul.mubr.f32.gmra.mxu0 %v6345
    %v6654 = vpop.f32.mrf.mxu0
    %v6655 = vadd.f32 0.0, %v6654
    %v6656 = vpop.f32.mrf.mxu0
    %6657 = vmatprep.mubr.f32.mxu0 0.0
    %6658 = vmatmul.mubr.f32.gmra.mxu0 %v6348
    %v6659 = vpop.f32.mrf.mxu0
    %v6660 = vadd.f32 0.0, %v6659
    %v6661 = vpop.f32.mrf.mxu0
    %6662 = vmatprep.mubr.f32.mxu0 0.0
    %6663 = vmatmul.mubr.f32.gmra.mxu0 %v6351
    %v6664 = vpop.f32.mrf.mxu0
    %v6665 = vadd.f32 0.0, %v6664
    %v6666 = vpop.f32.mrf.mxu0
    %6667 = vmatprep.mubr.f32.mxu0 0.0
    %6668 = vmatmul.mubr.f32.gmra.mxu0 %v6354
    %v6669 = vpop.f32.mrf.mxu0
    %v6670 = vadd.f32 0.0, %v6669
    %v6671 = vpop.f32.mrf.mxu0
    %6672 = vmatprep.mubr.f32.mxu0 0.0
    %6673 = vmatmul.mubr.f32.gmra.mxu0 %v6357
    %v6674 = vpop.f32.mrf.mxu0
    %v6675 = vadd.f32 0.0, %v6674
    %v6676 = vpop.f32.mrf.mxu0
    %6677 = vmatprep.mubr.f32.mxu0 0.0
    %6678 = vmatmul.mubr.f32.gmra.mxu0 %v6360
    %v6679 = vpop.f32.mrf.mxu0
    %v6680 = vadd.f32 0.0, %v6679
    %v6681 = vpop.f32.mrf.mxu0
    %6682 = vmatprep.mubr.f32.mxu0 0.0
    %6683 = vmatmul.mubr.f32.gmra.mxu0 %v6363
    %v6684 = vpop.f32.mrf.mxu0
    %v6685 = vadd.f32 0.0, %v6684
    %v6686 = vpop.f32.mrf.mxu0
    %6687 = vmatprep.mubr.f32.mxu0 0.0
    %6688 = vmatmul.mubr.f32.gmra.mxu0 %v6366
    %v6689 = vpop.f32.mrf.mxu0
    %v6690 = vadd.f32 0.0, %v6689
    %v6691 = vpop.f32.mrf.mxu0
    %6692 = vmatprep.mubr.f32.mxu0 0.0
    %6693 = vmatmul.mubr.f32.gmra.mxu0 %v6369
    %v6694 = vpop.f32.mrf.mxu0
    %v6695 = vadd.f32 0.0, %v6694
    %v6696 = vpop.f32.mrf.mxu0
    %6697 = vmatprep.mubr.f32.mxu0 0.0
    %6698 = vmatmul.mubr.f32.gmra.mxu0 %v6372
    %v6699 = vpop.f32.mrf.mxu0
    %v6700 = vadd.f32 0.0, %v6699
    %v6701 = vpop.f32.mrf.mxu0
    %6702 = vmatprep.mubr.f32.mxu0 0.0
    %6703 = vmatmul.mubr.f32.gmra.mxu0 %v6375
    %v6704 = vpop.f32.mrf.mxu0
    %v6705 = vadd.f32 0.0, %v6704
    %v6706 = vpop.f32.mrf.mxu0
    %6707 = vmatprep.mubr.f32.mxu0 0.0
    %6708 = vmatmul.mubr.f32.gmra.mxu0 %v6378
    %v6709 = vpop.f32.mrf.mxu0
    %v6710 = vadd.f32 0.0, %v6709
    %v6711 = vpop.f32.mrf.mxu0
    %6712 = vmatprep.mubr.f32.mxu0 0.0
    %6713 = vmatmul.mubr.f32.gmra.mxu0 %v6381
    %v6714 = vpop.f32.mrf.mxu0
    %v6715 = vadd.f32 0.0, %v6714
    %v6716 = vpop.f32.mrf.mxu0
    %6717 = vmatprep.mubr.f32.mxu0 0.0
    %6718 = vmatmul.mubr.f32.gmra.mxu0 %v6384
    %v6719 = vpop.f32.mrf.mxu0
    %v6720 = vadd.f32 0.0, %v6719
    %v6721 = vpop.f32.mrf.mxu0
    %6722 = vmatprep.mubr.f32.mxu0 0.0
    %6723 = vmatmul.mubr.f32.gmra.mxu0 %v6387
    %v6724 = vpop.f32.mrf.mxu0
    %v6725 = vadd.f32 0.0, %v6724
    %v6726 = vpop.f32.mrf.mxu0
    %6727 = vmatprep.mubr.f32.mxu0 0.0
    %6728 = vmatmul.mubr.f32.gmra.mxu0 %v6390
    %v6729 = vpop.f32.mrf.mxu0
    %v6730 = vadd.f32 0.0, %v6729
    %v6731 = vpop.f32.mrf.mxu0
    %6732 = vmatprep.mubr.f32.mxu0 0.0
    %6733 = vmatmul.mubr.f32.gmra.mxu0 %v6393
    %v6734 = vpop.f32.mrf.mxu0
    %v6735 = vadd.f32 0.0, %v6734
    %v6736 = vpop.f32.mrf.mxu0
    %6737 = vmatprep.mubr.f32.mxu0 0.0
    %6738 = vmatmul.mubr.f32.gmra.mxu0 %v6396
    %v6739 = vpop.f32.mrf.mxu0
    %v6740 = vadd.f32 0.0, %v6739
    %v6741 = vpop.f32.mrf.mxu0
    %6742 = vmatprep.mubr.f32.mxu0 0.0
    %6743 = vmatmul.mubr.f32.gmra.mxu0 %v6399
    %v6744 = vpop.f32.mrf.mxu0
    %v6745 = vadd.f32 0.0, %v6744
    %v6746 = vpop.f32.mrf.mxu0
    %6747 = vmatprep.mubr.f32.mxu0 0.0
    %6748 = vmatmul.mubr.f32.gmra.mxu0 %v6402
    %v6749 = vpop.f32.mrf.mxu0
    %v6750 = vadd.f32 0.0, %v6749
    %v6751 = vpop.f32.mrf.mxu0
    %6752 = vmatprep.mubr.f32.mxu0 0.0
    %6753 = vmatmul.mubr.f32.gmra.mxu0 %v6405
    %v6754 = vpop.f32.mrf.mxu0
    %v6755 = vadd.f32 0.0, %v6754
    %v6756 = vpop.f32.mrf.mxu0
    %6757 = vmatprep.mubr.f32.mxu0 0.0
    %6758 = vmatmul.mubr.f32.gmra.mxu0 %v6408
    %v6759 = vpop.f32.mrf.mxu0
    %v6760 = vadd.f32 0.0, %v6759
    %v6761 = vpop.f32.mrf.mxu0
    %6762 = vmatprep.mubr.f32.mxu0 0.0
    %6763 = vmatmul.mubr.f32.gmra.mxu0 %v6411
    %v6764 = vpop.f32.mrf.mxu0
    %v6765 = vadd.f32 0.0, %v6764
    %v6766 = vpop.f32.mrf.mxu0
    %6767 = vmatprep.mubr.f32.mxu0 0.0
    %6768 = vmatmul.mubr.f32.gmra.mxu0 %v6414
    %v6769 = vpop.f32.mrf.mxu0
    %v6770 = vadd.f32 0.0, %v6769
    %v6771 = vpop.f32.mrf.mxu0
    %6772 = vmatprep.mubr.f32.mxu0 0.0
    %6773 = vmatmul.mubr.f32.gmra.mxu0 %v6417
    %v6774 = vpop.f32.mrf.mxu0
    %v6775 = vadd.f32 0.0, %v6774
    %v6776 = vpop.f32.mrf.mxu0
    %6777 = vmatprep.mubr.f32.mxu0 0.0
    %6778 = vmatmul.mubr.f32.gmra.mxu0 %v6420
    %v6779 = vpop.f32.mrf.mxu0
    %v6780 = vadd.f32 0.0, %v6779
    %v6781 = vpop.f32.mrf.mxu0
    %6782 = vmatprep.mubr.f32.mxu0 0.0
    %6783 = vmatmul.mubr.f32.gmra.mxu0 %v6423
    %v6784 = vpop.f32.mrf.mxu0
    %v6785 = vadd.f32 0.0, %v6784
    %v6786 = vpop.f32.mrf.mxu0
    %6787 = vmatprep.mubr.f32.mxu0 0.0
    %6788 = vmatmul.mubr.f32.gmra.mxu0 %v6426
    %v6789 = vpop.f32.mrf.mxu0
    %v6790 = vadd.f32 0.0, %v6789
    %v6791 = vpop.f32.mrf.mxu0
    %6792 = vmatprep.mubr.f32.mxu0 0.0
    %6793 = vmatmul.mubr.f32.gmra.mxu0 %v6429
    %v6794 = vpop.f32.mrf.mxu0
    %v6795 = vadd.f32 0.0, %v6794
    %v6796 = vpop.f32.mrf.mxu0
    %6797 = vmatprep.mubr.f32.mxu0 0.0
    %6798 = vmatmul.mubr.f32.gmra.mxu0 %v6432
    %v6799 = vpop.f32.mrf.mxu0
    %v6800 = vadd.f32 0.0, %v6799
    %v6801 = vpop.f32.mrf.mxu0
    %6802 = vmatprep.mubr.f32.mxu0 0.0
    %6803 = vmatmul.mubr.f32.gmra.mxu0 %v6435
    %v6804 = vpop.f32.mrf.mxu0
    %v6805 = vadd.f32 0.0, %v6804
    %v6806 = vpop.f32.mrf.mxu0
    %6807 = vmatprep.mubr.f32.mxu0 0.0
    %6808 = vmatmul.mubr.f32.gmra.mxu0 %v6438
    %v6809 = vpop.f32.mrf.mxu0
    %v6810 = vadd.f32 0.0, %v6809
    %v6811 = vpop.f32.mrf.mxu0
    %6812 = vmatprep.mubr.f32.mxu0 0.0
    %6813 = vmatmul.mubr.f32.gmra.mxu0 %v6441
    %v6814 = vpop.f32.mrf.mxu0
    %v6815 = vadd.f32 0.0, %v6814
    %v6816 = vpop.f32.mrf.mxu0
    %6817 = vmatprep.mubr.f32.mxu0 0.0
    %6818 = vmatmul.mubr.f32.gmra.mxu0 %v6444
    %v6819 = vpop.f32.mrf.mxu0
    %v6820 = vadd.f32 0.0, %v6819
    %v6821 = vpop.f32.mrf.mxu0
    %6822 = vmatprep.mubr.f32.mxu0 0.0
    %6823 = vmatmul.mubr.f32.gmra.mxu0 %v6447
    %v6824 = vpop.f32.mrf.mxu0
    %v6825 = vadd.f32 0.0, %v6824
    %v6826 = vpop.f32.mrf.mxu0
    %6827 = vmatprep.mubr.f32.mxu0 0.0
    %6828 = vmatmul.mubr.f32.gmra.mxu0 %v6450
    %v6829 = vpop.f32.mrf.mxu0
    %v6830 = vadd.f32 0.0, %v6829
    %v6831 = vpop.f32.mrf.mxu0
    %6832 = vmatprep.mubr.f32.mxu0 0.0
    %6833 = vmatmul.mubr.f32.gmra.mxu0 %v6453
    %v6834 = vpop.f32.mrf.mxu0
    %v6835 = vadd.f32 0.0, %v6834
    %v6836 = vpop.f32.mrf.mxu0
    %6837 = vmatprep.mubr.f32.mxu0 0.0
    %6838 = vmatmul.mubr.f32.gmra.mxu0 %v6456
    %v6839 = vpop.f32.mrf.mxu0
    %v6840 = vadd.f32 0.0, %v6839
    %v6841 = vpop.f32.mrf.mxu0
    %6842 = vdwg.mxu0
    %v6843 = vld [vmem:[%s1] sm:$0xf]
    %v6844 = vlaneseq
    %v6845 = vshrl.u32 %v6844, 7
    %v6846 = vadd.s32 %v6845, 8
    %v6847 = vadd.s32 %v6845, 16
    %v6848 = vlaneseq
    %v6849 = vshrl.u32 %v6848, 7
    %v6850 = vsub.s32 0, %v6849
    %v6851 = vrot.slane %v6843, %v6850
    %v6852 = vlaneseq
    %v6853 = vshrl.u32 %v6852, 7
    %v6854 = vsub.s32 1, %v6853
    %v6855 = vrot.slane %v6843, %v6854
    %v6856 = vlaneseq
    %v6857 = vshrl.u32 %v6856, 7
    %v6858 = vsub.s32 2, %v6857
    %v6859 = vrot.slane %v6843, %v6858
    %v6860 = vlaneseq
    %v6861 = vshrl.u32 %v6860, 7
    %v6862 = vsub.s32 3, %v6861
    %v6863 = vrot.slane %v6843, %v6862
    %vm6864 = vcmp.eq.s32.totalorder %v6851, %v6845
    %vm6865 = vcmp.eq.s32.totalorder %v6855, %v6845
    %vm6866 = vcmp.eq.s32.totalorder %v6859, %v6845
    %vm6867 = vcmp.eq.s32.totalorder %v6863, %v6845
    %vm6868 = vcmp.eq.s32.totalorder %v6851, %v6846
    %vm6869 = vcmp.eq.s32.totalorder %v6855, %v6846
    %vm6870 = vcmp.eq.s32.totalorder %v6859, %v6846
    %vm6871 = vcmp.eq.s32.totalorder %v6863, %v6846
    %vm6872 = vcmp.eq.s32.totalorder %v6851, %v6847
    %vm6873 = vcmp.eq.s32.totalorder %v6855, %v6847
    %vm6874 = vcmp.eq.s32.totalorder %v6859, %v6847
    %vm6875 = vcmp.eq.s32.totalorder %v6863, %v6847
    %v6876 = vsel %vm6864, 1, 0
    %v6877 = vsel %vm6865, 1, 0
    %v6878 = vsel %vm6866, 1, 0
    %v6879 = vsel %vm6867, 1, 0
    %v6880 = vsel %vm6868, 1, 0
    %v6881 = vsel %vm6869, 1, 0
    %v6882 = vsel %vm6870, 1, 0
    %v6883 = vsel %vm6871, 1, 0
    %v6884 = vsel %vm6872, 1, 0
    %v6885 = vsel %vm6873, 1, 0
    %v6886 = vsel %vm6874, 1, 0
    %v6887 = vsel %vm6875, 1, 0
    %v6888 = vcvt.s32.f32 %v6876
    %v6889 = vcvt.s32.f32 %v6877
    %v6890 = vcvt.s32.f32 %v6878
    %v6891 = vcvt.s32.f32 %v6879
    %v6892 = vcvt.s32.f32 %v6880
    %v6893 = vcvt.s32.f32 %v6881
    %v6894 = vcvt.s32.f32 %v6882
    %v6895 = vcvt.s32.f32 %v6883
    %v6896 = vcvt.s32.f32 %v6884
    %v6897 = vcvt.s32.f32 %v6885
    %v6898 = vcvt.s32.f32 %v6886
    %v6899 = vcvt.s32.f32 %v6887
    %v6900 = vld [vmem:[#allocation2] sm:$0xff]
    %v6901 = vld [vmem:[#allocation2 + $0x8] sm:$0xff]
    %v6902 = vld [vmem:[#allocation2 + $0x10] sm:$0xff]
    %6903 = vmatprep.subr.mxu0 0.0
    %6904 = vmatpush1.msra.mxu0 %v6600
    %6905 = vmatprep.subr.mxu0 0.0
    %6906 = vmatpush1.msra.mxu0 %v6595
    %6907 = vmatprep.subr.mxu0 0.0
    %6908 = vmatpush1.msra.mxu0 %v6590
    %6909 = vmatprep.subr.mxu0 0.0
    %6910 = vmatpush1.msra.mxu0 %v6585
    %6911 = vmatprep.subr.mxu0 0.0
    %6912 = vmatpush1.msra.mxu0 %v6580
    %6913 = vmatprep.subr.mxu0 0.0
    %6914 = vmatpush1.msra.mxu0 %v6575
    %6915 = vmatprep.subr.mxu0 0.0
    %6916 = vmatpush1.msra.mxu0 %v6570
    %6917 = vmatprep.subr.mxu0 0.0
    %6918 = vmatpush1.msra.mxu0 %v6565
    %6919 = vmatprep.subr.mxu0 0.0
    %6920 = vmatpush1.msra.mxu0 %v6560
    %6921 = vmatprep.subr.mxu0 0.0
    %6922 = vmatpush1.msra.mxu0 %v6555
    %6923 = vmatprep.subr.mxu0 0.0
    %6924 = vmatpush1.msra.mxu0 %v6550
    %6925 = vmatprep.subr.mxu0 0.0
    %6926 = vmatpush1.msra.mxu0 %v6545
    %6927 = vmatprep.subr.mxu0 0.0
    %6928 = vmatpush1.msra.mxu0 %v6540
    %6929 = vmatprep.subr.mxu0 0.0
    %6930 = vmatpush1.msra.mxu0 %v6535
    %6931 = vmatprep.subr.mxu0 0.0
    %6932 = vmatpush1.msra.mxu0 %v6530
    %6933 = vmatprep.subr.mxu0 0.0
    %6934 = vmatpush1.msra.mxu0 %v6525
    %6935 = vmatprep.subr.mxu0 0.0
    %6936 = vmatpush2.msra.mxu0 %v6680
    %6937 = vmatprep.subr.mxu0 0.0
    %6938 = vmatpush2.msra.mxu0 %v6675
    %6939 = vmatprep.subr.mxu0 0.0
    %6940 = vmatpush2.msra.mxu0 %v6670
    %6941 = vmatprep.subr.mxu0 0.0
    %6942 = vmatpush2.msra.mxu0 %v6665
    %6943 = vmatprep.subr.mxu0 0.0
    %6944 = vmatpush2.msra.mxu0 %v6660
    %6945 = vmatprep.subr.mxu0 0.0
    %6946 = vmatpush2.msra.mxu0 %v6655
    %6947 = vmatprep.subr.mxu0 0.0
    %6948 = vmatpush2.msra.mxu0 %v6650
    %6949 = vmatprep.subr.mxu0 0.0
    %6950 = vmatpush2.msra.mxu0 %v6645
    %6951 = vmatprep.subr.mxu0 0.0
    %6952 = vmatpush2.msra.mxu0 %v6640
    %6953 = vmatprep.subr.mxu0 0.0
    %6954 = vmatpush2.msra.mxu0 %v6635
    %6955 = vmatprep.subr.mxu0 0.0
    %6956 = vmatpush2.msra.mxu0 %v6630
    %6957 = vmatprep.subr.mxu0 0.0
    %6958 = vmatpush2.msra.mxu0 %v6625
    %6959 = vmatprep.subr.mxu0 0.0
    %6960 = vmatpush2.msra.mxu0 %v6620
    %6961 = vmatprep.subr.mxu0 0.0
    %6962 = vmatpush2.msra.mxu0 %v6615
    %6963 = vmatprep.subr.mxu0 0.0
    %6964 = vmatpush2.msra.mxu0 %v6610
    %6965 = vmatprep.subr.mxu0 0.0
    %6966 = vmatpush2.msra.mxu0 %v6605
    %6967 = vmatprep.mubr.f32.mxu0 %v6889
    %6968 = vmatmul.mubr.f32.gmra.mxu0 %v6888
    %v6969 = vpop.f32.mrf.mxu0
    %v6970 = vadd.f32 0.0, %v6969
    %v6971 = vpop.f32.mrf.mxu0
    %6972 = vmatprep.mubr.f32.mxu0 %v6893
    %6973 = vmatmul.mubr.f32.gmra.mxu0 %v6892
    %v6974 = vpop.f32.mrf.mxu0
    %v6975 = vadd.f32 0.0, %v6974
    %v6976 = vpop.f32.mrf.mxu0
    %6977 = vmatprep.mubr.f32.mxu0 %v6897
    %6978 = vmatmul.mubr.f32.gmra.mxu0 %v6896
    %v6979 = vpop.f32.mrf.mxu0
    %v6980 = vadd.f32 0.0, %v6979
    %v6981 = vpop.f32.mrf.mxu0
    %6982 = vdwg.mxu0
    %6983 = vmatprep.subr.mxu0 0.0
    %6984 = vmatpush1.msra.mxu0 %v6760
    %6985 = vmatprep.subr.mxu0 0.0
    %6986 = vmatpush1.msra.mxu0 %v6755
    %6987 = vmatprep.subr.mxu0 0.0
    %6988 = vmatpush1.msra.mxu0 %v6750
    %6989 = vmatprep.subr.mxu0 0.0
    %6990 = vmatpush1.msra.mxu0 %v6745
    %6991 = vmatprep.subr.mxu0 0.0
    %6992 = vmatpush1.msra.mxu0 %v6740
    %6993 = vmatprep.subr.mxu0 0.0
    %6994 = vmatpush1.msra.mxu0 %v6735
    %6995 = vmatprep.subr.mxu0 0.0
    %6996 = vmatpush1.msra.mxu0 %v6730
    %6997 = vmatprep.subr.mxu0 0.0
    %6998 = vmatpush1.msra.mxu0 %v6725
    %6999 = vmatprep.subr.mxu0 0.0
    %7000 = vmatpush1.msra.mxu0 %v6720
    %7001 = vmatprep.subr.mxu0 0.0
    %7002 = vmatpush1.msra.mxu0 %v6715
    %7003 = vmatprep.subr.mxu0 0.0
    %7004 = vmatpush1.msra.mxu0 %v6710
    %7005 = vmatprep.subr.mxu0 0.0
    %7006 = vmatpush1.msra.mxu0 %v6705
    %7007 = vmatprep.subr.mxu0 0.0
    %7008 = vmatpush1.msra.mxu0 %v6700
    %7009 = vmatprep.subr.mxu0 0.0
    %7010 = vmatpush1.msra.mxu0 %v6695
    %7011 = vmatprep.subr.mxu0 0.0
    %7012 = vmatpush1.msra.mxu0 %v6690
    %7013 = vmatprep.subr.mxu0 0.0
    %7014 = vmatpush1.msra.mxu0 %v6685
    %7015 = vmatprep.subr.mxu0 0.0
    %7016 = vmatpush2.msra.mxu0 %v6840
    %7017 = vmatprep.subr.mxu0 0.0
    %7018 = vmatpush2.msra.mxu0 %v6835
    %7019 = vmatprep.subr.mxu0 0.0
    %7020 = vmatpush2.msra.mxu0 %v6830
    %7021 = vmatprep.subr.mxu0 0.0
    %7022 = vmatpush2.msra.mxu0 %v6825
    %7023 = vmatprep.subr.mxu0 0.0
    %7024 = vmatpush2.msra.mxu0 %v6820
    %7025 = vmatprep.subr.mxu0 0.0
    %7026 = vmatpush2.msra.mxu0 %v6815
    %7027 = vmatprep.subr.mxu0 0.0
    %7028 = vmatpush2.msra.mxu0 %v6810
    %7029 = vmatprep.subr.mxu0 0.0
    %7030 = vmatpush2.msra.mxu0 %v6805
    %7031 = vmatprep.subr.mxu0 0.0
    %7032 = vmatpush2.msra.mxu0 %v6800
    %7033 = vmatprep.subr.mxu0 0.0
    %7034 = vmatpush2.msra.mxu0 %v6795
    %7035 = vmatprep.subr.mxu0 0.0
    %7036 = vmatpush2.msra.mxu0 %v6790
    %7037 = vmatprep.subr.mxu0 0.0
    %7038 = vmatpush2.msra.mxu0 %v6785
    %7039 = vmatprep.subr.mxu0 0.0
    %7040 = vmatpush2.msra.mxu0 %v6780
    %7041 = vmatprep.subr.mxu0 0.0
    %7042 = vmatpush2.msra.mxu0 %v6775
    %7043 = vmatprep.subr.mxu0 0.0
    %7044 = vmatpush2.msra.mxu0 %v6770
    %7045 = vmatprep.subr.mxu0 0.0
    %7046 = vmatpush2.msra.mxu0 %v6765
    %7047 = vmatprep.mubr.f32.mxu0 %v6891
    %7048 = vmatmul.mubr.f32.gmra.mxu0 %v6890
    %v7049 = vpop.f32.mrf.mxu0
    %v7050 = vadd.f32 %v6970, %v7049
    %v7051 = vpop.f32.mrf.mxu0
    %7052 = vmatprep.mubr.f32.mxu0 %v6895
    %7053 = vmatmul.mubr.f32.gmra.mxu0 %v6894
    %v7054 = vpop.f32.mrf.mxu0
    %v7055 = vadd.f32 %v6975, %v7054
    %v7056 = vpop.f32.mrf.mxu0
    %7057 = vmatprep.mubr.f32.mxu0 %v6899
    %7058 = vmatmul.mubr.f32.gmra.mxu0 %v6898
    %v7059 = vpop.f32.mrf.mxu0
    %v7060 = vadd.f32 %v6980, %v7059
    %v7061 = vpop.f32.mrf.mxu0
    %7062 = vdwg.mxu0
    %v7063 = vadd.f32 %v6900, %v7050
    %v7064 = vadd.f32 %v6901, %v7055
    %v7065 = vadd.f32 %v6902, %v7060
    %7066 = vst [vmem:[#allocation2] sm:$0xff] %v7063
    %7067 = vst [vmem:[#allocation2 + $0x8] sm:$0xff] %v7064
    %7068 = vst [vmem:[#allocation2 + $0x10] sm:$0xff] %v7065
    // Predicated region
    $region30: #{tpu_custom_call.1} parent=1 // pred_check
      _
    $region31: #{tpu_custom_call.1} parent=1 // pred_check_branch
      %7070 = sbr.rel (0) target = $region33
    $region32: #{tpu_custom_call.1} parent=1 // pred_region
      %s7072 = ssub.s32 384, 384
      %7073 = vsyncadd [#allocation3], %s7072
      %s7074 = sshll.u32 [#allocation2], 4
      %s7075 = int_to_ptr.vmem [resolvable:$true] %s7074
      %7080 = dma.vmem_to_hbm [thread:$0]  %s7075, 384, %s6, [#allocation3], 128, 128, 8
    $region33: #{tpu_custom_call.1} parent=1 // pred_fallthru
      _
    // Predicated region
    $region34: #{tpu_custom_call.1} parent=1 // pred_check
      _
    $region35: #{tpu_custom_call.1} parent=1 // pred_check_branch
      %7082 = sbr.rel (0) target = $region37
    $region36: #{tpu_custom_call.1} parent=1 // pred_region
      %7083 = dma.done [#allocation3], 384
    $region37: #{tpu_custom_call.1} parent=1 // pred_fallthru
      _
    %7084 = vsyncpa [#allocation3], 1

</llo_original>
